<compile_context>
chip_gen: v7x
topology: tpu7x:2x2x1
jax: 0.10.0
libtpu: 0.0.40
codegen_flags: <defaults>
</compile_context>

<pallas_src>
import numpy as np
import jax
import jax.numpy as jnp
from jax.experimental import pallas as pl
from jax.experimental.pallas import tpu as pltpu

INPUT_DIM = 4
COUNTY_DIM = 159
COUNTY_OUT = COUNTY_DIM * INPUT_DIM      # 636
COUNTY_PAD = 640                         # 5 * 128, lane-dense output width
HIDDEN = 128
NUM_LAYERS = 5
G4 = 4 * HIDDEN                          # 512
HC_ROWS = 16                             # packed state output: rows 0..4 = h, 8..12 = c

# ---------------------------------------------------------------------------
# Packed-parameter layout (static, 128-aligned offsets inside the kernels)
#   w4    (4, 896)    f32  = [ ic_w1|ih_w1 (128) | lstm W_ih layer0 (512, gates i|f|o|g)
#                              | dec_w1 logits rows (256) ]
#   w64   (64, 1280)  bf16 = [ ic_w2 (640) | ih_w2 (640) ]        (dense, no zero block)
#   lstmw (9,128,512) bf16 = [ W_ih layers 1..4 ; W_hh layers 0..4 ]   (gates i|f|o|g)
#   fcw1  (128, 256)  bf16
#   biasq (12, 640)   f32  rows: 0 [ic_b1|ih_b1] | 1 ic_b2 | 2 ih_b2 |
#                           3..7 (bih+bhh, i|f|o|g) | 8 fc_b1 | 9 fc_b2 |
#                           10 dec_b2 | 11 dec_b3 (zero-padded 636->640)
#   w256  (256, 640)  bf16 = [ dec_w2 (512) | fc_w2 (4) | zero pad (124) ]
#   dw3p  (512, 640)  bf16 = dec_w3 zero-padded 636 -> 640
# ---------------------------------------------------------------------------


def _mm(a, b):
    # MXU matmul; LHS is cast to the (possibly bf16) weight dtype, f32 accumulate.
    return jnp.dot(a.astype(b.dtype), b, preferred_element_type=jnp.float32)


def _init_state_rows(x, w4_ref, w64_ref, biasq_ref):
    """prev_state = (init_c(x), init_h(x)) = (h_0, c_0), as lists of (1,H) rows."""
    z = jax.nn.relu(_mm(x, w4_ref[:, 0:128]) + biasq_ref[0:1, 0:128])        # (1,128)
    h0 = _mm(z[:, 0:64], w64_ref[:, 0:640]) + biasq_ref[1:2, 0:640]          # init_c -> h_0
    c0 = _mm(z[:, 64:128], w64_ref[:, 640:1280]) + biasq_ref[2:3, 0:640]     # init_h -> c_0
    h_rows = [h0[:, l * HIDDEN:(l + 1) * HIDDEN] for l in range(NUM_LAYERS)]
    c_rows = [c0[:, l * HIDDEN:(l + 1) * HIDDEN] for l in range(NUM_LAYERS)]
    return h_rows, c_rows


def _step(x, h_rows, c_rows, db1_eff,
          w4_ref, lstmw_ref, fcw1_ref, biasq_ref, w256_ref, dw3p_ref):
    """One LSTM step + fc head + decoder. Returns probs, county(640), h/c row lists."""
    relu, sigm = jax.nn.relu, jax.nn.sigmoid

    # Hoisted: the 5 h_prev @ W_hh products (+ fused biases) are independent of
    # the serial layer chain -> issue them back-to-back up front.
    hh_b = [_mm(h_rows[l], lstmw_ref[NUM_LAYERS - 1 + l]) + biasq_ref[3 + l:4 + l, 0:G4]
            for l in range(NUM_LAYERS)]

    layer_in = x
    h_new, c_new = [], []
    for l in range(NUM_LAYERS):
        w_ih = w4_ref[:, 128:640] if l == 0 else lstmw_ref[l - 1]
        gates = _mm(layer_in, w_ih) + hh_b[l]                 # (1, 512), order [i|f|o|g]
        s = sigm(gates[:, 0:3 * HIDDEN])                      # one contiguous sigmoid
        i_g = s[:, 0:HIDDEN]
        f_g = s[:, HIDDEN:2 * HIDDEN]
        o_g = s[:, 2 * HIDDEN:3 * HIDDEN]
        g_g = jnp.tanh(gates[:, 3 * HIDDEN:4 * HIDDEN])
        c = f_g * c_rows[l] + i_g * g_g
        h = o_g * jnp.tanh(c)
        h_new.append(h)
        c_new.append(c)
        layer_in = h

    # fc head: logits computed on a full 128-lane tile, sliced to 4 afterwards.
    fch = relu(_mm(layer_in, fcw1_ref[...]) + biasq_ref[8:9, 0:256])
    logits = (_mm(fch, w256_ref[:, 512:640])[:, 0:INPUT_DIM]
              + biasq_ref[9:10, 0:INPUT_DIM])                 # (1, 4)

    # softmax(dim=1)
    m = jnp.max(logits, axis=1, keepdims=True)
    e = jnp.exp(logits - m)
    probs = e / jnp.sum(e, axis=1, keepdims=True)

    # decoder on cat([logits, stepf]); the stepf row is folded into db1_eff.
    h1 = relu(_mm(logits, w4_ref[:, 640:896]) + db1_eff)
    h2 = relu(_mm(h1, w256_ref[:, 0:512]) + biasq_ref[10:11, 0:512])
    county = _mm(h2, dw3p_ref[...]) + biasq_ref[11:12, :]     # (1, 640)

    return probs, county, h_new, c_new


# ------------------------ single-step forward() kernel ---------------------

def forecast_step_kernel(x_ref, db1_eff_ref,
                         w4_ref, w64_ref, lstmw_ref, fcw1_ref, biasq_ref,
                         w256_ref, dw3p_ref,
                         out_ref, hc_ref):
    x = x_ref[...]
    h_rows, c_rows = _init_state_rows(x, w4_ref, w64_ref, biasq_ref)
    probs, county, h_new, c_new = _step(
        x, h_rows, c_rows, db1_eff_ref[...],
        w4_ref, lstmw_ref, fcw1_ref, biasq_ref, w256_ref, dw3p_ref)

    # one lane-dense 640-wide output row: county | probs packed in lanes 636:640
    out_ref[...] = county
    out_ref[:, pl.ds(COUNTY_OUT, INPUT_DIM)] = probs

    # one (16,128) state slab; per-row stores (no concat/relayout)
    hc_ref[...] = jnp.zeros_like(hc_ref)
    for l in range(NUM_LAYERS):
        hc_ref[l:l + 1, :] = h_new[l]
        hc_ref[8 + l:9 + l, :] = c_new[l]


def forecast_forward(x, step, packed):
    """ForecastModel.forward(x, prev_state=None, step)."""
    (w4, w64, lstmw, fcw1, biasq, w256, dw3p, dec_w1_step, dec_b1) = packed
    stepf = 1.0 - jnp.exp(-jnp.asarray(step, jnp.float32) / 10.0)
    db1_eff = dec_b1 + stepf * dec_w1_step                           # (1, 256) f32

    vmem = pl.BlockSpec(memory_space=pltpu.MemorySpace.VMEM)
    out_shape = (
        jax.ShapeDtypeStruct((1, COUNTY_PAD), jnp.float32),          # county | probs
        jax.ShapeDtypeStruct((HC_ROWS, HIDDEN), jnp.float32),        # h rows 0..4, c rows 8..12
    )
    packed_out, hc = pl.pallas_call(
        forecast_step_kernel,
        out_shape=out_shape,
        in_specs=[vmem] * 9,
        out_specs=(vmem, vmem),
    )(x.astype(jnp.float32), db1_eff, w4, w64, lstmw, fcw1, biasq, w256, dw3p)

    probs = packed_out[:, COUNTY_OUT:COUNTY_PAD]
    county = packed_out[:, :COUNTY_OUT]
    h_n = hc[0:NUM_LAYERS].reshape(NUM_LAYERS, 1, HIDDEN)
    c_n = hc[8:8 + NUM_LAYERS].reshape(NUM_LAYERS, 1, HIDDEN)
    return probs, county, h_n, c_n


# ----------------- multi-step forecast() rollout kernel --------------------
# Single pallas_call (no grid): weights are DMA'd once and stay VMEM-resident;
# a lax.fori_loop runs the autoregressive steps, carrying pred_dens as the loop
# carry and h/c in VMEM scratch (per-row reads/writes). The (steps, 640) output
# slab is written row-by-row in VMEM and written back to HBM once at the end.

def _make_rollout_kernel(steps):
    def kernel(x0_ref, dec_b1_ref, dw1s_ref,
               w4_ref, w64_ref, lstmw_ref, fcw1_ref, biasq_ref, w256_ref, dw3p_ref,
               out_ref, h_scr, c_scr):
        x0 = x0_ref[...]
        h_rows0, c_rows0 = _init_state_rows(x0, w4_ref, w64_ref, biasq_ref)
        for l in range(NUM_LAYERS):
            h_scr[l:l + 1, :] = h_rows0[l]
            c_scr[l:l + 1, :] = c_rows0[l]

        def body(i, x):
            # stepf = 1 - exp(-i/10), computed in-kernel (no per-step bias DMA).
            i_vec = jnp.broadcast_to(i, (1, 256)).astype(jnp.float32)
            db1_eff = dec_b1_ref[...] + (1.0 - jnp.exp(i_vec * (-0.1))) * dw1s_ref[...]

            h_rows = [h_scr[l:l + 1, :] for l in range(NUM_LAYERS)]
            c_rows = [c_scr[l:l + 1, :] for l in range(NUM_LAYERS)]
            probs, county, h_new, c_new = _step(
                x, h_rows, c_rows, db1_eff,
                w4_ref, lstmw_ref, fcw1_ref, biasq_ref, w256_ref, dw3p_ref)

            for l in range(NUM_LAYERS):
                h_scr[l:l + 1, :] = h_new[l]
                c_scr[l:l + 1, :] = c_new[l]

            out_ref[pl.ds(i, 1), :] = county
            out_ref[pl.ds(i, 1), pl.ds(COUNTY_OUT, INPUT_DIM)] = probs
            return probs          # pred_dens feeds back as next-step input

        jax.lax.fori_loop(0, steps, body, x0)

    return kernel


def forecast_rollout(x0, steps, packed):
    """ForecastModel.forecast(start, steps_ahead): per-step (probs, county)."""
    # TODO(synk): torch forecast() additionally relu's county and sums it to an
    # int total; both are trivial wrapper-side ops and left to the caller.
    (w4, w64, lstmw, fcw1, biasq, w256, dw3p, dec_w1_step, dec_b1) = packed
    vmem = pl.BlockSpec(memory_space=pltpu.MemorySpace.VMEM)

    out = pl.pallas_call(
        _make_rollout_kernel(steps),
        out_shape=jax.ShapeDtypeStruct((steps, COUNTY_PAD), jnp.float32),
        in_specs=[vmem] * 10,
        out_specs=vmem,
        scratch_shapes=[
            pltpu.VMEM((NUM_LAYERS, HIDDEN), jnp.float32),   # h carry
            pltpu.VMEM((NUM_LAYERS, HIDDEN), jnp.float32),   # c carry
        ],
    )(x0.astype(jnp.float32), dec_b1, dec_w1_step,
      w4, w64, lstmw, fcw1, biasq, w256, dw3p)

    probs_all = out[:, COUNTY_OUT:COUNTY_PAD]
    county_all = out[:, :COUNTY_OUT]
    return probs_all, county_all


# --------------------------- params & reference ----------------------------

def make_params(key):
    ks = iter(jax.random.split(key, 40))

    def lin(fan_in, fan_out):
        s = 1.0 / float(np.sqrt(fan_in))
        w = jax.random.uniform(next(ks), (fan_in, fan_out), jnp.float32, -s, s)
        b = jax.random.uniform(next(ks), (1, fan_out), jnp.float32, -s, s)
        return w, b

    p = {}
    p['ic_w1'], p['ic_b1'] = lin(INPUT_DIM, 64)
    p['ic_w2'], p['ic_b2'] = lin(64, NUM_LAYERS * HIDDEN)
    p['ih_w1'], p['ih_b1'] = lin(INPUT_DIM, 64)
    p['ih_w2'], p['ih_b2'] = lin(64, NUM_LAYERS * HIDDEN)
    s = 1.0 / float(np.sqrt(HIDDEN))
    p['wih0'] = jax.random.uniform(next(ks), (INPUT_DIM, G4), jnp.float32, -s, s)
    p['wih_rest'] = jax.random.uniform(next(ks), (NUM_LAYERS - 1, HIDDEN, G4), jnp.float32, -s, s)
    p['whh'] = jax.random.uniform(next(ks), (NUM_LAYERS, HIDDEN, G4), jnp.float32, -s, s)
    p['bih'] = jax.random.uniform(next(ks), (NUM_LAYERS, G4), jnp.float32, -s, s)
    p['bhh'] = jax.random.uniform(next(ks), (NUM_LAYERS, G4), jnp.float32, -s, s)
    p['fc_w1'], p['fc_b1'] = lin(HIDDEN, 256)
    p['fc_w2'], p['fc_b2'] = lin(256, INPUT_DIM)
    p['dec_w1'], p['dec_b1'] = lin(INPUT_DIM + 1, 256)
    p['dec_w2'], p['dec_b2'] = lin(256, 512)
    p['dec_w3'], p['dec_b3'] = lin(512, COUNTY_OUT)
    return p


def pack_params(p):
    f32, bf16 = jnp.float32, jnp.bfloat16
    H = HIDDEN

    def perm_gates(w):   # column order [i|f|g|o] -> [i|f|o|g] on the last axis
        return jnp.concatenate(
            [w[..., 0:2 * H], w[..., 3 * H:4 * H], w[..., 2 * H:3 * H]], axis=-1)

    wih0 = perm_gates(p['wih0'])
    wih_rest = perm_gates(p['wih_rest'])
    whh = perm_gates(p['whh'])
    b_lstm = perm_gates(p['bih'] + p['bhh'])                                   # (5,512)

    w4 = jnp.concatenate(
        [p['ic_w1'], p['ih_w1'], wih0, p['dec_w1'][:INPUT_DIM, :]], axis=1
    ).astype(f32)                                                              # (4, 896)
    w64 = jnp.concatenate([p['ic_w2'], p['ih_w2']], axis=1).astype(bf16)       # (64, 1280)
    lstmw = jnp.concatenate([wih_rest, whh], axis=0).astype(bf16)              # (9,128,512)
    fcw1 = p['fc_w1'].astype(bf16)                                             # (128, 256)

    def row(v):
        v = jnp.reshape(v, (1, -1)).astype(f32)
        return jnp.pad(v, ((0, 0), (0, COUNTY_PAD - v.shape[1])))

    biasq = jnp.concatenate(
        [row(jnp.concatenate([p['ic_b1'], p['ih_b1']], axis=1)),
         row(p['ic_b2']), row(p['ih_b2'])]
        + [row(b_lstm[l]) for l in range(NUM_LAYERS)]
        + [row(p['fc_b1']), row(p['fc_b2']), row(p['dec_b2']), row(p['dec_b3'])],
        axis=0)                                                                # (12, 640) f32

    w256 = jnp.concatenate(
        [p['dec_w2'], p['fc_w2'],
         jnp.zeros((256, COUNTY_PAD - 512 - INPUT_DIM), f32)], axis=1
    ).astype(bf16)                                                             # (256, 640)
    dw3p = jnp.pad(p['dec_w3'], ((0, 0), (0, COUNTY_PAD - COUNTY_OUT))).astype(bf16)  # (512,640)
    dec_w1_step = p['dec_w1'][INPUT_DIM:, :].astype(f32)                       # (1, 256)
    dec_b1 = p['dec_b1'].astype(f32)                                           # (1, 256)
    return (w4, w64, lstmw, fcw1, biasq, w256, dw3p, dec_w1_step, dec_b1)


def ref_forward(x, prev_state, step, p):
    """Pure-JAX (f32) mirror of ForecastModel.forward (batch=1, seq=1)."""
    relu, sigm = jax.nn.relu, jax.nn.sigmoid
    stepf = (1.0 - jnp.exp(-jnp.asarray(step, jnp.float32) / 10.0)).reshape(1, 1)
    if prev_state is None:
        h0 = relu(x @ p['ic_w1'] + p['ic_b1']) @ p['ic_w2'] + p['ic_b2']   # init_c -> h_0
        c0 = relu(x @ p['ih_w1'] + p['ih_b1']) @ p['ih_w2'] + p['ih_b2']   # init_h -> c_0
        h_rows = [h0[:, l * HIDDEN:(l + 1) * HIDDEN] for l in range(NUM_LAYERS)]
        c_rows = [c0[:, l * HIDDEN:(l + 1) * HIDDEN] for l in range(NUM_LAYERS)]
    else:
        h_rows, c_rows = prev_state
    layer_in = x
    new_h, new_c = [], []
    for l in range(NUM_LAYERS):
        w_ih = p['wih0'] if l == 0 else p['wih_rest'][l - 1]
        gates = layer_in @ w_ih + h_rows[l] @ p['whh'][l] + p['bih'][l:l + 1] + p['bhh'][l:l + 1]
        i_g = sigm(gates[:, :HIDDEN])
        f_g = sigm(gates[:, HIDDEN:2 * HIDDEN])
        g_g = jnp.tanh(gates[:, 2 * HIDDEN:3 * HIDDEN])
        o_g = sigm(gates[:, 3 * HIDDEN:])
        c = f_g * c_rows[l] + i_g * g_g
        h = o_g * jnp.tanh(c)
        new_h.append(h)
        new_c.append(c)
        layer_in = h
    logits = relu(layer_in @ p['fc_w1'] + p['fc_b1']) @ p['fc_w2'] + p['fc_b2']
    probs = jax.nn.softmax(logits, axis=1)
    dec_in = jnp.concatenate([logits, stepf], axis=1)
    h1 = relu(dec_in @ p['dec_w1'] + p['dec_b1'])
    h2 = relu(h1 @ p['dec_w2'] + p['dec_b2'])
    county = h2 @ p['dec_w3'] + p['dec_b3']
    return probs, county, (new_h, new_c)


# --------------------------------- main -------------------------------------

if __name__ == "__main__":
    key = jax.random.PRNGKey(0)
    pkey, xkey = jax.random.split(key)
    raw = make_params(pkey)
    packed = pack_params(raw)
    x = jax.random.normal(xkey, (1, INPUT_DIM), dtype=jnp.float32)   # (batch=1, input_dim)
    step = 3

    # bf16 weight storage (f32 accumulate): tolerance relaxed from 2e-3 to 5e-3.
    TOL = dict(atol=5e-3, rtol=5e-3)

    # ---- single forward step (prev_state=None), matches ForecastModel.forward
    probs, county, h_n, c_n = forecast_forward(x, step, packed)
    jax.block_until_ready((probs, county, h_n, c_n))

    r_probs, r_county, (r_h, r_c) = ref_forward(x, None, step, raw)
    assert probs.shape == (1, INPUT_DIM)
    assert county.shape == (1, COUNTY_OUT)
    assert h_n.shape == (NUM_LAYERS, 1, HIDDEN) and c_n.shape == (NUM_LAYERS, 1, HIDDEN)
    np.testing.assert_allclose(np.asarray(probs), np.asarray(r_probs), **TOL)
    np.testing.assert_allclose(np.asarray(county), np.asarray(r_county), **TOL)
    np.testing.assert_allclose(np.asarray(h_n)[:, 0, :],
                               np.asarray(jnp.concatenate(r_h, axis=0)), **TOL)
    np.testing.assert_allclose(np.asarray(c_n)[:, 0, :],
                               np.asarray(jnp.concatenate(r_c, axis=0)), **TOL)

    # ---- multi-step autoregressive rollout (ForecastModel.forecast); weights
    #      are DMA'd once and stay VMEM-resident for all steps of one call.
    steps = 4
    roll_probs, roll_county = forecast_rollout(x, steps, packed)
    jax.block_until_ready((roll_probs, roll_county))

    ref_p, ref_c = [], []
    xd, state = x, None
    for i in range(steps):
        pd, pc, state = ref_forward(xd, state, i, raw)
        ref_p.append(pd)
        ref_c.append(pc)
        xd = pd
    np.testing.assert_allclose(np.asarray(roll_probs),
                               np.asarray(jnp.concatenate(ref_p, axis=0)), **TOL)
    np.testing.assert_allclose(np.asarray(roll_county),
                               np.asarray(jnp.concatenate(ref_c, axis=0)), **TOL)

    print("KERNEL_OK")
</pallas_src>

<mosaic_0001>
module attributes {stable_mosaic.version = 11 : i64} {
  func.func @forecast_step_kernel(%arg0: memref<1x4xf32, #tpu.memory_space<vmem>>, %arg1: memref<1x256xf32, #tpu.memory_space<vmem>>, %arg2: memref<4x896xf32, #tpu.memory_space<vmem>>, %arg3: memref<64x1280xbf16, #tpu.memory_space<vmem>>, %arg4: memref<9x128x512xbf16, #tpu.memory_space<vmem>>, %arg5: memref<128x256xbf16, #tpu.memory_space<vmem>>, %arg6: memref<12x640xf32, #tpu.memory_space<vmem>>, %arg7: memref<256x640xbf16, #tpu.memory_space<vmem>>, %arg8: memref<512x640xbf16, #tpu.memory_space<vmem>>, %arg9: memref<1x640xf32, #tpu.memory_space<vmem>>, %arg10: memref<16x128xf32, #tpu.memory_space<vmem>>) attributes {dimension_semantics = [], scalar_prefetch = 0 : i64, scratch_operands = 0 : i64, tpu.core_type = #tpu.core_type<tc>} {
    %c0 = arith.constant 0 : index
    %c0_0 = arith.constant 0 : index
    %0 = vector.load %arg0[%c0, %c0_0] : memref<1x4xf32, #tpu.memory_space<vmem>>, vector<1x4xf32>
    %c0_1 = arith.constant 0 : index
    %c0_2 = arith.constant 0 : index
    %1 = vector.load %arg2[%c0_1, %c0_2] : memref<4x896xf32, #tpu.memory_space<vmem>>, vector<4x128xf32>
    %cst = arith.constant dense<0.000000e+00> : vector<1x128xf32>
    %2 = tpu.matmul %0, %1, %cst {dimension_numbers = #tpu.dot_dimension_numbers<[1], [0], [0], [1], [0, 0, 1, 1], [], []>} : vector<1x4xf32>, vector<4x128xf32>, vector<1x128xf32> -> vector<1x128xf32>
    %c0_3 = arith.constant 0 : index
    %c0_4 = arith.constant 0 : index
    %3 = vector.load %arg6[%c0_3, %c0_4] : memref<12x640xf32, #tpu.memory_space<vmem>>, vector<1x128xf32>
    %4 = arith.addf %2, %3 : vector<1x128xf32>
    %cst_5 = arith.constant 0.000000e+00 : f32
    %5 = vector.broadcast %cst_5 : f32 to vector<1x128xf32>
    %6 = arith.maximumf %4, %5 : vector<1x128xf32>
    %7 = vector.extract_strided_slice %6 {offsets = [0, 0], sizes = [1, 64], strides = [1, 1]} : vector<1x128xf32> to vector<1x64xf32>
    %c0_6 = arith.constant 0 : index
    %c0_7 = arith.constant 0 : index
    %8 = vector.load %arg3[%c0_6, %c0_7] : memref<64x1280xbf16, #tpu.memory_space<vmem>>, vector<64x640xbf16>
    %9 = arith.truncf %7 : vector<1x64xf32> to vector<1x64xbf16>
    %cst_8 = arith.constant dense<0.000000e+00> : vector<1x640xf32>
    %10 = tpu.matmul %9, %8, %cst_8 {dimension_numbers = #tpu.dot_dimension_numbers<[1], [0], [0], [1], [0, 0, 1, 1], [], []>} : vector<1x64xbf16>, vector<64x640xbf16>, vector<1x640xf32> -> vector<1x640xf32>
    %c1 = arith.constant 1 : index
    %c0_9 = arith.constant 0 : index
    %11 = vector.load %arg6[%c1, %c0_9] : memref<12x640xf32, #tpu.memory_space<vmem>>, vector<1x640xf32>
    %12 = arith.addf %10, %11 : vector<1x640xf32>
    %13 = vector.extract_strided_slice %6 {offsets = [0, 64], sizes = [1, 64], strides = [1, 1]} : vector<1x128xf32> to vector<1x64xf32>
    %c0_10 = arith.constant 0 : index
    %c640 = arith.constant 640 : index
    %14 = vector.load %arg3[%c0_10, %c640] : memref<64x1280xbf16, #tpu.memory_space<vmem>>, vector<64x640xbf16>
    %15 = arith.truncf %13 : vector<1x64xf32> to vector<1x64xbf16>
    %cst_11 = arith.constant dense<0.000000e+00> : vector<1x640xf32>
    %16 = tpu.matmul %15, %14, %cst_11 {dimension_numbers = #tpu.dot_dimension_numbers<[1], [0], [0], [1], [0, 0, 1, 1], [], []>} : vector<1x64xbf16>, vector<64x640xbf16>, vector<1x640xf32> -> vector<1x640xf32>
    %c2 = arith.constant 2 : index
    %c0_12 = arith.constant 0 : index
    %17 = vector.load %arg6[%c2, %c0_12] : memref<12x640xf32, #tpu.memory_space<vmem>>, vector<1x640xf32>
    %18 = arith.addf %16, %17 : vector<1x640xf32>
    %19 = vector.extract_strided_slice %12 {offsets = [0, 0], sizes = [1, 128], strides = [1, 1]} : vector<1x640xf32> to vector<1x128xf32>
    %20 = vector.extract_strided_slice %12 {offsets = [0, 128], sizes = [1, 128], strides = [1, 1]} : vector<1x640xf32> to vector<1x128xf32>
    %21 = vector.extract_strided_slice %12 {offsets = [0, 256], sizes = [1, 128], strides = [1, 1]} : vector<1x640xf32> to vector<1x128xf32>
    %22 = vector.extract_strided_slice %12 {offsets = [0, 384], sizes = [1, 128], strides = [1, 1]} : vector<1x640xf32> to vector<1x128xf32>
    %23 = vector.extract_strided_slice %12 {offsets = [0, 512], sizes = [1, 128], strides = [1, 1]} : vector<1x640xf32> to vector<1x128xf32>
    %24 = vector.extract_strided_slice %18 {offsets = [0, 0], sizes = [1, 128], strides = [1, 1]} : vector<1x640xf32> to vector<1x128xf32>
    %25 = vector.extract_strided_slice %18 {offsets = [0, 128], sizes = [1, 128], strides = [1, 1]} : vector<1x640xf32> to vector<1x128xf32>
    %26 = vector.extract_strided_slice %18 {offsets = [0, 256], sizes = [1, 128], strides = [1, 1]} : vector<1x640xf32> to vector<1x128xf32>
    %27 = vector.extract_strided_slice %18 {offsets = [0, 384], sizes = [1, 128], strides = [1, 1]} : vector<1x640xf32> to vector<1x128xf32>
    %28 = vector.extract_strided_slice %18 {offsets = [0, 512], sizes = [1, 128], strides = [1, 1]} : vector<1x640xf32> to vector<1x128xf32>
    %c0_13 = arith.constant 0 : index
    %c0_14 = arith.constant 0 : index
    %29 = vector.load %arg1[%c0_13, %c0_14] : memref<1x256xf32, #tpu.memory_space<vmem>>, vector<1x256xf32>
    %c4 = arith.constant 4 : index
    %c0_15 = arith.constant 0 : index
    %c0_16 = arith.constant 0 : index
    %30 = vector.load %arg4[%c4, %c0_15, %c0_16] : memref<9x128x512xbf16, #tpu.memory_space<vmem>>, vector<1x128x512xbf16>
    %31 = vector.shape_cast %30 : vector<1x128x512xbf16> to vector<128x512xbf16>
    %32 = arith.truncf %19 : vector<1x128xf32> to vector<1x128xbf16>
    %cst_17 = arith.constant dense<0.000000e+00> : vector<1x512xf32>
    %33 = tpu.matmul %32, %31, %cst_17 {dimension_numbers = #tpu.dot_dimension_numbers<[1], [0], [0], [1], [0, 0, 1, 1], [], []>} : vector<1x128xbf16>, vector<128x512xbf16>, vector<1x512xf32> -> vector<1x512xf32>
    %c3 = arith.constant 3 : index
    %c0_18 = arith.constant 0 : index
    %34 = vector.load %arg6[%c3, %c0_18] : memref<12x640xf32, #tpu.memory_space<vmem>>, vector<1x512xf32>
    %35 = arith.addf %33, %34 : vector<1x512xf32>
    %c5 = arith.constant 5 : index
    %c0_19 = arith.constant 0 : index
    %c0_20 = arith.constant 0 : index
    %36 = vector.load %arg4[%c5, %c0_19, %c0_20] : memref<9x128x512xbf16, #tpu.memory_space<vmem>>, vector<1x128x512xbf16>
    %37 = vector.shape_cast %36 : vector<1x128x512xbf16> to vector<128x512xbf16>
    %38 = arith.truncf %20 : vector<1x128xf32> to vector<1x128xbf16>
    %cst_21 = arith.constant dense<0.000000e+00> : vector<1x512xf32>
    %39 = tpu.matmul %38, %37, %cst_21 {dimension_numbers = #tpu.dot_dimension_numbers<[1], [0], [0], [1], [0, 0, 1, 1], [], []>} : vector<1x128xbf16>, vector<128x512xbf16>, vector<1x512xf32> -> vector<1x512xf32>
    %c4_22 = arith.constant 4 : index
    %c0_23 = arith.constant 0 : index
    %40 = vector.load %arg6[%c4_22, %c0_23] : memref<12x640xf32, #tpu.memory_space<vmem>>, vector<1x512xf32>
    %41 = arith.addf %39, %40 : vector<1x512xf32>
    %c6 = arith.constant 6 : index
    %c0_24 = arith.constant 0 : index
    %c0_25 = arith.constant 0 : index
    %42 = vector.load %arg4[%c6, %c0_24, %c0_25] : memref<9x128x512xbf16, #tpu.memory_space<vmem>>, vector<1x128x512xbf16>
    %43 = vector.shape_cast %42 : vector<1x128x512xbf16> to vector<128x512xbf16>
    %44 = arith.truncf %21 : vector<1x128xf32> to vector<1x128xbf16>
    %cst_26 = arith.constant dense<0.000000e+00> : vector<1x512xf32>
    %45 = tpu.matmul %44, %43, %cst_26 {dimension_numbers = #tpu.dot_dimension_numbers<[1], [0], [0], [1], [0, 0, 1, 1], [], []>} : vector<1x128xbf16>, vector<128x512xbf16>, vector<1x512xf32> -> vector<1x512xf32>
    %c5_27 = arith.constant 5 : index
    %c0_28 = arith.constant 0 : index
    %46 = vector.load %arg6[%c5_27, %c0_28] : memref<12x640xf32, #tpu.memory_space<vmem>>, vector<1x512xf32>
    %47 = arith.addf %45, %46 : vector<1x512xf32>
    %c7 = arith.constant 7 : index
    %c0_29 = arith.constant 0 : index
    %c0_30 = arith.constant 0 : index
    %48 = vector.load %arg4[%c7, %c0_29, %c0_30] : memref<9x128x512xbf16, #tpu.memory_space<vmem>>, vector<1x128x512xbf16>
    %49 = vector.shape_cast %48 : vector<1x128x512xbf16> to vector<128x512xbf16>
    %50 = arith.truncf %22 : vector<1x128xf32> to vector<1x128xbf16>
    %cst_31 = arith.constant dense<0.000000e+00> : vector<1x512xf32>
    %51 = tpu.matmul %50, %49, %cst_31 {dimension_numbers = #tpu.dot_dimension_numbers<[1], [0], [0], [1], [0, 0, 1, 1], [], []>} : vector<1x128xbf16>, vector<128x512xbf16>, vector<1x512xf32> -> vector<1x512xf32>
    %c6_32 = arith.constant 6 : index
    %c0_33 = arith.constant 0 : index
    %52 = vector.load %arg6[%c6_32, %c0_33] : memref<12x640xf32, #tpu.memory_space<vmem>>, vector<1x512xf32>
    %53 = arith.addf %51, %52 : vector<1x512xf32>
    %c8 = arith.constant 8 : index
    %c0_34 = arith.constant 0 : index
    %c0_35 = arith.constant 0 : index
    %54 = vector.load %arg4[%c8, %c0_34, %c0_35] : memref<9x128x512xbf16, #tpu.memory_space<vmem>>, vector<1x128x512xbf16>
    %55 = vector.shape_cast %54 : vector<1x128x512xbf16> to vector<128x512xbf16>
    %56 = arith.truncf %23 : vector<1x128xf32> to vector<1x128xbf16>
    %cst_36 = arith.constant dense<0.000000e+00> : vector<1x512xf32>
    %57 = tpu.matmul %56, %55, %cst_36 {dimension_numbers = #tpu.dot_dimension_numbers<[1], [0], [0], [1], [0, 0, 1, 1], [], []>} : vector<1x128xbf16>, vector<128x512xbf16>, vector<1x512xf32> -> vector<1x512xf32>
    %c7_37 = arith.constant 7 : index
    %c0_38 = arith.constant 0 : index
    %58 = vector.load %arg6[%c7_37, %c0_38] : memref<12x640xf32, #tpu.memory_space<vmem>>, vector<1x512xf32>
    %59 = arith.addf %57, %58 : vector<1x512xf32>
    %c0_39 = arith.constant 0 : index
    %c128 = arith.constant 128 : index
    %60 = vector.load %arg2[%c0_39, %c128] : memref<4x896xf32, #tpu.memory_space<vmem>>, vector<4x512xf32>
    %cst_40 = arith.constant dense<0.000000e+00> : vector<1x512xf32>
    %61 = tpu.matmul %0, %60, %cst_40 {dimension_numbers = #tpu.dot_dimension_numbers<[1], [0], [0], [1], [0, 0, 1, 1], [], []>} : vector<1x4xf32>, vector<4x512xf32>, vector<1x512xf32> -> vector<1x512xf32>
    %62 = arith.addf %61, %35 : vector<1x512xf32>
    %63 = vector.extract_strided_slice %62 {offsets = [0, 0], sizes = [1, 384], strides = [1, 1]} : vector<1x512xf32> to vector<1x384xf32>
    %64 = arith.negf %63 : vector<1x384xf32>
    %65 = math.exp %64 : vector<1x384xf32>
    %cst_41 = arith.constant 1.000000e+00 : f32
    %66 = vector.broadcast %cst_41 : f32 to vector<1x384xf32>
    %67 = arith.addf %66, %65 : vector<1x384xf32>
    %68 = arith.divf %66, %67 : vector<1x384xf32>
    %69 = vector.extract_strided_slice %68 {offsets = [0, 0], sizes = [1, 128], strides = [1, 1]} : vector<1x384xf32> to vector<1x128xf32>
    %70 = vector.extract_strided_slice %68 {offsets = [0, 128], sizes = [1, 128], strides = [1, 1]} : vector<1x384xf32> to vector<1x128xf32>
    %71 = vector.extract_strided_slice %68 {offsets = [0, 256], sizes = [1, 128], strides = [1, 1]} : vector<1x384xf32> to vector<1x128xf32>
    %72 = vector.extract_strided_slice %62 {offsets = [0, 384], sizes = [1, 128], strides = [1, 1]} : vector<1x512xf32> to vector<1x128xf32>
    %73 = math.tanh %72 : vector<1x128xf32>
    %74 = arith.mulf %70, %24 : vector<1x128xf32>
    %75 = arith.mulf %69, %73 : vector<1x128xf32>
    %76 = arith.addf %74, %75 : vector<1x128xf32>
    %77 = math.tanh %76 : vector<1x128xf32>
    %78 = arith.mulf %71, %77 : vector<1x128xf32>
    %c0_42 = arith.constant 0 : index
    %c0_43 = arith.constant 0 : index
    %c0_44 = arith.constant 0 : index
    %79 = vector.load %arg4[%c0_42, %c0_43, %c0_44] : memref<9x128x512xbf16, #tpu.memory_space<vmem>>, vector<1x128x512xbf16>
    %80 = vector.shape_cast %79 : vector<1x128x512xbf16> to vector<128x512xbf16>
    %81 = arith.truncf %78 : vector<1x128xf32> to vector<1x128xbf16>
    %cst_45 = arith.constant dense<0.000000e+00> : vector<1x512xf32>
    %82 = tpu.matmul %81, %80, %cst_45 {dimension_numbers = #tpu.dot_dimension_numbers<[1], [0], [0], [1], [0, 0, 1, 1], [], []>} : vector<1x128xbf16>, vector<128x512xbf16>, vector<1x512xf32> -> vector<1x512xf32>
    %83 = arith.addf %82, %41 : vector<1x512xf32>
    %84 = vector.extract_strided_slice %83 {offsets = [0, 0], sizes = [1, 384], strides = [1, 1]} : vector<1x512xf32> to vector<1x384xf32>
    %85 = arith.negf %84 : vector<1x384xf32>
    %86 = math.exp %85 : vector<1x384xf32>
    %cst_46 = arith.constant 1.000000e+00 : f32
    %87 = vector.broadcast %cst_46 : f32 to vector<1x384xf32>
    %88 = arith.addf %87, %86 : vector<1x384xf32>
    %89 = arith.divf %87, %88 : vector<1x384xf32>
    %90 = vector.extract_strided_slice %89 {offsets = [0, 0], sizes = [1, 128], strides = [1, 1]} : vector<1x384xf32> to vector<1x128xf32>
    %91 = vector.extract_strided_slice %89 {offsets = [0, 128], sizes = [1, 128], strides = [1, 1]} : vector<1x384xf32> to vector<1x128xf32>
    %92 = vector.extract_strided_slice %89 {offsets = [0, 256], sizes = [1, 128], strides = [1, 1]} : vector<1x384xf32> to vector<1x128xf32>
    %93 = vector.extract_strided_slice %83 {offsets = [0, 384], sizes = [1, 128], strides = [1, 1]} : vector<1x512xf32> to vector<1x128xf32>
    %94 = math.tanh %93 : vector<1x128xf32>
    %95 = arith.mulf %91, %25 : vector<1x128xf32>
    %96 = arith.mulf %90, %94 : vector<1x128xf32>
    %97 = arith.addf %95, %96 : vector<1x128xf32>
    %98 = math.tanh %97 : vector<1x128xf32>
    %99 = arith.mulf %92, %98 : vector<1x128xf32>
    %c1_47 = arith.constant 1 : index
    %c0_48 = arith.constant 0 : index
    %c0_49 = arith.constant 0 : index
    %100 = vector.load %arg4[%c1_47, %c0_48, %c0_49] : memref<9x128x512xbf16, #tpu.memory_space<vmem>>, vector<1x128x512xbf16>
    %101 = vector.shape_cast %100 : vector<1x128x512xbf16> to vector<128x512xbf16>
    %102 = arith.truncf %99 : vector<1x128xf32> to vector<1x128xbf16>
    %cst_50 = arith.constant dense<0.000000e+00> : vector<1x512xf32>
    %103 = tpu.matmul %102, %101, %cst_50 {dimension_numbers = #tpu.dot_dimension_numbers<[1], [0], [0], [1], [0, 0, 1, 1], [], []>} : vector<1x128xbf16>, vector<128x512xbf16>, vector<1x512xf32> -> vector<1x512xf32>
    %104 = arith.addf %103, %47 : vector<1x512xf32>
    %105 = vector.extract_strided_slice %104 {offsets = [0, 0], sizes = [1, 384], strides = [1, 1]} : vector<1x512xf32> to vector<1x384xf32>
    %106 = arith.negf %105 : vector<1x384xf32>
    %107 = math.exp %106 : vector<1x384xf32>
    %cst_51 = arith.constant 1.000000e+00 : f32
    %108 = vector.broadcast %cst_51 : f32 to vector<1x384xf32>
    %109 = arith.addf %108, %107 : vector<1x384xf32>
    %110 = arith.divf %108, %109 : vector<1x384xf32>
    %111 = vector.extract_strided_slice %110 {offsets = [0, 0], sizes = [1, 128], strides = [1, 1]} : vector<1x384xf32> to vector<1x128xf32>
    %112 = vector.extract_strided_slice %110 {offsets = [0, 128], sizes = [1, 128], strides = [1, 1]} : vector<1x384xf32> to vector<1x128xf32>
    %113 = vector.extract_strided_slice %110 {offsets = [0, 256], sizes = [1, 128], strides = [1, 1]} : vector<1x384xf32> to vector<1x128xf32>
    %114 = vector.extract_strided_slice %104 {offsets = [0, 384], sizes = [1, 128], strides = [1, 1]} : vector<1x512xf32> to vector<1x128xf32>
    %115 = math.tanh %114 : vector<1x128xf32>
    %116 = arith.mulf %112, %26 : vector<1x128xf32>
    %117 = arith.mulf %111, %115 : vector<1x128xf32>
    %118 = arith.addf %116, %117 : vector<1x128xf32>
    %119 = math.tanh %118 : vector<1x128xf32>
    %120 = arith.mulf %113, %119 : vector<1x128xf32>
    %c2_52 = arith.constant 2 : index
    %c0_53 = arith.constant 0 : index
    %c0_54 = arith.constant 0 : index
    %121 = vector.load %arg4[%c2_52, %c0_53, %c0_54] : memref<9x128x512xbf16, #tpu.memory_space<vmem>>, vector<1x128x512xbf16>
    %122 = vector.shape_cast %121 : vector<1x128x512xbf16> to vector<128x512xbf16>
    %123 = arith.truncf %120 : vector<1x128xf32> to vector<1x128xbf16>
    %cst_55 = arith.constant dense<0.000000e+00> : vector<1x512xf32>
    %124 = tpu.matmul %123, %122, %cst_55 {dimension_numbers = #tpu.dot_dimension_numbers<[1], [0], [0], [1], [0, 0, 1, 1], [], []>} : vector<1x128xbf16>, vector<128x512xbf16>, vector<1x512xf32> -> vector<1x512xf32>
    %125 = arith.addf %124, %53 : vector<1x512xf32>
    %126 = vector.extract_strided_slice %125 {offsets = [0, 0], sizes = [1, 384], strides = [1, 1]} : vector<1x512xf32> to vector<1x384xf32>
    %127 = arith.negf %126 : vector<1x384xf32>
    %128 = math.exp %127 : vector<1x384xf32>
    %cst_56 = arith.constant 1.000000e+00 : f32
    %129 = vector.broadcast %cst_56 : f32 to vector<1x384xf32>
    %130 = arith.addf %129, %128 : vector<1x384xf32>
    %131 = arith.divf %129, %130 : vector<1x384xf32>
    %132 = vector.extract_strided_slice %131 {offsets = [0, 0], sizes = [1, 128], strides = [1, 1]} : vector<1x384xf32> to vector<1x128xf32>
    %133 = vector.extract_strided_slice %131 {offsets = [0, 128], sizes = [1, 128], strides = [1, 1]} : vector<1x384xf32> to vector<1x128xf32>
    %134 = vector.extract_strided_slice %131 {offsets = [0, 256], sizes = [1, 128], strides = [1, 1]} : vector<1x384xf32> to vector<1x128xf32>
    %135 = vector.extract_strided_slice %125 {offsets = [0, 384], sizes = [1, 128], strides = [1, 1]} : vector<1x512xf32> to vector<1x128xf32>
    %136 = math.tanh %135 : vector<1x128xf32>
    %137 = arith.mulf %133, %27 : vector<1x128xf32>
    %138 = arith.mulf %132, %136 : vector<1x128xf32>
    %139 = arith.addf %137, %138 : vector<1x128xf32>
    %140 = math.tanh %139 : vector<1x128xf32>
    %141 = arith.mulf %134, %140 : vector<1x128xf32>
    %c3_57 = arith.constant 3 : index
    %c0_58 = arith.constant 0 : index
    %c0_59 = arith.constant 0 : index
    %142 = vector.load %arg4[%c3_57, %c0_58, %c0_59] : memref<9x128x512xbf16, #tpu.memory_space<vmem>>, vector<1x128x512xbf16>
    %143 = vector.shape_cast %142 : vector<1x128x512xbf16> to vector<128x512xbf16>
    %144 = arith.truncf %141 : vector<1x128xf32> to vector<1x128xbf16>
    %cst_60 = arith.constant dense<0.000000e+00> : vector<1x512xf32>
    %145 = tpu.matmul %144, %143, %cst_60 {dimension_numbers = #tpu.dot_dimension_numbers<[1], [0], [0], [1], [0, 0, 1, 1], [], []>} : vector<1x128xbf16>, vector<128x512xbf16>, vector<1x512xf32> -> vector<1x512xf32>
    %146 = arith.addf %145, %59 : vector<1x512xf32>
    %147 = vector.extract_strided_slice %146 {offsets = [0, 0], sizes = [1, 384], strides = [1, 1]} : vector<1x512xf32> to vector<1x384xf32>
    %148 = arith.negf %147 : vector<1x384xf32>
    %149 = math.exp %148 : vector<1x384xf32>
    %cst_61 = arith.constant 1.000000e+00 : f32
    %150 = vector.broadcast %cst_61 : f32 to vector<1x384xf32>
    %151 = arith.addf %150, %149 : vector<1x384xf32>
    %152 = arith.divf %150, %151 : vector<1x384xf32>
    %153 = vector.extract_strided_slice %152 {offsets = [0, 0], sizes = [1, 128], strides = [1, 1]} : vector<1x384xf32> to vector<1x128xf32>
    %154 = vector.extract_strided_slice %152 {offsets = [0, 128], sizes = [1, 128], strides = [1, 1]} : vector<1x384xf32> to vector<1x128xf32>
    %155 = vector.extract_strided_slice %152 {offsets = [0, 256], sizes = [1, 128], strides = [1, 1]} : vector<1x384xf32> to vector<1x128xf32>
    %156 = vector.extract_strided_slice %146 {offsets = [0, 384], sizes = [1, 128], strides = [1, 1]} : vector<1x512xf32> to vector<1x128xf32>
    %157 = math.tanh %156 : vector<1x128xf32>
    %158 = arith.mulf %154, %28 : vector<1x128xf32>
    %159 = arith.mulf %153, %157 : vector<1x128xf32>
    %160 = arith.addf %158, %159 : vector<1x128xf32>
    %161 = math.tanh %160 : vector<1x128xf32>
    %162 = arith.mulf %155, %161 : vector<1x128xf32>
    %c0_62 = arith.constant 0 : index
    %c0_63 = arith.constant 0 : index
    %163 = vector.load %arg5[%c0_62, %c0_63] : memref<128x256xbf16, #tpu.memory_space<vmem>>, vector<128x256xbf16>
    %164 = arith.truncf %162 : vector<1x128xf32> to vector<1x128xbf16>
    %cst_64 = arith.constant dense<0.000000e+00> : vector<1x256xf32>
    %165 = tpu.matmul %164, %163, %cst_64 {dimension_numbers = #tpu.dot_dimension_numbers<[1], [0], [0], [1], [0, 0, 1, 1], [], []>} : vector<1x128xbf16>, vector<128x256xbf16>, vector<1x256xf32> -> vector<1x256xf32>
    %c8_65 = arith.constant 8 : index
    %c0_66 = arith.constant 0 : index
    %166 = vector.load %arg6[%c8_65, %c0_66] : memref<12x640xf32, #tpu.memory_space<vmem>>, vector<1x256xf32>
    %167 = arith.addf %165, %166 : vector<1x256xf32>
    %cst_67 = arith.constant 0.000000e+00 : f32
    %168 = vector.broadcast %cst_67 : f32 to vector<1x256xf32>
    %169 = arith.maximumf %167, %168 : vector<1x256xf32>
    %c0_68 = arith.constant 0 : index
    %c512 = arith.constant 512 : index
    %170 = vector.load %arg7[%c0_68, %c512] : memref<256x640xbf16, #tpu.memory_space<vmem>>, vector<256x128xbf16>
    %171 = arith.truncf %169 : vector<1x256xf32> to vector<1x256xbf16>
    %cst_69 = arith.constant dense<0.000000e+00> : vector<1x128xf32>
    %172 = tpu.matmul %171, %170, %cst_69 {dimension_numbers = #tpu.dot_dimension_numbers<[1], [0], [0], [1], [0, 0, 1, 1], [], []>} : vector<1x256xbf16>, vector<256x128xbf16>, vector<1x128xf32> -> vector<1x128xf32>
    %173 = vector.extract_strided_slice %172 {offsets = [0, 0], sizes = [1, 4], strides = [1, 1]} : vector<1x128xf32> to vector<1x4xf32>
    %c9 = arith.constant 9 : index
    %c0_70 = arith.constant 0 : index
    %174 = vector.load %arg6[%c9, %c0_70] : memref<12x640xf32, #tpu.memory_space<vmem>>, vector<1x4xf32>
    %175 = arith.addf %173, %174 : vector<1x4xf32>
    %cst_71 = arith.constant dense<0xFF800000> : vector<1xf32>
    %176 = vector.multi_reduction <maximumf>, %175, %cst_71 [1] : vector<1x4xf32> to vector<1xf32>
    %177 = vector.shape_cast %176 : vector<1xf32> to vector<1x1xf32>
    %178 = vector.broadcast %177 : vector<1x1xf32> to vector<1x4xf32>
    %179 = arith.subf %175, %178 : vector<1x4xf32>
    %180 = math.exp %179 : vector<1x4xf32>
    %cst_72 = arith.constant dense<0.000000e+00> : vector<1xf32>
    %181 = vector.multi_reduction <add>, %180, %cst_72 [1] : vector<1x4xf32> to vector<1xf32>
    %182 = vector.shape_cast %181 : vector<1xf32> to vector<1x1xf32>
    %183 = vector.broadcast %182 : vector<1x1xf32> to vector<1x4xf32>
    %184 = arith.divf %180, %183 : vector<1x4xf32>
    %c0_73 = arith.constant 0 : index
    %c640_74 = arith.constant 640 : index
    %185 = vector.load %arg2[%c0_73, %c640_74] : memref<4x896xf32, #tpu.memory_space<vmem>>, vector<4x256xf32>
    %cst_75 = arith.constant dense<0.000000e+00> : vector<1x256xf32>
    %186 = tpu.matmul %175, %185, %cst_75 {dimension_numbers = #tpu.dot_dimension_numbers<[1], [0], [0], [1], [0, 0, 1, 1], [], []>} : vector<1x4xf32>, vector<4x256xf32>, vector<1x256xf32> -> vector<1x256xf32>
    %187 = arith.addf %186, %29 : vector<1x256xf32>
    %cst_76 = arith.constant 0.000000e+00 : f32
    %188 = vector.broadcast %cst_76 : f32 to vector<1x256xf32>
    %189 = arith.maximumf %187, %188 : vector<1x256xf32>
    %c0_77 = arith.constant 0 : index
    %c0_78 = arith.constant 0 : index
    %190 = vector.load %arg7[%c0_77, %c0_78] : memref<256x640xbf16, #tpu.memory_space<vmem>>, vector<256x512xbf16>
    %191 = arith.truncf %189 : vector<1x256xf32> to vector<1x256xbf16>
    %cst_79 = arith.constant dense<0.000000e+00> : vector<1x512xf32>
    %192 = tpu.matmul %191, %190, %cst_79 {dimension_numbers = #tpu.dot_dimension_numbers<[1], [0], [0], [1], [0, 0, 1, 1], [], []>} : vector<1x256xbf16>, vector<256x512xbf16>, vector<1x512xf32> -> vector<1x512xf32>
    %c10 = arith.constant 10 : index
    %c0_80 = arith.constant 0 : index
    %193 = vector.load %arg6[%c10, %c0_80] : memref<12x640xf32, #tpu.memory_space<vmem>>, vector<1x512xf32>
    %194 = arith.addf %192, %193 : vector<1x512xf32>
    %cst_81 = arith.constant 0.000000e+00 : f32
    %195 = vector.broadcast %cst_81 : f32 to vector<1x512xf32>
    %196 = arith.maximumf %194, %195 : vector<1x512xf32>
    %c0_82 = arith.constant 0 : index
    %c0_83 = arith.constant 0 : index
    %197 = vector.load %arg8[%c0_82, %c0_83] : memref<512x640xbf16, #tpu.memory_space<vmem>>, vector<512x640xbf16>
    %198 = arith.truncf %196 : vector<1x512xf32> to vector<1x512xbf16>
    %cst_84 = arith.constant dense<0.000000e+00> : vector<1x640xf32>
    %199 = tpu.matmul %198, %197, %cst_84 {dimension_numbers = #tpu.dot_dimension_numbers<[1], [0], [0], [1], [0, 0, 1, 1], [], []>} : vector<1x512xbf16>, vector<512x640xbf16>, vector<1x640xf32> -> vector<1x640xf32>
    %c11 = arith.constant 11 : index
    %c0_85 = arith.constant 0 : index
    %200 = vector.load %arg6[%c11, %c0_85] : memref<12x640xf32, #tpu.memory_space<vmem>>, vector<1x640xf32>
    %201 = arith.addf %199, %200 : vector<1x640xf32>
    %c0_86 = arith.constant 0 : index
    %c0_87 = arith.constant 0 : index
    %202 = vector.load %arg9[%c0_86, %c0_87] : memref<1x640xf32, #tpu.memory_space<vmem>>, vector<1x640xf32>
    tpu.vector_store %arg9[%c0_86, %c0_87], %201 {strides = array<i32>} : memref<1x640xf32, #tpu.memory_space<vmem>>, vector<1x640xf32>,
    %c0_88 = arith.constant 0 : index
    %c636 = arith.constant 636 : index
    %203 = vector.load %arg9[%c0_88, %c636] : memref<1x640xf32, #tpu.memory_space<vmem>>, vector<1x4xf32>
    tpu.vector_store %arg9[%c0_88, %c636], %184 {strides = array<i32>} : memref<1x640xf32, #tpu.memory_space<vmem>>, vector<1x4xf32>,
    %cst_89 = arith.constant 0.000000e+00 : f32
    %204 = vector.broadcast %cst_89 : f32 to vector<16x128xf32>
    %c0_90 = arith.constant 0 : index
    %c0_91 = arith.constant 0 : index
    %205 = vector.load %arg10[%c0_90, %c0_91] : memref<16x128xf32, #tpu.memory_space<vmem>>, vector<16x128xf32>
    tpu.vector_store %arg10[%c0_90, %c0_91], %204 {strides = array<i32>} : memref<16x128xf32, #tpu.memory_space<vmem>>, vector<16x128xf32>,
    %c0_92 = arith.constant 0 : index
    %c0_93 = arith.constant 0 : index
    %206 = vector.load %arg10[%c0_92, %c0_93] : memref<16x128xf32, #tpu.memory_space<vmem>>, vector<1x128xf32>
    tpu.vector_store %arg10[%c0_92, %c0_93], %78 {strides = array<i32>} : memref<16x128xf32, #tpu.memory_space<vmem>>, vector<1x128xf32>,
    %c8_94 = arith.constant 8 : index
    %c0_95 = arith.constant 0 : index
    %207 = vector.load %arg10[%c8_94, %c0_95] : memref<16x128xf32, #tpu.memory_space<vmem>>, vector<1x128xf32>
    tpu.vector_store %arg10[%c8_94, %c0_95], %76 {strides = array<i32>} : memref<16x128xf32, #tpu.memory_space<vmem>>, vector<1x128xf32>,
    %c1_96 = arith.constant 1 : index
    %c0_97 = arith.constant 0 : index
    %208 = vector.load %arg10[%c1_96, %c0_97] : memref<16x128xf32, #tpu.memory_space<vmem>>, vector<1x128xf32>
    tpu.vector_store %arg10[%c1_96, %c0_97], %99 {strides = array<i32>} : memref<16x128xf32, #tpu.memory_space<vmem>>, vector<1x128xf32>,
    %c9_98 = arith.constant 9 : index
    %c0_99 = arith.constant 0 : index
    %209 = vector.load %arg10[%c9_98, %c0_99] : memref<16x128xf32, #tpu.memory_space<vmem>>, vector<1x128xf32>
    tpu.vector_store %arg10[%c9_98, %c0_99], %97 {strides = array<i32>} : memref<16x128xf32, #tpu.memory_space<vmem>>, vector<1x128xf32>,
    %c2_100 = arith.constant 2 : index
    %c0_101 = arith.constant 0 : index
    %210 = vector.load %arg10[%c2_100, %c0_101] : memref<16x128xf32, #tpu.memory_space<vmem>>, vector<1x128xf32>
    tpu.vector_store %arg10[%c2_100, %c0_101], %120 {strides = array<i32>} : memref<16x128xf32, #tpu.memory_space<vmem>>, vector<1x128xf32>,
    %c10_102 = arith.constant 10 : index
    %c0_103 = arith.constant 0 : index
    %211 = vector.load %arg10[%c10_102, %c0_103] : memref<16x128xf32, #tpu.memory_space<vmem>>, vector<1x128xf32>
    tpu.vector_store %arg10[%c10_102, %c0_103], %118 {strides = array<i32>} : memref<16x128xf32, #tpu.memory_space<vmem>>, vector<1x128xf32>,
    %c3_104 = arith.constant 3 : index
    %c0_105 = arith.constant 0 : index
    %212 = vector.load %arg10[%c3_104, %c0_105] : memref<16x128xf32, #tpu.memory_space<vmem>>, vector<1x128xf32>
    tpu.vector_store %arg10[%c3_104, %c0_105], %141 {strides = array<i32>} : memref<16x128xf32, #tpu.memory_space<vmem>>, vector<1x128xf32>,
    %c11_106 = arith.constant 11 : index
    %c0_107 = arith.constant 0 : index
    %213 = vector.load %arg10[%c11_106, %c0_107] : memref<16x128xf32, #tpu.memory_space<vmem>>, vector<1x128xf32>
    tpu.vector_store %arg10[%c11_106, %c0_107], %139 {strides = array<i32>} : memref<16x128xf32, #tpu.memory_space<vmem>>, vector<1x128xf32>,
    %c4_108 = arith.constant 4 : index
    %c0_109 = arith.constant 0 : index
    %214 = vector.load %arg10[%c4_108, %c0_109] : memref<16x128xf32, #tpu.memory_space<vmem>>, vector<1x128xf32>
    tpu.vector_store %arg10[%c4_108, %c0_109], %162 {strides = array<i32>} : memref<16x128xf32, #tpu.memory_space<vmem>>, vector<1x128xf32>,
    %c12 = arith.constant 12 : index
    %c0_110 = arith.constant 0 : index
    %215 = vector.load %arg10[%c12, %c0_110] : memref<16x128xf32, #tpu.memory_space<vmem>>, vector<1x128xf32>
    tpu.vector_store %arg10[%c12, %c0_110], %160 {strides = array<i32>} : memref<16x128xf32, #tpu.memory_space<vmem>>, vector<1x128xf32>,
    return
  }
}

</mosaic_0001>

<llo_original>
// kernel: tpu_custom_call.1
$region0: #{tpu_custom_call.1}
  #allocation0 [shape = 'u32[]', space=smem, size = 0x4, offset = 0x4, fixed_abs, tag = 'smem constant byte address 0x4 - core index']
  #allocation1 [shape = 'u32[144,128]{1,0:T(1,128)}', space=vmem, size = 0x12000, scoped, tag = 'internal scratch']
  %s0 = inlined_call_operand.hbm [shape: f32[1,4], index: 0, kind: input, shape index: {}]
  %s1 = inlined_call_operand.hbm [shape: f32[1,256], index: 1, kind: input, shape index: {}]
  %s2 = inlined_call_operand.hbm [shape: f32[4,896], index: 2, kind: input, shape index: {}]
  %s3 = inlined_call_operand.hbm [shape: bf16[64,1280], index: 3, kind: input, shape index: {}]
  %s4 = inlined_call_operand.hbm [shape: bf16[9,128,512], index: 4, kind: input, shape index: {}]
  %s5 = inlined_call_operand.hbm [shape: bf16[128,256], index: 5, kind: input, shape index: {}]
  %s6 = inlined_call_operand.hbm [shape: f32[12,640], index: 6, kind: input, shape index: {}]
  %s7 = inlined_call_operand.hbm [shape: bf16[256,640], index: 7, kind: input, shape index: {}]
  %s8 = inlined_call_operand.hbm [shape: bf16[512,640], index: 8, kind: input, shape index: {}]
  %s9 = inlined_call_operand.hbm [shape: f32[1,640], index: 9, kind: output, shape index: {0}]
  %s10 = inlined_call_operand.hbm [shape: f32[16,128], index: 10, kind: output, shape index: {1}]
  %11 = xla_tuple %s9, %s10
  %s12 = sld [smem:[#allocation0]]
  $region90: #{tpu_custom_call.1} parent=0
    _
  %s14 = ssub.s32 1, %s12
  %s15 = scalar_select 0, %s14, %s12
  $region1: #{tpu_custom_call.1} parent=0
    #allocation2 [shape = 'u8[512]{0}', space=vmem, size = 0x400, scoped, tag = 'input window, operand 0, single buffered']
    #allocation3 [shape = 's32[1]{0}', space=sflag, size = 0x4, scoped, tag = 'scoped memory for tpu_custom_call.1']
    #allocation4 [shape = 's32[1]{0}', space=sflag, size = 0x4, scoped, tag = 'scoped memory for tpu_custom_call.1']
    #allocation5 [shape = 'u8[1024]{0}', space=vmem, size = 0x400, scoped, tag = 'input window, operand 1, single buffered']
    #allocation6 [shape = 's32[1]{0}', space=sflag, size = 0x4, scoped, tag = 'scoped memory for tpu_custom_call.1']
    #allocation7 [shape = 'u8[14336]{0}', space=vmem, size = 0x3800, scoped, tag = 'input window, operand 2, single buffered']
    #allocation8 [shape = 'u8[163840]{0}', space=vmem, size = 0x28000, scoped, tag = 'input window, operand 3, single buffered']
    #allocation9 [shape = 's32[1]{0}', space=sflag, size = 0x4, scoped, tag = 'scoped memory for tpu_custom_call.1']
    #allocation10 [shape = 'u8[1179648]{0}', space=vmem, size = 0x120000, scoped, tag = 'input window, operand 4, single buffered']
    #allocation11 [shape = 'u8[65536]{0}', space=vmem, size = 0x10000, scoped, tag = 'input window, operand 5, single buffered']
    #allocation12 [shape = 's32[1]{0}', space=sflag, size = 0x4, scoped, tag = 'scoped memory for tpu_custom_call.1']
    #allocation13 [shape = 'u8[40960]{0}', space=vmem, size = 0xa000, scoped, tag = 'input window, operand 6, single buffered']
    #allocation14 [shape = 'u8[327680]{0}', space=vmem, size = 0x50000, scoped, tag = 'input window, operand 7, single buffered']
    #allocation15 [shape = 's32[1]{0}', space=sflag, size = 0x4, scoped, tag = 'scoped memory for tpu_custom_call.1']
    #allocation16 [shape = 'u8[655360]{0}', space=vmem, size = 0xa0000, scoped, tag = 'input window, operand 8, single buffered']
    #allocation17 [shape = 'u8[2560]{0}', space=vmem, size = 0xc00, scoped, tag = 'output window, operand 0, single buffered']
    #allocation18 [shape = 'u8[8192]{0}', space=vmem, size = 0x2000, scoped, tag = 'output window, operand 1, single buffered']
    #allocation19 [shape = 's32[1]{0}', space=sflag, size = 0x4, scoped, tag = 'scoped memory for tpu_custom_call.1']
    %16 = vsyncpa [#allocation3], 0
    %17 = vsyncpa [#allocation6], 0
    %18 = vsyncpa [#allocation9], 0
    %19 = vsyncpa [#allocation12], 0
    %20 = vsyncpa [#allocation15], 0
    %21 = vsyncpa [#allocation4], 0
    %22 = vsyncpa [#allocation19], 0
    // Predicated region
    $region2: #{tpu_custom_call.1} parent=1 // pred_check
      _
    $region3: #{tpu_custom_call.1} parent=1 // pred_check_branch
      %24 = sbr.rel (0) target = $region5
    $region4: #{tpu_custom_call.1} parent=1 // pred_region
      %s26 = ssub.s32 16, 16
      %27 = vsyncadd [#allocation3], %s26
      %s29 = sshll.u32 [#allocation2], 4
      %s30 = int_to_ptr.vmem [resolvable:$true] %s29
      %32 = dma.hbm_to_vmem [thread:$0]  %s0, 16, %s30, [#allocation3]
    $region5: #{tpu_custom_call.1} parent=1 // pred_fallthru
      _
    // Predicated region
    $region6: #{tpu_custom_call.1} parent=1 // pred_check
      _
    $region7: #{tpu_custom_call.1} parent=1 // pred_check_branch
      %34 = sbr.rel (0) target = $region9
    $region8: #{tpu_custom_call.1} parent=1 // pred_region
      %s36 = ssub.s32 32, 32
      %37 = vsyncadd [#allocation6], %s36
      %s39 = sshll.u32 [#allocation5], 4
      %s40 = int_to_ptr.vmem [resolvable:$true] %s39
      %42 = dma.hbm_to_vmem [thread:$0]  %s1, 32, %s40, [#allocation6]
    $region9: #{tpu_custom_call.1} parent=1 // pred_fallthru
      _
    // Predicated region
    $region10: #{tpu_custom_call.1} parent=1 // pred_check
      _
    $region11: #{tpu_custom_call.1} parent=1 // pred_check_branch
      %44 = sbr.rel (0) target = $region13
    $region12: #{tpu_custom_call.1} parent=1 // pred_region
      %s46 = ssub.s32 448, 448
      %47 = vsyncadd [#allocation6], %s46
      %s49 = sshll.u32 [#allocation7], 4
      %s50 = int_to_ptr.vmem [resolvable:$true] %s49
      %52 = dma.hbm_to_vmem [thread:$0]  %s2, 448, %s50, [#allocation6]
    $region13: #{tpu_custom_call.1} parent=1 // pred_fallthru
      _
    // Predicated region
    $region14: #{tpu_custom_call.1} parent=1 // pred_check
      _
    $region15: #{tpu_custom_call.1} parent=1 // pred_check_branch
      %54 = sbr.rel (0) target = $region17
    $region16: #{tpu_custom_call.1} parent=1 // pred_region
      %s56 = ssub.s32 5120, 5120
      %57 = vsyncadd [#allocation9], %s56
      %s58 = sshll.u32 [#allocation8], 4
      %s59 = int_to_ptr.vmem [resolvable:$true] %s58
      %64 = dma.hbm_to_vmem [thread:$0]  %s3, 5120, %s59, [#allocation9], 640, 640, 40
    $region17: #{tpu_custom_call.1} parent=1 // pred_fallthru
      _
    // Predicated region
    $region18: #{tpu_custom_call.1} parent=1 // pred_check
      _
    $region19: #{tpu_custom_call.1} parent=1 // pred_check_branch
      %66 = sbr.rel (0) target = $region21
    $region20: #{tpu_custom_call.1} parent=1 // pred_region
      %s68 = ssub.s32 36864, 36864
      %69 = vsyncadd [#allocation9], %s68
      %s70 = sshll.u32 [#allocation10], 4
      %s71 = int_to_ptr.vmem [resolvable:$true] %s70
      %76 = dma.hbm_to_vmem [thread:$0]  %s4, 36864, %s71, [#allocation9], 256, 256, 16
    $region21: #{tpu_custom_call.1} parent=1 // pred_fallthru
      _
    // Predicated region
    $region22: #{tpu_custom_call.1} parent=1 // pred_check
      _
    $region23: #{tpu_custom_call.1} parent=1 // pred_check_branch
      %78 = sbr.rel (0) target = $region25
    $region24: #{tpu_custom_call.1} parent=1 // pred_region
      %s80 = ssub.s32 2048, 2048
      %81 = vsyncadd [#allocation12], %s80
      %s82 = sshll.u32 [#allocation11], 4
      %s83 = int_to_ptr.vmem [resolvable:$true] %s82
      %88 = dma.hbm_to_vmem [thread:$0]  %s5, 2048, %s83, [#allocation12], 128, 128, 8
    $region25: #{tpu_custom_call.1} parent=1 // pred_fallthru
      _
    // Predicated region
    $region26: #{tpu_custom_call.1} parent=1 // pred_check
      _
    $region27: #{tpu_custom_call.1} parent=1 // pred_check_branch
      %90 = sbr.rel (0) target = $region29
    $region28: #{tpu_custom_call.1} parent=1 // pred_region
      %s92 = ssub.s32 1280, 1280
      %93 = vsyncadd [#allocation12], %s92
      %s94 = sshll.u32 [#allocation13], 4
      %s95 = int_to_ptr.vmem [resolvable:$true] %s94
      %100 = dma.hbm_to_vmem [thread:$0]  %s6, 1280, %s95, [#allocation12], 640, 640, 40
    $region29: #{tpu_custom_call.1} parent=1 // pred_fallthru
      _
    // Predicated region
    $region30: #{tpu_custom_call.1} parent=1 // pred_check
      _
    $region31: #{tpu_custom_call.1} parent=1 // pred_check_branch
      %102 = sbr.rel (0) target = $region33
    $region32: #{tpu_custom_call.1} parent=1 // pred_region
      %s104 = ssub.s32 10240, 10240
      %105 = vsyncadd [#allocation15], %s104
      %s106 = sshll.u32 [#allocation14], 4
      %s107 = int_to_ptr.vmem [resolvable:$true] %s106
      %112 = dma.hbm_to_vmem [thread:$0]  %s7, 10240, %s107, [#allocation15], 320, 320, 20
    $region33: #{tpu_custom_call.1} parent=1 // pred_fallthru
      _
    // Predicated region
    $region34: #{tpu_custom_call.1} parent=1 // pred_check
      _
    $region35: #{tpu_custom_call.1} parent=1 // pred_check_branch
      %114 = sbr.rel (0) target = $region37
    $region36: #{tpu_custom_call.1} parent=1 // pred_region
      %s116 = ssub.s32 20480, 20480
      %117 = vsyncadd [#allocation15], %s116
      %s118 = sshll.u32 [#allocation16], 4
      %s119 = int_to_ptr.vmem [resolvable:$true] %s118
      %124 = dma.hbm_to_vmem [thread:$0]  %s8, 20480, %s119, [#allocation15], 320, 320, 20
    $region37: #{tpu_custom_call.1} parent=1 // pred_fallthru
      _
    // Predicated region
    $region38: #{tpu_custom_call.1} parent=1 // pred_check
      _
    $region39: #{tpu_custom_call.1} parent=1 // pred_check_branch
      %126 = sbr.rel (0) target = $region41
    $region40: #{tpu_custom_call.1} parent=1 // pred_region
      %127 = dma.done [#allocation3], 16
    $region41: #{tpu_custom_call.1} parent=1 // pred_fallthru
      _
    // Predicated region
    $region42: #{tpu_custom_call.1} parent=1 // pred_check
      _
    $region43: #{tpu_custom_call.1} parent=1 // pred_check_branch
      %129 = sbr.rel (0) target = $region45
    $region44: #{tpu_custom_call.1} parent=1 // pred_region
      %130 = dma.done [#allocation6], 32
    $region45: #{tpu_custom_call.1} parent=1 // pred_fallthru
      _
    // Predicated region
    $region46: #{tpu_custom_call.1} parent=1 // pred_check
      _
    $region47: #{tpu_custom_call.1} parent=1 // pred_check_branch
      %132 = sbr.rel (0) target = $region49
    $region48: #{tpu_custom_call.1} parent=1 // pred_region
      %133 = dma.done [#allocation6], 448
    $region49: #{tpu_custom_call.1} parent=1 // pred_fallthru
      _
    // Predicated region
    $region50: #{tpu_custom_call.1} parent=1 // pred_check
      _
    $region51: #{tpu_custom_call.1} parent=1 // pred_check_branch
      %135 = sbr.rel (0) target = $region53
    $region52: #{tpu_custom_call.1} parent=1 // pred_region
      %136 = dma.done [#allocation9], 5120
    $region53: #{tpu_custom_call.1} parent=1 // pred_fallthru
      _
    // Predicated region
    $region54: #{tpu_custom_call.1} parent=1 // pred_check
      _
    $region55: #{tpu_custom_call.1} parent=1 // pred_check_branch
      %138 = sbr.rel (0) target = $region57
    $region56: #{tpu_custom_call.1} parent=1 // pred_region
      %139 = dma.done [#allocation9], 36864
    $region57: #{tpu_custom_call.1} parent=1 // pred_fallthru
      _
    // Predicated region
    $region58: #{tpu_custom_call.1} parent=1 // pred_check
      _
    $region59: #{tpu_custom_call.1} parent=1 // pred_check_branch
      %141 = sbr.rel (0) target = $region61
    $region60: #{tpu_custom_call.1} parent=1 // pred_region
      %142 = dma.done [#allocation12], 2048
    $region61: #{tpu_custom_call.1} parent=1 // pred_fallthru
      _
    // Predicated region
    $region62: #{tpu_custom_call.1} parent=1 // pred_check
      _
    $region63: #{tpu_custom_call.1} parent=1 // pred_check_branch
      %144 = sbr.rel (0) target = $region65
    $region64: #{tpu_custom_call.1} parent=1 // pred_region
      %145 = dma.done [#allocation12], 1280
    $region65: #{tpu_custom_call.1} parent=1 // pred_fallthru
      _
    // Predicated region
    $region66: #{tpu_custom_call.1} parent=1 // pred_check
      _
    $region67: #{tpu_custom_call.1} parent=1 // pred_check_branch
      %147 = sbr.rel (0) target = $region69
    $region68: #{tpu_custom_call.1} parent=1 // pred_region
      %148 = dma.done [#allocation15], 10240
    $region69: #{tpu_custom_call.1} parent=1 // pred_fallthru
      _
    // Predicated region
    $region70: #{tpu_custom_call.1} parent=1 // pred_check
      _
    $region71: #{tpu_custom_call.1} parent=1 // pred_check_branch
      %150 = sbr.rel (0) target = $region73
    $region72: #{tpu_custom_call.1} parent=1 // pred_region
      %151 = dma.done [#allocation15], 20480
    $region73: #{tpu_custom_call.1} parent=1 // pred_fallthru
      _
    %v153 = vld [vmem:[#allocation2] sm:$0x1]
    %v154 = vld [vmem:[#allocation7] sm:$0xf]
    %v155 = vld [vmem:[#allocation13] ss:$0 sm:$0xff]
    %vm156 = vcmask 31744
    %v158 = vsel %vm156, %v153, 0
    %vm160 = vcmask 1043456
    %v162 = vsel %vm160, %v154, 0
    %164 = vmatprep.subr.mxu0 0.0
    %165 = vmatpush1.msra.mxu0 %v162
    %166 = vmatprep.subr.mxu0 0.0
    %167 = vmatpush1.msra.mxu0 0.0
    %168 = vmatprep.subr.mxu0 0.0
    %169 = vmatpush1.msra.mxu0 0.0
    %170 = vmatprep.subr.mxu0 0.0
    %171 = vmatpush1.msra.mxu0 0.0
    %172 = vmatprep.subr.mxu0 0.0
    %173 = vmatpush1.msra.mxu0 0.0
    %174 = vmatprep.subr.mxu0 0.0
    %175 = vmatpush1.msra.mxu0 0.0
    %176 = vmatprep.subr.mxu0 0.0
    %177 = vmatpush1.msra.mxu0 0.0
    %178 = vmatprep.subr.mxu0 0.0
    %179 = vmatpush1.msra.mxu0 0.0
    %180 = vmatprep.subr.mxu0 0.0
    %181 = vmatpush1.msra.mxu0 0.0
    %182 = vmatprep.subr.mxu0 0.0
    %183 = vmatpush1.msra.mxu0 0.0
    %184 = vmatprep.subr.mxu0 0.0
    %185 = vmatpush1.msra.mxu0 0.0
    %186 = vmatprep.subr.mxu0 0.0
    %187 = vmatpush1.msra.mxu0 0.0
    %188 = vmatprep.subr.mxu0 0.0
    %189 = vmatpush1.msra.mxu0 0.0
    %190 = vmatprep.subr.mxu0 0.0
    %191 = vmatpush1.msra.mxu0 0.0
    %192 = vmatprep.subr.mxu0 0.0
    %193 = vmatpush1.msra.mxu0 0.0
    %194 = vmatprep.subr.mxu0 0.0
    %195 = vmatpush1.msra.mxu0 0.0
    %196 = vmatprep.subr.mxu0 0.0
    %197 = vmatpush1.msra.mxu0 0.0
    %198 = vmatprep.subr.mxu0 0.0
    %199 = vmatpush1.msra.mxu0 0.0
    %200 = vmatprep.subr.mxu0 0.0
    %201 = vmatpush1.msra.mxu0 0.0
    %202 = vmatprep.subr.mxu0 0.0
    %203 = vmatpush1.msra.mxu0 0.0
    %204 = vmatprep.subr.mxu0 0.0
    %205 = vmatpush1.msra.mxu0 0.0
    %206 = vmatprep.subr.mxu0 0.0
    %207 = vmatpush1.msra.mxu0 0.0
    %208 = vmatprep.subr.mxu0 0.0
    %209 = vmatpush1.msra.mxu0 0.0
    %210 = vmatprep.subr.mxu0 0.0
    %211 = vmatpush1.msra.mxu0 0.0
    %212 = vmatprep.subr.mxu0 0.0
    %213 = vmatpush1.msra.mxu0 0.0
    %214 = vmatprep.subr.mxu0 0.0
    %215 = vmatpush1.msra.mxu0 0.0
    %216 = vmatprep.subr.mxu0 0.0
    %217 = vmatpush1.msra.mxu0 0.0
    %218 = vmatprep.subr.mxu0 0.0
    %219 = vmatpush1.msra.mxu0 0.0
    %220 = vmatprep.subr.mxu0 0.0
    %221 = vmatpush1.msra.mxu0 0.0
    %222 = vmatprep.subr.mxu0 0.0
    %223 = vmatpush1.msra.mxu0 0.0
    %224 = vmatprep.subr.mxu0 0.0
    %225 = vmatpush1.msra.mxu0 0.0
    %226 = vmatprep.subr.mxu0 0.0
    %227 = vmatpush1.msra.mxu0 0.0
    %228 = vmatprep.mubr.f32.mxu0 0.0
    %229 = vmatmul.mubr.f32.gmra.mrb[0].mxu0 %v158
    %v230 = vpop.f32.mrb[0].mxu0
    %v231 = vadd.f32 %v155, %v230
    %v232 = vpop.f32.mrb[0].mxu0
    %233 = vdwg.mxu0
    %v234 = vmax.f32 %v231, 0.0
    %v235 = vld [vmem:[#allocation8] sm:$0xff]
    %v236 = vld [vmem:[#allocation8 + $0x8] sm:$0xff]
    %v237 = vld [vmem:[#allocation8 + $0x10] sm:$0xf]
    %v238 = vld [vmem:[#allocation8 + $0x28] sm:$0xff]
    %v239 = vld [vmem:[#allocation8 + $0x30] sm:$0xff]
    %v240 = vld [vmem:[#allocation8 + $0x38] sm:$0xf]
    %v241 = vld [vmem:[#allocation8 + $0x50] sm:$0xff]
    %v242 = vld [vmem:[#allocation8 + $0x58] sm:$0xff]
    %v243 = vld [vmem:[#allocation8 + $0x60] sm:$0xf]
    %v244 = vld [vmem:[#allocation8 + $0x78] sm:$0xff]
    %v245 = vld [vmem:[#allocation8 + $0x80] sm:$0xff]
    %v246 = vld [vmem:[#allocation8 + $0x88] sm:$0xf]
    %v247 = vld [vmem:[#allocation8 + $0xa0] sm:$0xff]
    %v248 = vld [vmem:[#allocation8 + $0xa8] sm:$0xff]
    %v249 = vld [vmem:[#allocation8 + $0xb0] sm:$0xf]
    %v250 = vld [vmem:[#allocation8 + $0xc8] sm:$0xff]
    %v251 = vld [vmem:[#allocation8 + $0xd0] sm:$0xff]
    %v252 = vld [vmem:[#allocation8 + $0xd8] sm:$0xf]
    %v253 = vld [vmem:[#allocation8 + $0xf0] sm:$0xff]
    %v254 = vld [vmem:[#allocation8 + $0xf8] sm:$0xff]
    %v255 = vld [vmem:[#allocation8 + $0x100] sm:$0xf]
    %v256 = vld [vmem:[#allocation8 + $0x118] sm:$0xff]
    %v257 = vld [vmem:[#allocation8 + $0x120] sm:$0xff]
    %v258 = vld [vmem:[#allocation8 + $0x128] sm:$0xf]
    %v259 = vpack.c.bf16 %v234, %v234
    %s260 = scalar_lea.vmem [#allocation13], 1
    %v261 = vld [vmem:[%s260] ss:$8 sm:$0xf]
    %v262 = vld [vmem:[%s260] ss:$8 sm:$0x10]
    %v263 = vor.u32 %v261, %v262
    %v288 = vunpack.c.l.b16 %v235
    %v289 = vunpack.c.h.b16 %v235
    %v290 = vunpack.c.l.b16 %v236
    %v291 = vunpack.c.h.b16 %v236
    %v292 = vunpack.c.l.b16 %v237
    %v293 = vunpack.c.l.b16 %v238
    %v294 = vunpack.c.h.b16 %v238
    %v295 = vunpack.c.l.b16 %v239
    %v296 = vunpack.c.h.b16 %v239
    %v297 = vunpack.c.l.b16 %v240
    %v298 = vunpack.c.l.b16 %v241
    %v299 = vunpack.c.h.b16 %v241
    %v300 = vunpack.c.l.b16 %v242
    %v301 = vunpack.c.h.b16 %v242
    %v302 = vunpack.c.l.b16 %v243
    %v303 = vunpack.c.l.b16 %v244
    %v304 = vunpack.c.h.b16 %v244
    %v305 = vunpack.c.l.b16 %v245
    %v306 = vunpack.c.h.b16 %v245
    %v307 = vunpack.c.l.b16 %v246
    %v308 = vunpack.c.l.b16 %v247
    %v309 = vunpack.c.h.b16 %v247
    %v310 = vunpack.c.l.b16 %v248
    %v311 = vunpack.c.h.b16 %v248
    %v312 = vunpack.c.l.b16 %v249
    %v313 = vunpack.c.l.b16 %v250
    %v314 = vunpack.c.h.b16 %v250
    %v315 = vunpack.c.l.b16 %v251
    %v316 = vunpack.c.h.b16 %v251
    %v317 = vunpack.c.l.b16 %v252
    %v318 = vunpack.c.l.b16 %v253
    %v319 = vunpack.c.h.b16 %v253
    %v320 = vunpack.c.l.b16 %v254
    %v321 = vunpack.c.h.b16 %v254
    %v322 = vunpack.c.l.b16 %v255
    %v323 = vunpack.c.l.b16 %v256
    %v324 = vunpack.c.h.b16 %v256
    %v325 = vunpack.c.l.b16 %v257
    %v326 = vunpack.c.h.b16 %v257
    %v327 = vunpack.c.l.b16 %v258
    %v328 = vpack.c.b16 %v293, %v288
    %v329 = vpack.c.b16 %v294, %v289
    %v330 = vpack.c.b16 %v295, %v290
    %v331 = vpack.c.b16 %v296, %v291
    %v332 = vpack.c.b16 %v297, %v292
    %v333 = vpack.c.b16 %v303, %v298
    %v334 = vpack.c.b16 %v304, %v299
    %v335 = vpack.c.b16 %v305, %v300
    %v336 = vpack.c.b16 %v306, %v301
    %v337 = vpack.c.b16 %v307, %v302
    %v338 = vpack.c.b16 %v313, %v308
    %v339 = vpack.c.b16 %v314, %v309
    %v340 = vpack.c.b16 %v315, %v310
    %v341 = vpack.c.b16 %v316, %v311
    %v342 = vpack.c.b16 %v317, %v312
    %v343 = vpack.c.b16 %v323, %v318
    %v344 = vpack.c.b16 %v324, %v319
    %v345 = vpack.c.b16 %v325, %v320
    %v346 = vpack.c.b16 %v326, %v321
    %v347 = vpack.c.b16 %v327, %v322
    %v369 = vlaneseq
    %v370 = vshrl.u32 %v369, 7
    %v371 = vsub.s32 0, %v370
    %v372 = vrot.slane %v263, %v371
    %v373 = vlaneseq
    %v374 = vshrl.u32 %v373, 7
    %v375 = vsub.s32 1, %v374
    %v376 = vrot.slane %v263, %v375
    %v377 = vlaneseq
    %v378 = vshrl.u32 %v377, 7
    %v379 = vsub.s32 2, %v378
    %v380 = vrot.slane %v263, %v379
    %v381 = vlaneseq
    %v382 = vshrl.u32 %v381, 7
    %v383 = vsub.s32 3, %v382
    %v384 = vrot.slane %v263, %v383
    %v385 = vlaneseq
    %v386 = vshrl.u32 %v385, 7
    %v387 = vsub.s32 4, %v386
    %v388 = vrot.slane %v263, %v387
    %vm394 = vcmask 523264
    %v396 = vsel %vm394, %v259, 0
    %398 = vmatprep.subr.bf16.mxu0 %v329
    %399 = vmatpush1.bf16.msra.mxu0 %v328
    %400 = vmatprep.subr.bf16.mxu0 %v334
    %401 = vmatpush1.bf16.msra.mxu0 %v333
    %402 = vmatprep.subr.bf16.mxu0 %v339
    %403 = vmatpush1.bf16.msra.mxu0 %v338
    %404 = vmatprep.subr.bf16.mxu0 %v344
    %405 = vmatpush1.bf16.msra.mxu0 %v343
    %406 = vmatprep.subr.bf16.mxu0 0
    %407 = vmatpush1.bf16.msra.mxu0 0
    %408 = vmatprep.subr.bf16.mxu0 0
    %409 = vmatpush1.bf16.msra.mxu0 0
    %410 = vmatprep.subr.bf16.mxu0 0
    %411 = vmatpush1.bf16.msra.mxu0 0
    %412 = vmatprep.subr.bf16.mxu0 0
    %413 = vmatpush1.bf16.msra.mxu0 0
    %414 = vmatprep.subr.bf16.mxu0 0
    %415 = vmatpush1.bf16.msra.mxu0 0
    %416 = vmatprep.subr.bf16.mxu0 0
    %417 = vmatpush1.bf16.msra.mxu0 0
    %418 = vmatprep.subr.bf16.mxu0 0
    %419 = vmatpush1.bf16.msra.mxu0 0
    %420 = vmatprep.subr.bf16.mxu0 0
    %421 = vmatpush1.bf16.msra.mxu0 0
    %422 = vmatprep.subr.bf16.mxu0 0
    %423 = vmatpush1.bf16.msra.mxu0 0
    %424 = vmatprep.subr.bf16.mxu0 0
    %425 = vmatpush1.bf16.msra.mxu0 0
    %426 = vmatprep.subr.bf16.mxu0 0
    %427 = vmatpush1.bf16.msra.mxu0 0
    %428 = vmatprep.subr.bf16.mxu0 0
    %429 = vmatpush1.bf16.msra.mxu0 0
    %430 = vmatprep.mubr.bf16.mxu0 0
    %431 = vmatmul.mubr.bf16.gmra.mrb[0].mxu0 %v396
    %v432 = vpop.f32.mrb[0].mxu0
    %v433 = vadd.f32 %v372, %v432
    %v434 = vpop.f32.mrb[0].mxu0
    %v435 = vadd.f32 %v376, %v434
    %v436 = vpop.f32.mrb[0].mxu0
    %v437 = vpop.f32.mrb[0].mxu0
    %438 = vdwg.mxu0
    %439 = vmatprep.subr.bf16.mxu0 %v331
    %440 = vmatpush1.bf16.msra.mxu0 %v330
    %441 = vmatprep.subr.bf16.mxu0 %v336
    %442 = vmatpush1.bf16.msra.mxu0 %v335
    %443 = vmatprep.subr.bf16.mxu0 %v341
    %444 = vmatpush1.bf16.msra.mxu0 %v340
    %445 = vmatprep.subr.bf16.mxu0 %v346
    %446 = vmatpush1.bf16.msra.mxu0 %v345
    %447 = vmatprep.subr.bf16.mxu0 0
    %448 = vmatpush1.bf16.msra.mxu0 0
    %449 = vmatprep.subr.bf16.mxu0 0
    %450 = vmatpush1.bf16.msra.mxu0 0
    %451 = vmatprep.subr.bf16.mxu0 0
    %452 = vmatpush1.bf16.msra.mxu0 0
    %453 = vmatprep.subr.bf16.mxu0 0
    %454 = vmatpush1.bf16.msra.mxu0 0
    %455 = vmatprep.subr.bf16.mxu0 0
    %456 = vmatpush1.bf16.msra.mxu0 0
    %457 = vmatprep.subr.bf16.mxu0 0
    %458 = vmatpush1.bf16.msra.mxu0 0
    %459 = vmatprep.subr.bf16.mxu0 0
    %460 = vmatpush1.bf16.msra.mxu0 0
    %461 = vmatprep.subr.bf16.mxu0 0
    %462 = vmatpush1.bf16.msra.mxu0 0
    %463 = vmatprep.subr.bf16.mxu0 0
    %464 = vmatpush1.bf16.msra.mxu0 0
    %465 = vmatprep.subr.bf16.mxu0 0
    %466 = vmatpush1.bf16.msra.mxu0 0
    %467 = vmatprep.subr.bf16.mxu0 0
    %468 = vmatpush1.bf16.msra.mxu0 0
    %469 = vmatprep.subr.bf16.mxu0 0
    %470 = vmatpush1.bf16.msra.mxu0 0
    %471 = vmatprep.mubr.bf16.mxu0 0
    %472 = vmatmul.mubr.bf16.gmra.mrb[0].mxu0 %v396
    %v473 = vpop.f32.mrb[0].mxu0
    %v474 = vadd.f32 %v380, %v473
    %v475 = vpop.f32.mrb[0].mxu0
    %v476 = vadd.f32 %v384, %v475
    %v477 = vpop.f32.mrb[0].mxu0
    %v478 = vpop.f32.mrb[0].mxu0
    %479 = vdwg.mxu0
    %480 = vmatprep.subr.bf16.mxu0 0
    %481 = vmatpush1.bf16.msra.mxu0 %v332
    %482 = vmatprep.subr.bf16.mxu0 0
    %483 = vmatpush1.bf16.msra.mxu0 %v337
    %484 = vmatprep.subr.bf16.mxu0 0
    %485 = vmatpush1.bf16.msra.mxu0 %v342
    %486 = vmatprep.subr.bf16.mxu0 0
    %487 = vmatpush1.bf16.msra.mxu0 %v347
    %488 = vmatprep.subr.bf16.mxu0 0
    %489 = vmatpush1.bf16.msra.mxu0 0
    %490 = vmatprep.subr.bf16.mxu0 0
    %491 = vmatpush1.bf16.msra.mxu0 0
    %492 = vmatprep.subr.bf16.mxu0 0
    %493 = vmatpush1.bf16.msra.mxu0 0
    %494 = vmatprep.subr.bf16.mxu0 0
    %495 = vmatpush1.bf16.msra.mxu0 0
    %496 = vmatprep.subr.bf16.mxu0 0
    %497 = vmatpush1.bf16.msra.mxu0 0
    %498 = vmatprep.subr.bf16.mxu0 0
    %499 = vmatpush1.bf16.msra.mxu0 0
    %500 = vmatprep.subr.bf16.mxu0 0
    %501 = vmatpush1.bf16.msra.mxu0 0
    %502 = vmatprep.subr.bf16.mxu0 0
    %503 = vmatpush1.bf16.msra.mxu0 0
    %504 = vmatprep.subr.bf16.mxu0 0
    %505 = vmatpush1.bf16.msra.mxu0 0
    %506 = vmatprep.subr.bf16.mxu0 0
    %507 = vmatpush1.bf16.msra.mxu0 0
    %508 = vmatprep.subr.bf16.mxu0 0
    %509 = vmatpush1.bf16.msra.mxu0 0
    %510 = vmatprep.subr.bf16.mxu0 0
    %511 = vmatpush1.bf16.msra.mxu0 0
    %512 = vmatprep.mubr.bf16.mxu0 0
    %513 = vmatmul.mubr.bf16.gmra.mrb[0].mxu0 %v396
    %v514 = vpop.f32.mrb[0].mxu0
    %v515 = vadd.f32 %v388, %v514
    %v516 = vpop.f32.mrb[0].mxu0
    %v517 = vpop.f32.mrb[0].mxu0
    %v518 = vpop.f32.mrb[0].mxu0
    %519 = vdwg.mxu0
    %v520 = vld [vmem:[#allocation8 + $0x14] sm:$0xff]
    %v521 = vld [vmem:[#allocation8 + $0x1c] sm:$0xff]
    %v522 = vld [vmem:[#allocation8 + $0x24] sm:$0xf]
    %v523 = vld [vmem:[#allocation8 + $0x3c] sm:$0xff]
    %v524 = vld [vmem:[#allocation8 + $0x44] sm:$0xff]
    %v525 = vld [vmem:[#allocation8 + $0x4c] sm:$0xf]
    %v526 = vld [vmem:[#allocation8 + $0x64] sm:$0xff]
    %v527 = vld [vmem:[#allocation8 + $0x6c] sm:$0xff]
    %v528 = vld [vmem:[#allocation8 + $0x74] sm:$0xf]
    %v529 = vld [vmem:[#allocation8 + $0x8c] sm:$0xff]
    %v530 = vld [vmem:[#allocation8 + $0x94] sm:$0xff]
    %v531 = vld [vmem:[#allocation8 + $0x9c] sm:$0xf]
    %v532 = vld [vmem:[#allocation8 + $0xb4] sm:$0xff]
    %v533 = vld [vmem:[#allocation8 + $0xbc] sm:$0xff]
    %v534 = vld [vmem:[#allocation8 + $0xc4] sm:$0xf]
    %v535 = vld [vmem:[#allocation8 + $0xdc] sm:$0xff]
    %v536 = vld [vmem:[#allocation8 + $0xe4] sm:$0xff]
    %v537 = vld [vmem:[#allocation8 + $0xec] sm:$0xf]
    %v538 = vld [vmem:[#allocation8 + $0x104] sm:$0xff]
    %v539 = vld [vmem:[#allocation8 + $0x10c] sm:$0xff]
    %v540 = vld [vmem:[#allocation8 + $0x114] sm:$0xf]
    %v541 = vld [vmem:[#allocation8 + $0x12c] sm:$0xff]
    %v542 = vld [vmem:[#allocation8 + $0x134] sm:$0xff]
    %v543 = vld [vmem:[#allocation8 + $0x13c] sm:$0xf]
    %s544 = scalar_lea.vmem [#allocation13], 2
    %v545 = vld [vmem:[%s544] ss:$8 sm:$0xf]
    %v546 = vld [vmem:[%s544] ss:$8 sm:$0x10]
    %v547 = vor.u32 %v545, %v546
    %549 = vrot.lane.b32.xlu0 %v259, 64
    %v550 = vpop.permute.xlu0 %549
    %v575 = vunpack.c.l.b16 %v520
    %v576 = vunpack.c.h.b16 %v520
    %v577 = vunpack.c.l.b16 %v521
    %v578 = vunpack.c.h.b16 %v521
    %v579 = vunpack.c.l.b16 %v522
    %v580 = vunpack.c.l.b16 %v523
    %v581 = vunpack.c.h.b16 %v523
    %v582 = vunpack.c.l.b16 %v524
    %v583 = vunpack.c.h.b16 %v524
    %v584 = vunpack.c.l.b16 %v525
    %v585 = vunpack.c.l.b16 %v526
    %v586 = vunpack.c.h.b16 %v526
    %v587 = vunpack.c.l.b16 %v527
    %v588 = vunpack.c.h.b16 %v527
    %v589 = vunpack.c.l.b16 %v528
    %v590 = vunpack.c.l.b16 %v529
    %v591 = vunpack.c.h.b16 %v529
    %v592 = vunpack.c.l.b16 %v530
    %v593 = vunpack.c.h.b16 %v530
    %v594 = vunpack.c.l.b16 %v531
    %v595 = vunpack.c.l.b16 %v532
    %v596 = vunpack.c.h.b16 %v532
    %v597 = vunpack.c.l.b16 %v533
    %v598 = vunpack.c.h.b16 %v533
    %v599 = vunpack.c.l.b16 %v534
    %v600 = vunpack.c.l.b16 %v535
    %v601 = vunpack.c.h.b16 %v535
    %v602 = vunpack.c.l.b16 %v536
    %v603 = vunpack.c.h.b16 %v536
    %v604 = vunpack.c.l.b16 %v537
    %v605 = vunpack.c.l.b16 %v538
    %v606 = vunpack.c.h.b16 %v538
    %v607 = vunpack.c.l.b16 %v539
    %v608 = vunpack.c.h.b16 %v539
    %v609 = vunpack.c.l.b16 %v540
    %v610 = vunpack.c.l.b16 %v541
    %v611 = vunpack.c.h.b16 %v541
    %v612 = vunpack.c.l.b16 %v542
    %v613 = vunpack.c.h.b16 %v542
    %v614 = vunpack.c.l.b16 %v543
    %v615 = vpack.c.b16 %v580, %v575
    %v616 = vpack.c.b16 %v581, %v576
    %v617 = vpack.c.b16 %v582, %v577
    %v618 = vpack.c.b16 %v583, %v578
    %v619 = vpack.c.b16 %v584, %v579
    %v620 = vpack.c.b16 %v590, %v585
    %v621 = vpack.c.b16 %v591, %v586
    %v622 = vpack.c.b16 %v592, %v587
    %v623 = vpack.c.b16 %v593, %v588
    %v624 = vpack.c.b16 %v594, %v589
    %v625 = vpack.c.b16 %v600, %v595
    %v626 = vpack.c.b16 %v601, %v596
    %v627 = vpack.c.b16 %v602, %v597
    %v628 = vpack.c.b16 %v603, %v598
    %v629 = vpack.c.b16 %v604, %v599
    %v630 = vpack.c.b16 %v610, %v605
    %v631 = vpack.c.b16 %v611, %v606
    %v632 = vpack.c.b16 %v612, %v607
    %v633 = vpack.c.b16 %v613, %v608
    %v634 = vpack.c.b16 %v614, %v609
    %v656 = vlaneseq
    %v657 = vshrl.u32 %v656, 7
    %v658 = vsub.s32 0, %v657
    %v659 = vrot.slane %v547, %v658
    %v660 = vlaneseq
    %v661 = vshrl.u32 %v660, 7
    %v662 = vsub.s32 1, %v661
    %v663 = vrot.slane %v547, %v662
    %v664 = vlaneseq
    %v665 = vshrl.u32 %v664, 7
    %v666 = vsub.s32 2, %v665
    %v667 = vrot.slane %v547, %v666
    %v668 = vlaneseq
    %v669 = vshrl.u32 %v668, 7
    %v670 = vsub.s32 3, %v669
    %v671 = vrot.slane %v547, %v670
    %v672 = vlaneseq
    %v673 = vshrl.u32 %v672, 7
    %v674 = vsub.s32 4, %v673
    %v675 = vrot.slane %v547, %v674
    %v682 = vsel %vm394, %v550, 0
    %684 = vmatprep.subr.bf16.mxu0 %v616
    %685 = vmatpush1.bf16.msra.mxu0 %v615
    %686 = vmatprep.subr.bf16.mxu0 %v621
    %687 = vmatpush1.bf16.msra.mxu0 %v620
    %688 = vmatprep.subr.bf16.mxu0 %v626
    %689 = vmatpush1.bf16.msra.mxu0 %v625
    %690 = vmatprep.subr.bf16.mxu0 %v631
    %691 = vmatpush1.bf16.msra.mxu0 %v630
    %692 = vmatprep.subr.bf16.mxu0 0
    %693 = vmatpush1.bf16.msra.mxu0 0
    %694 = vmatprep.subr.bf16.mxu0 0
    %695 = vmatpush1.bf16.msra.mxu0 0
    %696 = vmatprep.subr.bf16.mxu0 0
    %697 = vmatpush1.bf16.msra.mxu0 0
    %698 = vmatprep.subr.bf16.mxu0 0
    %699 = vmatpush1.bf16.msra.mxu0 0
    %700 = vmatprep.subr.bf16.mxu0 0
    %701 = vmatpush1.bf16.msra.mxu0 0
    %702 = vmatprep.subr.bf16.mxu0 0
    %703 = vmatpush1.bf16.msra.mxu0 0
    %704 = vmatprep.subr.bf16.mxu0 0
    %705 = vmatpush1.bf16.msra.mxu0 0
    %706 = vmatprep.subr.bf16.mxu0 0
    %707 = vmatpush1.bf16.msra.mxu0 0
    %708 = vmatprep.subr.bf16.mxu0 0
    %709 = vmatpush1.bf16.msra.mxu0 0
    %710 = vmatprep.subr.bf16.mxu0 0
    %711 = vmatpush1.bf16.msra.mxu0 0
    %712 = vmatprep.subr.bf16.mxu0 0
    %713 = vmatpush1.bf16.msra.mxu0 0
    %714 = vmatprep.subr.bf16.mxu0 0
    %715 = vmatpush1.bf16.msra.mxu0 0
    %716 = vmatprep.mubr.bf16.mxu0 0
    %717 = vmatmul.mubr.bf16.gmra.mrb[0].mxu0 %v682
    %v718 = vpop.f32.mrb[0].mxu0
    %v719 = vadd.f32 %v659, %v718
    %v720 = vpop.f32.mrb[0].mxu0
    %v721 = vadd.f32 %v663, %v720
    %v722 = vpop.f32.mrb[0].mxu0
    %v723 = vpop.f32.mrb[0].mxu0
    %724 = vdwg.mxu0
    %725 = vmatprep.subr.bf16.mxu0 %v618
    %726 = vmatpush1.bf16.msra.mxu0 %v617
    %727 = vmatprep.subr.bf16.mxu0 %v623
    %728 = vmatpush1.bf16.msra.mxu0 %v622
    %729 = vmatprep.subr.bf16.mxu0 %v628
    %730 = vmatpush1.bf16.msra.mxu0 %v627
    %731 = vmatprep.subr.bf16.mxu0 %v633
    %732 = vmatpush1.bf16.msra.mxu0 %v632
    %733 = vmatprep.subr.bf16.mxu0 0
    %734 = vmatpush1.bf16.msra.mxu0 0
    %735 = vmatprep.subr.bf16.mxu0 0
    %736 = vmatpush1.bf16.msra.mxu0 0
    %737 = vmatprep.subr.bf16.mxu0 0
    %738 = vmatpush1.bf16.msra.mxu0 0
    %739 = vmatprep.subr.bf16.mxu0 0
    %740 = vmatpush1.bf16.msra.mxu0 0
    %741 = vmatprep.subr.bf16.mxu0 0
    %742 = vmatpush1.bf16.msra.mxu0 0
    %743 = vmatprep.subr.bf16.mxu0 0
    %744 = vmatpush1.bf16.msra.mxu0 0
    %745 = vmatprep.subr.bf16.mxu0 0
    %746 = vmatpush1.bf16.msra.mxu0 0
    %747 = vmatprep.subr.bf16.mxu0 0
    %748 = vmatpush1.bf16.msra.mxu0 0
    %749 = vmatprep.subr.bf16.mxu0 0
    %750 = vmatpush1.bf16.msra.mxu0 0
    %751 = vmatprep.subr.bf16.mxu0 0
    %752 = vmatpush1.bf16.msra.mxu0 0
    %753 = vmatprep.subr.bf16.mxu0 0
    %754 = vmatpush1.bf16.msra.mxu0 0
    %755 = vmatprep.subr.bf16.mxu0 0
    %756 = vmatpush1.bf16.msra.mxu0 0
    %757 = vmatprep.mubr.bf16.mxu0 0
    %758 = vmatmul.mubr.bf16.gmra.mrb[0].mxu0 %v682
    %v759 = vpop.f32.mrb[0].mxu0
    %v760 = vadd.f32 %v667, %v759
    %v761 = vpop.f32.mrb[0].mxu0
    %v762 = vadd.f32 %v671, %v761
    %v763 = vpop.f32.mrb[0].mxu0
    %v764 = vpop.f32.mrb[0].mxu0
    %765 = vdwg.mxu0
    %766 = vmatprep.subr.bf16.mxu0 0
    %767 = vmatpush1.bf16.msra.mxu0 %v619
    %768 = vmatprep.subr.bf16.mxu0 0
    %769 = vmatpush1.bf16.msra.mxu0 %v624
    %770 = vmatprep.subr.bf16.mxu0 0
    %771 = vmatpush1.bf16.msra.mxu0 %v629
    %772 = vmatprep.subr.bf16.mxu0 0
    %773 = vmatpush1.bf16.msra.mxu0 %v634
    %774 = vmatprep.subr.bf16.mxu0 0
    %775 = vmatpush1.bf16.msra.mxu0 0
    %776 = vmatprep.subr.bf16.mxu0 0
    %777 = vmatpush1.bf16.msra.mxu0 0
    %778 = vmatprep.subr.bf16.mxu0 0
    %779 = vmatpush1.bf16.msra.mxu0 0
    %780 = vmatprep.subr.bf16.mxu0 0
    %781 = vmatpush1.bf16.msra.mxu0 0
    %782 = vmatprep.subr.bf16.mxu0 0
    %783 = vmatpush1.bf16.msra.mxu0 0
    %784 = vmatprep.subr.bf16.mxu0 0
    %785 = vmatpush1.bf16.msra.mxu0 0
    %786 = vmatprep.subr.bf16.mxu0 0
    %787 = vmatpush1.bf16.msra.mxu0 0
    %788 = vmatprep.subr.bf16.mxu0 0
    %789 = vmatpush1.bf16.msra.mxu0 0
    %790 = vmatprep.subr.bf16.mxu0 0
    %791 = vmatpush1.bf16.msra.mxu0 0
    %792 = vmatprep.subr.bf16.mxu0 0
    %793 = vmatpush1.bf16.msra.mxu0 0
    %794 = vmatprep.subr.bf16.mxu0 0
    %795 = vmatpush1.bf16.msra.mxu0 0
    %796 = vmatprep.subr.bf16.mxu0 0
    %797 = vmatpush1.bf16.msra.mxu0 0
    %798 = vmatprep.mubr.bf16.mxu0 0
    %799 = vmatmul.mubr.bf16.gmra.mrb[0].mxu0 %v682
    %v800 = vpop.f32.mrb[0].mxu0
    %v801 = vadd.f32 %v675, %v800
    %v802 = vpop.f32.mrb[0].mxu0
    %v803 = vpop.f32.mrb[0].mxu0
    %v804 = vpop.f32.mrb[0].mxu0
    %805 = vdwg.mxu0
    %v806 = vld [vmem:[#allocation5] sm:$0x3]
    %s807 = scalar_lea.vmem [#allocation10], 1024
    %v808 = vld [vmem:[%s807] sm:$0xff]
    %v809 = vld [vmem:[%s807 + $0x8] sm:$0xff]
    %v810 = vld [vmem:[%s807 + $0x10] sm:$0xff]
    %v811 = vld [vmem:[%s807 + $0x18] sm:$0xff]
    %v812 = vld [vmem:[%s807 + $0x20] sm:$0xff]
    %v813 = vld [vmem:[%s807 + $0x28] sm:$0xff]
    %v814 = vld [vmem:[%s807 + $0x30] sm:$0xff]
    %v815 = vld [vmem:[%s807 + $0x38] sm:$0xff]
    %v816 = vld [vmem:[%s807 + $0x40] sm:$0xff]
    %v817 = vld [vmem:[%s807 + $0x48] sm:$0xff]
    %v818 = vld [vmem:[%s807 + $0x50] sm:$0xff]
    %v819 = vld [vmem:[%s807 + $0x58] sm:$0xff]
    %v820 = vld [vmem:[%s807 + $0x60] sm:$0xff]
    %v821 = vld [vmem:[%s807 + $0x68] sm:$0xff]
    %v822 = vld [vmem:[%s807 + $0x70] sm:$0xff]
    %v823 = vld [vmem:[%s807 + $0x78] sm:$0xff]
    %v824 = vld [vmem:[%s807 + $0x80] sm:$0xff]
    %v825 = vld [vmem:[%s807 + $0x88] sm:$0xff]
    %v826 = vld [vmem:[%s807 + $0x90] sm:$0xff]
    %v827 = vld [vmem:[%s807 + $0x98] sm:$0xff]
    %v828 = vld [vmem:[%s807 + $0xa0] sm:$0xff]
    %v829 = vld [vmem:[%s807 + $0xa8] sm:$0xff]
    %v830 = vld [vmem:[%s807 + $0xb0] sm:$0xff]
    %v831 = vld [vmem:[%s807 + $0xb8] sm:$0xff]
    %v832 = vld [vmem:[%s807 + $0xc0] sm:$0xff]
    %v833 = vld [vmem:[%s807 + $0xc8] sm:$0xff]
    %v834 = vld [vmem:[%s807 + $0xd0] sm:$0xff]
    %v835 = vld [vmem:[%s807 + $0xd8] sm:$0xff]
    %v836 = vld [vmem:[%s807 + $0xe0] sm:$0xff]
    %v837 = vld [vmem:[%s807 + $0xe8] sm:$0xff]
    %v838 = vld [vmem:[%s807 + $0xf0] sm:$0xff]
    %v839 = vld [vmem:[%s807 + $0xf8] sm:$0xff]
    %v840 = vpack.c.bf16 %v433, %v433
    %s841 = scalar_lea.vmem [#allocation13], 3
    %v842 = vld [vmem:[%s841] ss:$8 sm:$0xf]
    %v875 = vunpack.c.l.b16 %v808
    %v876 = vunpack.c.h.b16 %v808
    %v877 = vunpack.c.l.b16 %v809
    %v878 = vunpack.c.h.b16 %v809
    %v879 = vunpack.c.l.b16 %v810
    %v880 = vunpack.c.h.b16 %v810
    %v881 = vunpack.c.l.b16 %v811
    %v882 = vunpack.c.h.b16 %v811
    %v883 = vunpack.c.l.b16 %v812
    %v884 = vunpack.c.h.b16 %v812
    %v885 = vunpack.c.l.b16 %v813
    %v886 = vunpack.c.h.b16 %v813
    %v887 = vunpack.c.l.b16 %v814
    %v888 = vunpack.c.h.b16 %v814
    %v889 = vunpack.c.l.b16 %v815
    %v890 = vunpack.c.h.b16 %v815
    %v891 = vunpack.c.l.b16 %v816
    %v892 = vunpack.c.h.b16 %v816
    %v893 = vunpack.c.l.b16 %v817
    %v894 = vunpack.c.h.b16 %v817
    %v895 = vunpack.c.l.b16 %v818
    %v896 = vunpack.c.h.b16 %v818
    %v897 = vunpack.c.l.b16 %v819
    %v898 = vunpack.c.h.b16 %v819
    %v899 = vunpack.c.l.b16 %v820
    %v900 = vunpack.c.h.b16 %v820
    %v901 = vunpack.c.l.b16 %v821
    %v902 = vunpack.c.h.b16 %v821
    %v903 = vunpack.c.l.b16 %v822
    %v904 = vunpack.c.h.b16 %v822
    %v905 = vunpack.c.l.b16 %v823
    %v906 = vunpack.c.h.b16 %v823
    %v907 = vunpack.c.l.b16 %v824
    %v908 = vunpack.c.h.b16 %v824
    %v909 = vunpack.c.l.b16 %v825
    %v910 = vunpack.c.h.b16 %v825
    %v911 = vunpack.c.l.b16 %v826
    %v912 = vunpack.c.h.b16 %v826
    %v913 = vunpack.c.l.b16 %v827
    %v914 = vunpack.c.h.b16 %v827
    %v915 = vunpack.c.l.b16 %v828
    %v916 = vunpack.c.h.b16 %v828
    %v917 = vunpack.c.l.b16 %v829
    %v918 = vunpack.c.h.b16 %v829
    %v919 = vunpack.c.l.b16 %v830
    %v920 = vunpack.c.h.b16 %v830
    %v921 = vunpack.c.l.b16 %v831
    %v922 = vunpack.c.h.b16 %v831
    %v923 = vunpack.c.l.b16 %v832
    %v924 = vunpack.c.h.b16 %v832
    %v925 = vunpack.c.l.b16 %v833
    %v926 = vunpack.c.h.b16 %v833
    %v927 = vunpack.c.l.b16 %v834
    %v928 = vunpack.c.h.b16 %v834
    %v929 = vunpack.c.l.b16 %v835
    %v930 = vunpack.c.h.b16 %v835
    %v931 = vunpack.c.l.b16 %v836
    %v932 = vunpack.c.h.b16 %v836
    %v933 = vunpack.c.l.b16 %v837
    %v934 = vunpack.c.h.b16 %v837
    %v935 = vunpack.c.l.b16 %v838
    %v936 = vunpack.c.h.b16 %v838
    %v937 = vunpack.c.l.b16 %v839
    %v938 = vunpack.c.h.b16 %v839
    %v939 = vpack.c.b16 %v879, %v875
    %v940 = vpack.c.b16 %v880, %v876
    %v941 = vpack.c.b16 %v881, %v877
    %v942 = vpack.c.b16 %v882, %v878
    %v943 = vpack.c.b16 %v887, %v883
    %v944 = vpack.c.b16 %v888, %v884
    %v945 = vpack.c.b16 %v889, %v885
    %v946 = vpack.c.b16 %v890, %v886
    %v947 = vpack.c.b16 %v895, %v891
    %v948 = vpack.c.b16 %v896, %v892
    %v949 = vpack.c.b16 %v897, %v893
    %v950 = vpack.c.b16 %v898, %v894
    %v951 = vpack.c.b16 %v903, %v899
    %v952 = vpack.c.b16 %v904, %v900
    %v953 = vpack.c.b16 %v905, %v901
    %v954 = vpack.c.b16 %v906, %v902
    %v955 = vpack.c.b16 %v911, %v907
    %v956 = vpack.c.b16 %v912, %v908
    %v957 = vpack.c.b16 %v913, %v909
    %v958 = vpack.c.b16 %v914, %v910
    %v959 = vpack.c.b16 %v919, %v915
    %v960 = vpack.c.b16 %v920, %v916
    %v961 = vpack.c.b16 %v921, %v917
    %v962 = vpack.c.b16 %v922, %v918
    %v963 = vpack.c.b16 %v927, %v923
    %v964 = vpack.c.b16 %v928, %v924
    %v965 = vpack.c.b16 %v929, %v925
    %v966 = vpack.c.b16 %v930, %v926
    %v967 = vpack.c.b16 %v935, %v931
    %v968 = vpack.c.b16 %v936, %v932
    %v969 = vpack.c.b16 %v937, %v933
    %v970 = vpack.c.b16 %v938, %v934
    %v1004 = vlaneseq
    %v1005 = vshrl.u32 %v1004, 7
    %v1006 = vsub.s32 0, %v1005
    %v1007 = vrot.slane %v842, %v1006
    %v1008 = vlaneseq
    %v1009 = vshrl.u32 %v1008, 7
    %v1010 = vsub.s32 1, %v1009
    %v1011 = vrot.slane %v842, %v1010
    %v1012 = vlaneseq
    %v1013 = vshrl.u32 %v1012, 7
    %v1014 = vsub.s32 2, %v1013
    %v1015 = vrot.slane %v842, %v1014
    %v1016 = vlaneseq
    %v1017 = vshrl.u32 %v1016, 7
    %v1018 = vsub.s32 3, %v1017
    %v1019 = vrot.slane %v842, %v1018
    %1024 = vmatprep.subr.bf16.mxu0 %v940
    %1025 = vmatpush1.bf16.msra.mxu0 %v939
    %1026 = vmatprep.subr.bf16.mxu0 %v944
    %1027 = vmatpush1.bf16.msra.mxu0 %v943
    %1028 = vmatprep.subr.bf16.mxu0 %v948
    %1029 = vmatpush1.bf16.msra.mxu0 %v947
    %1030 = vmatprep.subr.bf16.mxu0 %v952
    %1031 = vmatpush1.bf16.msra.mxu0 %v951
    %1032 = vmatprep.subr.bf16.mxu0 %v956
    %1033 = vmatpush1.bf16.msra.mxu0 %v955
    %1034 = vmatprep.subr.bf16.mxu0 %v960
    %1035 = vmatpush1.bf16.msra.mxu0 %v959
    %1036 = vmatprep.subr.bf16.mxu0 %v964
    %1037 = vmatpush1.bf16.msra.mxu0 %v963
    %1038 = vmatprep.subr.bf16.mxu0 %v968
    %1039 = vmatpush1.bf16.msra.mxu0 %v967
    %1040 = vmatprep.subr.bf16.mxu0 0
    %1041 = vmatpush1.bf16.msra.mxu0 0
    %1042 = vmatprep.subr.bf16.mxu0 0
    %1043 = vmatpush1.bf16.msra.mxu0 0
    %1044 = vmatprep.subr.bf16.mxu0 0
    %1045 = vmatpush1.bf16.msra.mxu0 0
    %1046 = vmatprep.subr.bf16.mxu0 0
    %1047 = vmatpush1.bf16.msra.mxu0 0
    %1048 = vmatprep.subr.bf16.mxu0 0
    %1049 = vmatpush1.bf16.msra.mxu0 0
    %1050 = vmatprep.subr.bf16.mxu0 0
    %1051 = vmatpush1.bf16.msra.mxu0 0
    %1052 = vmatprep.subr.bf16.mxu0 0
    %1053 = vmatpush1.bf16.msra.mxu0 0
    %1054 = vmatprep.subr.bf16.mxu0 0
    %1055 = vmatpush1.bf16.msra.mxu0 0
    %1056 = vmatprep.mubr.bf16.mxu0 0
    %1057 = vmatmul.mubr.bf16.gmra.mrb[0].mxu0 %v840
    %v1058 = vpop.f32.mrb[0].mxu0
    %v1059 = vadd.f32 %v1007, %v1058
    %v1060 = vpop.f32.mrb[0].mxu0
    %v1061 = vadd.f32 %v1011, %v1060
    %v1062 = vpop.f32.mrb[0].mxu0
    %v1063 = vpop.f32.mrb[0].mxu0
    %1064 = vdwg.mxu0
    %1065 = vmatprep.subr.bf16.mxu0 %v942
    %1066 = vmatpush1.bf16.msra.mxu0 %v941
    %1067 = vmatprep.subr.bf16.mxu0 %v946
    %1068 = vmatpush1.bf16.msra.mxu0 %v945
    %1069 = vmatprep.subr.bf16.mxu0 %v950
    %1070 = vmatpush1.bf16.msra.mxu0 %v949
    %1071 = vmatprep.subr.bf16.mxu0 %v954
    %1072 = vmatpush1.bf16.msra.mxu0 %v953
    %1073 = vmatprep.subr.bf16.mxu0 %v958
    %1074 = vmatpush1.bf16.msra.mxu0 %v957
    %1075 = vmatprep.subr.bf16.mxu0 %v962
    %1076 = vmatpush1.bf16.msra.mxu0 %v961
    %1077 = vmatprep.subr.bf16.mxu0 %v966
    %1078 = vmatpush1.bf16.msra.mxu0 %v965
    %1079 = vmatprep.subr.bf16.mxu0 %v970
    %1080 = vmatpush1.bf16.msra.mxu0 %v969
    %1081 = vmatprep.subr.bf16.mxu0 0
    %1082 = vmatpush1.bf16.msra.mxu0 0
    %1083 = vmatprep.subr.bf16.mxu0 0
    %1084 = vmatpush1.bf16.msra.mxu0 0
    %1085 = vmatprep.subr.bf16.mxu0 0
    %1086 = vmatpush1.bf16.msra.mxu0 0
    %1087 = vmatprep.subr.bf16.mxu0 0
    %1088 = vmatpush1.bf16.msra.mxu0 0
    %1089 = vmatprep.subr.bf16.mxu0 0
    %1090 = vmatpush1.bf16.msra.mxu0 0
    %1091 = vmatprep.subr.bf16.mxu0 0
    %1092 = vmatpush1.bf16.msra.mxu0 0
    %1093 = vmatprep.subr.bf16.mxu0 0
    %1094 = vmatpush1.bf16.msra.mxu0 0
    %1095 = vmatprep.subr.bf16.mxu0 0
    %1096 = vmatpush1.bf16.msra.mxu0 0
    %1097 = vmatprep.mubr.bf16.mxu0 0
    %1098 = vmatmul.mubr.bf16.gmra.mrb[0].mxu0 %v840
    %v1099 = vpop.f32.mrb[0].mxu0
    %v1100 = vadd.f32 %v1015, %v1099
    %v1101 = vpop.f32.mrb[0].mxu0
    %v1102 = vadd.f32 %v1019, %v1101
    %v1103 = vpop.f32.mrb[0].mxu0
    %v1104 = vpop.f32.mrb[0].mxu0
    %1105 = vdwg.mxu0
    %s1106 = scalar_lea.vmem [#allocation10], 1280
    %v1107 = vld [vmem:[%s1106] sm:$0xff]
    %v1108 = vld [vmem:[%s1106 + $0x8] sm:$0xff]
    %v1109 = vld [vmem:[%s1106 + $0x10] sm:$0xff]
    %v1110 = vld [vmem:[%s1106 + $0x18] sm:$0xff]
    %v1111 = vld [vmem:[%s1106 + $0x20] sm:$0xff]
    %v1112 = vld [vmem:[%s1106 + $0x28] sm:$0xff]
    %v1113 = vld [vmem:[%s1106 + $0x30] sm:$0xff]
    %v1114 = vld [vmem:[%s1106 + $0x38] sm:$0xff]
    %v1115 = vld [vmem:[%s1106 + $0x40] sm:$0xff]
    %v1116 = vld [vmem:[%s1106 + $0x48] sm:$0xff]
    %v1117 = vld [vmem:[%s1106 + $0x50] sm:$0xff]
    %v1118 = vld [vmem:[%s1106 + $0x58] sm:$0xff]
    %v1119 = vld [vmem:[%s1106 + $0x60] sm:$0xff]
    %v1120 = vld [vmem:[%s1106 + $0x68] sm:$0xff]
    %v1121 = vld [vmem:[%s1106 + $0x70] sm:$0xff]
    %v1122 = vld [vmem:[%s1106 + $0x78] sm:$0xff]
    %v1123 = vld [vmem:[%s1106 + $0x80] sm:$0xff]
    %v1124 = vld [vmem:[%s1106 + $0x88] sm:$0xff]
    %v1125 = vld [vmem:[%s1106 + $0x90] sm:$0xff]
    %v1126 = vld [vmem:[%s1106 + $0x98] sm:$0xff]
    %v1127 = vld [vmem:[%s1106 + $0xa0] sm:$0xff]
    %v1128 = vld [vmem:[%s1106 + $0xa8] sm:$0xff]
    %v1129 = vld [vmem:[%s1106 + $0xb0] sm:$0xff]
    %v1130 = vld [vmem:[%s1106 + $0xb8] sm:$0xff]
    %v1131 = vld [vmem:[%s1106 + $0xc0] sm:$0xff]
    %v1132 = vld [vmem:[%s1106 + $0xc8] sm:$0xff]
    %v1133 = vld [vmem:[%s1106 + $0xd0] sm:$0xff]
    %v1134 = vld [vmem:[%s1106 + $0xd8] sm:$0xff]
    %v1135 = vld [vmem:[%s1106 + $0xe0] sm:$0xff]
    %v1136 = vld [vmem:[%s1106 + $0xe8] sm:$0xff]
    %v1137 = vld [vmem:[%s1106 + $0xf0] sm:$0xff]
    %v1138 = vld [vmem:[%s1106 + $0xf8] sm:$0xff]
    %v1139 = vpack.c.bf16 %v435, %v435
    %s1140 = scalar_lea.vmem [#allocation13], 4
    %v1141 = vld [vmem:[%s1140] ss:$8 sm:$0xf]
    %v1174 = vunpack.c.l.b16 %v1107
    %v1175 = vunpack.c.h.b16 %v1107
    %v1176 = vunpack.c.l.b16 %v1108
    %v1177 = vunpack.c.h.b16 %v1108
    %v1178 = vunpack.c.l.b16 %v1109
    %v1179 = vunpack.c.h.b16 %v1109
    %v1180 = vunpack.c.l.b16 %v1110
    %v1181 = vunpack.c.h.b16 %v1110
    %v1182 = vunpack.c.l.b16 %v1111
    %v1183 = vunpack.c.h.b16 %v1111
    %v1184 = vunpack.c.l.b16 %v1112
    %v1185 = vunpack.c.h.b16 %v1112
    %v1186 = vunpack.c.l.b16 %v1113
    %v1187 = vunpack.c.h.b16 %v1113
    %v1188 = vunpack.c.l.b16 %v1114
    %v1189 = vunpack.c.h.b16 %v1114
    %v1190 = vunpack.c.l.b16 %v1115
    %v1191 = vunpack.c.h.b16 %v1115
    %v1192 = vunpack.c.l.b16 %v1116
    %v1193 = vunpack.c.h.b16 %v1116
    %v1194 = vunpack.c.l.b16 %v1117
    %v1195 = vunpack.c.h.b16 %v1117
    %v1196 = vunpack.c.l.b16 %v1118
    %v1197 = vunpack.c.h.b16 %v1118
    %v1198 = vunpack.c.l.b16 %v1119
    %v1199 = vunpack.c.h.b16 %v1119
    %v1200 = vunpack.c.l.b16 %v1120
    %v1201 = vunpack.c.h.b16 %v1120
    %v1202 = vunpack.c.l.b16 %v1121
    %v1203 = vunpack.c.h.b16 %v1121
    %v1204 = vunpack.c.l.b16 %v1122
    %v1205 = vunpack.c.h.b16 %v1122
    %v1206 = vunpack.c.l.b16 %v1123
    %v1207 = vunpack.c.h.b16 %v1123
    %v1208 = vunpack.c.l.b16 %v1124
    %v1209 = vunpack.c.h.b16 %v1124
    %v1210 = vunpack.c.l.b16 %v1125
    %v1211 = vunpack.c.h.b16 %v1125
    %v1212 = vunpack.c.l.b16 %v1126
    %v1213 = vunpack.c.h.b16 %v1126
    %v1214 = vunpack.c.l.b16 %v1127
    %v1215 = vunpack.c.h.b16 %v1127
    %v1216 = vunpack.c.l.b16 %v1128
    %v1217 = vunpack.c.h.b16 %v1128
    %v1218 = vunpack.c.l.b16 %v1129
    %v1219 = vunpack.c.h.b16 %v1129
    %v1220 = vunpack.c.l.b16 %v1130
    %v1221 = vunpack.c.h.b16 %v1130
    %v1222 = vunpack.c.l.b16 %v1131
    %v1223 = vunpack.c.h.b16 %v1131
    %v1224 = vunpack.c.l.b16 %v1132
    %v1225 = vunpack.c.h.b16 %v1132
    %v1226 = vunpack.c.l.b16 %v1133
    %v1227 = vunpack.c.h.b16 %v1133
    %v1228 = vunpack.c.l.b16 %v1134
    %v1229 = vunpack.c.h.b16 %v1134
    %v1230 = vunpack.c.l.b16 %v1135
    %v1231 = vunpack.c.h.b16 %v1135
    %v1232 = vunpack.c.l.b16 %v1136
    %v1233 = vunpack.c.h.b16 %v1136
    %v1234 = vunpack.c.l.b16 %v1137
    %v1235 = vunpack.c.h.b16 %v1137
    %v1236 = vunpack.c.l.b16 %v1138
    %v1237 = vunpack.c.h.b16 %v1138
    %v1238 = vpack.c.b16 %v1178, %v1174
    %v1239 = vpack.c.b16 %v1179, %v1175
    %v1240 = vpack.c.b16 %v1180, %v1176
    %v1241 = vpack.c.b16 %v1181, %v1177
    %v1242 = vpack.c.b16 %v1186, %v1182
    %v1243 = vpack.c.b16 %v1187, %v1183
    %v1244 = vpack.c.b16 %v1188, %v1184
    %v1245 = vpack.c.b16 %v1189, %v1185
    %v1246 = vpack.c.b16 %v1194, %v1190
    %v1247 = vpack.c.b16 %v1195, %v1191
    %v1248 = vpack.c.b16 %v1196, %v1192
    %v1249 = vpack.c.b16 %v1197, %v1193
    %v1250 = vpack.c.b16 %v1202, %v1198
    %v1251 = vpack.c.b16 %v1203, %v1199
    %v1252 = vpack.c.b16 %v1204, %v1200
    %v1253 = vpack.c.b16 %v1205, %v1201
    %v1254 = vpack.c.b16 %v1210, %v1206
    %v1255 = vpack.c.b16 %v1211, %v1207
    %v1256 = vpack.c.b16 %v1212, %v1208
    %v1257 = vpack.c.b16 %v1213, %v1209
    %v1258 = vpack.c.b16 %v1218, %v1214
    %v1259 = vpack.c.b16 %v1219, %v1215
    %v1260 = vpack.c.b16 %v1220, %v1216
    %v1261 = vpack.c.b16 %v1221, %v1217
    %v1262 = vpack.c.b16 %v1226, %v1222
    %v1263 = vpack.c.b16 %v1227, %v1223
    %v1264 = vpack.c.b16 %v1228, %v1224
    %v1265 = vpack.c.b16 %v1229, %v1225
    %v1266 = vpack.c.b16 %v1234, %v1230
    %v1267 = vpack.c.b16 %v1235, %v1231
    %v1268 = vpack.c.b16 %v1236, %v1232
    %v1269 = vpack.c.b16 %v1237, %v1233
    %v1303 = vlaneseq
    %v1304 = vshrl.u32 %v1303, 7
    %v1305 = vsub.s32 0, %v1304
    %v1306 = vrot.slane %v1141, %v1305
    %v1307 = vlaneseq
    %v1308 = vshrl.u32 %v1307, 7
    %v1309 = vsub.s32 1, %v1308
    %v1310 = vrot.slane %v1141, %v1309
    %v1311 = vlaneseq
    %v1312 = vshrl.u32 %v1311, 7
    %v1313 = vsub.s32 2, %v1312
    %v1314 = vrot.slane %v1141, %v1313
    %v1315 = vlaneseq
    %v1316 = vshrl.u32 %v1315, 7
    %v1317 = vsub.s32 3, %v1316
    %v1318 = vrot.slane %v1141, %v1317
    %1323 = vmatprep.subr.bf16.mxu0 %v1239
    %1324 = vmatpush1.bf16.msra.mxu0 %v1238
    %1325 = vmatprep.subr.bf16.mxu0 %v1243
    %1326 = vmatpush1.bf16.msra.mxu0 %v1242
    %1327 = vmatprep.subr.bf16.mxu0 %v1247
    %1328 = vmatpush1.bf16.msra.mxu0 %v1246
    %1329 = vmatprep.subr.bf16.mxu0 %v1251
    %1330 = vmatpush1.bf16.msra.mxu0 %v1250
    %1331 = vmatprep.subr.bf16.mxu0 %v1255
    %1332 = vmatpush1.bf16.msra.mxu0 %v1254
    %1333 = vmatprep.subr.bf16.mxu0 %v1259
    %1334 = vmatpush1.bf16.msra.mxu0 %v1258
    %1335 = vmatprep.subr.bf16.mxu0 %v1263
    %1336 = vmatpush1.bf16.msra.mxu0 %v1262
    %1337 = vmatprep.subr.bf16.mxu0 %v1267
    %1338 = vmatpush1.bf16.msra.mxu0 %v1266
    %1339 = vmatprep.subr.bf16.mxu0 0
    %1340 = vmatpush1.bf16.msra.mxu0 0
    %1341 = vmatprep.subr.bf16.mxu0 0
    %1342 = vmatpush1.bf16.msra.mxu0 0
    %1343 = vmatprep.subr.bf16.mxu0 0
    %1344 = vmatpush1.bf16.msra.mxu0 0
    %1345 = vmatprep.subr.bf16.mxu0 0
    %1346 = vmatpush1.bf16.msra.mxu0 0
    %1347 = vmatprep.subr.bf16.mxu0 0
    %1348 = vmatpush1.bf16.msra.mxu0 0
    %1349 = vmatprep.subr.bf16.mxu0 0
    %1350 = vmatpush1.bf16.msra.mxu0 0
    %1351 = vmatprep.subr.bf16.mxu0 0
    %1352 = vmatpush1.bf16.msra.mxu0 0
    %1353 = vmatprep.subr.bf16.mxu0 0
    %1354 = vmatpush1.bf16.msra.mxu0 0
    %1355 = vmatprep.mubr.bf16.mxu0 0
    %1356 = vmatmul.mubr.bf16.gmra.mrb[0].mxu0 %v1139
    %v1357 = vpop.f32.mrb[0].mxu0
    %v1358 = vadd.f32 %v1306, %v1357
    %v1359 = vpop.f32.mrb[0].mxu0
    %v1360 = vadd.f32 %v1310, %v1359
    %v1361 = vpop.f32.mrb[0].mxu0
    %v1362 = vpop.f32.mrb[0].mxu0
    %1363 = vdwg.mxu0
    %1364 = vmatprep.subr.bf16.mxu0 %v1241
    %1365 = vmatpush1.bf16.msra.mxu0 %v1240
    %1366 = vmatprep.subr.bf16.mxu0 %v1245
    %1367 = vmatpush1.bf16.msra.mxu0 %v1244
    %1368 = vmatprep.subr.bf16.mxu0 %v1249
    %1369 = vmatpush1.bf16.msra.mxu0 %v1248
    %1370 = vmatprep.subr.bf16.mxu0 %v1253
    %1371 = vmatpush1.bf16.msra.mxu0 %v1252
    %1372 = vmatprep.subr.bf16.mxu0 %v1257
    %1373 = vmatpush1.bf16.msra.mxu0 %v1256
    %1374 = vmatprep.subr.bf16.mxu0 %v1261
    %1375 = vmatpush1.bf16.msra.mxu0 %v1260
    %1376 = vmatprep.subr.bf16.mxu0 %v1265
    %1377 = vmatpush1.bf16.msra.mxu0 %v1264
    %1378 = vmatprep.subr.bf16.mxu0 %v1269
    %1379 = vmatpush1.bf16.msra.mxu0 %v1268
    %1380 = vmatprep.subr.bf16.mxu0 0
    %1381 = vmatpush1.bf16.msra.mxu0 0
    %1382 = vmatprep.subr.bf16.mxu0 0
    %1383 = vmatpush1.bf16.msra.mxu0 0
    %1384 = vmatprep.subr.bf16.mxu0 0
    %1385 = vmatpush1.bf16.msra.mxu0 0
    %1386 = vmatprep.subr.bf16.mxu0 0
    %1387 = vmatpush1.bf16.msra.mxu0 0
    %1388 = vmatprep.subr.bf16.mxu0 0
    %1389 = vmatpush1.bf16.msra.mxu0 0
    %1390 = vmatprep.subr.bf16.mxu0 0
    %1391 = vmatpush1.bf16.msra.mxu0 0
    %1392 = vmatprep.subr.bf16.mxu0 0
    %1393 = vmatpush1.bf16.msra.mxu0 0
    %1394 = vmatprep.subr.bf16.mxu0 0
    %1395 = vmatpush1.bf16.msra.mxu0 0
    %1396 = vmatprep.mubr.bf16.mxu0 0
    %1397 = vmatmul.mubr.bf16.gmra.mrb[0].mxu0 %v1139
    %v1398 = vpop.f32.mrb[0].mxu0
    %v1399 = vadd.f32 %v1314, %v1398
    %v1400 = vpop.f32.mrb[0].mxu0
    %v1401 = vadd.f32 %v1318, %v1400
    %v1402 = vpop.f32.mrb[0].mxu0
    %v1403 = vpop.f32.mrb[0].mxu0
    %1404 = vdwg.mxu0
    %s1405 = scalar_lea.vmem [#allocation10], 1536
    %v1406 = vld [vmem:[%s1405] sm:$0xff]
    %v1407 = vld [vmem:[%s1405 + $0x8] sm:$0xff]
    %v1408 = vld [vmem:[%s1405 + $0x10] sm:$0xff]
    %v1409 = vld [vmem:[%s1405 + $0x18] sm:$0xff]
    %v1410 = vld [vmem:[%s1405 + $0x20] sm:$0xff]
    %v1411 = vld [vmem:[%s1405 + $0x28] sm:$0xff]
    %v1412 = vld [vmem:[%s1405 + $0x30] sm:$0xff]
    %v1413 = vld [vmem:[%s1405 + $0x38] sm:$0xff]
    %v1414 = vld [vmem:[%s1405 + $0x40] sm:$0xff]
    %v1415 = vld [vmem:[%s1405 + $0x48] sm:$0xff]
    %v1416 = vld [vmem:[%s1405 + $0x50] sm:$0xff]
    %v1417 = vld [vmem:[%s1405 + $0x58] sm:$0xff]
    %v1418 = vld [vmem:[%s1405 + $0x60] sm:$0xff]
    %v1419 = vld [vmem:[%s1405 + $0x68] sm:$0xff]
    %v1420 = vld [vmem:[%s1405 + $0x70] sm:$0xff]
    %v1421 = vld [vmem:[%s1405 + $0x78] sm:$0xff]
    %v1422 = vld [vmem:[%s1405 + $0x80] sm:$0xff]
    %v1423 = vld [vmem:[%s1405 + $0x88] sm:$0xff]
    %v1424 = vld [vmem:[%s1405 + $0x90] sm:$0xff]
    %v1425 = vld [vmem:[%s1405 + $0x98] sm:$0xff]
    %v1426 = vld [vmem:[%s1405 + $0xa0] sm:$0xff]
    %v1427 = vld [vmem:[%s1405 + $0xa8] sm:$0xff]
    %v1428 = vld [vmem:[%s1405 + $0xb0] sm:$0xff]
    %v1429 = vld [vmem:[%s1405 + $0xb8] sm:$0xff]
    %v1430 = vld [vmem:[%s1405 + $0xc0] sm:$0xff]
    %v1431 = vld [vmem:[%s1405 + $0xc8] sm:$0xff]
    %v1432 = vld [vmem:[%s1405 + $0xd0] sm:$0xff]
    %v1433 = vld [vmem:[%s1405 + $0xd8] sm:$0xff]
    %v1434 = vld [vmem:[%s1405 + $0xe0] sm:$0xff]
    %v1435 = vld [vmem:[%s1405 + $0xe8] sm:$0xff]
    %v1436 = vld [vmem:[%s1405 + $0xf0] sm:$0xff]
    %v1437 = vld [vmem:[%s1405 + $0xf8] sm:$0xff]
    %v1438 = vpack.c.bf16 %v474, %v474
    %s1439 = scalar_lea.vmem [#allocation13], 5
    %v1440 = vld [vmem:[%s1439] ss:$8 sm:$0xf]
    %v1473 = vunpack.c.l.b16 %v1406
    %v1474 = vunpack.c.h.b16 %v1406
    %v1475 = vunpack.c.l.b16 %v1407
    %v1476 = vunpack.c.h.b16 %v1407
    %v1477 = vunpack.c.l.b16 %v1408
    %v1478 = vunpack.c.h.b16 %v1408
    %v1479 = vunpack.c.l.b16 %v1409
    %v1480 = vunpack.c.h.b16 %v1409
    %v1481 = vunpack.c.l.b16 %v1410
    %v1482 = vunpack.c.h.b16 %v1410
    %v1483 = vunpack.c.l.b16 %v1411
    %v1484 = vunpack.c.h.b16 %v1411
    %v1485 = vunpack.c.l.b16 %v1412
    %v1486 = vunpack.c.h.b16 %v1412
    %v1487 = vunpack.c.l.b16 %v1413
    %v1488 = vunpack.c.h.b16 %v1413
    %v1489 = vunpack.c.l.b16 %v1414
    %v1490 = vunpack.c.h.b16 %v1414
    %v1491 = vunpack.c.l.b16 %v1415
    %v1492 = vunpack.c.h.b16 %v1415
    %v1493 = vunpack.c.l.b16 %v1416
    %v1494 = vunpack.c.h.b16 %v1416
    %v1495 = vunpack.c.l.b16 %v1417
    %v1496 = vunpack.c.h.b16 %v1417
    %v1497 = vunpack.c.l.b16 %v1418
    %v1498 = vunpack.c.h.b16 %v1418
    %v1499 = vunpack.c.l.b16 %v1419
    %v1500 = vunpack.c.h.b16 %v1419
    %v1501 = vunpack.c.l.b16 %v1420
    %v1502 = vunpack.c.h.b16 %v1420
    %v1503 = vunpack.c.l.b16 %v1421
    %v1504 = vunpack.c.h.b16 %v1421
    %v1505 = vunpack.c.l.b16 %v1422
    %v1506 = vunpack.c.h.b16 %v1422
    %v1507 = vunpack.c.l.b16 %v1423
    %v1508 = vunpack.c.h.b16 %v1423
    %v1509 = vunpack.c.l.b16 %v1424
    %v1510 = vunpack.c.h.b16 %v1424
    %v1511 = vunpack.c.l.b16 %v1425
    %v1512 = vunpack.c.h.b16 %v1425
    %v1513 = vunpack.c.l.b16 %v1426
    %v1514 = vunpack.c.h.b16 %v1426
    %v1515 = vunpack.c.l.b16 %v1427
    %v1516 = vunpack.c.h.b16 %v1427
    %v1517 = vunpack.c.l.b16 %v1428
    %v1518 = vunpack.c.h.b16 %v1428
    %v1519 = vunpack.c.l.b16 %v1429
    %v1520 = vunpack.c.h.b16 %v1429
    %v1521 = vunpack.c.l.b16 %v1430
    %v1522 = vunpack.c.h.b16 %v1430
    %v1523 = vunpack.c.l.b16 %v1431
    %v1524 = vunpack.c.h.b16 %v1431
    %v1525 = vunpack.c.l.b16 %v1432
    %v1526 = vunpack.c.h.b16 %v1432
    %v1527 = vunpack.c.l.b16 %v1433
    %v1528 = vunpack.c.h.b16 %v1433
    %v1529 = vunpack.c.l.b16 %v1434
    %v1530 = vunpack.c.h.b16 %v1434
    %v1531 = vunpack.c.l.b16 %v1435
    %v1532 = vunpack.c.h.b16 %v1435
    %v1533 = vunpack.c.l.b16 %v1436
    %v1534 = vunpack.c.h.b16 %v1436
    %v1535 = vunpack.c.l.b16 %v1437
    %v1536 = vunpack.c.h.b16 %v1437
    %v1537 = vpack.c.b16 %v1477, %v1473
    %v1538 = vpack.c.b16 %v1478, %v1474
    %v1539 = vpack.c.b16 %v1479, %v1475
    %v1540 = vpack.c.b16 %v1480, %v1476
    %v1541 = vpack.c.b16 %v1485, %v1481
    %v1542 = vpack.c.b16 %v1486, %v1482
    %v1543 = vpack.c.b16 %v1487, %v1483
    %v1544 = vpack.c.b16 %v1488, %v1484
    %v1545 = vpack.c.b16 %v1493, %v1489
    %v1546 = vpack.c.b16 %v1494, %v1490
    %v1547 = vpack.c.b16 %v1495, %v1491
    %v1548 = vpack.c.b16 %v1496, %v1492
    %v1549 = vpack.c.b16 %v1501, %v1497
    %v1550 = vpack.c.b16 %v1502, %v1498
    %v1551 = vpack.c.b16 %v1503, %v1499
    %v1552 = vpack.c.b16 %v1504, %v1500
    %v1553 = vpack.c.b16 %v1509, %v1505
    %v1554 = vpack.c.b16 %v1510, %v1506
    %v1555 = vpack.c.b16 %v1511, %v1507
    %v1556 = vpack.c.b16 %v1512, %v1508
    %v1557 = vpack.c.b16 %v1517, %v1513
    %v1558 = vpack.c.b16 %v1518, %v1514
    %v1559 = vpack.c.b16 %v1519, %v1515
    %v1560 = vpack.c.b16 %v1520, %v1516
    %v1561 = vpack.c.b16 %v1525, %v1521
    %v1562 = vpack.c.b16 %v1526, %v1522
    %v1563 = vpack.c.b16 %v1527, %v1523
    %v1564 = vpack.c.b16 %v1528, %v1524
    %v1565 = vpack.c.b16 %v1533, %v1529
    %v1566 = vpack.c.b16 %v1534, %v1530
    %v1567 = vpack.c.b16 %v1535, %v1531
    %v1568 = vpack.c.b16 %v1536, %v1532
    %v1602 = vlaneseq
    %v1603 = vshrl.u32 %v1602, 7
    %v1604 = vsub.s32 0, %v1603
    %v1605 = vrot.slane %v1440, %v1604
    %v1606 = vlaneseq
    %v1607 = vshrl.u32 %v1606, 7
    %v1608 = vsub.s32 1, %v1607
    %v1609 = vrot.slane %v1440, %v1608
    %v1610 = vlaneseq
    %v1611 = vshrl.u32 %v1610, 7
    %v1612 = vsub.s32 2, %v1611
    %v1613 = vrot.slane %v1440, %v1612
    %v1614 = vlaneseq
    %v1615 = vshrl.u32 %v1614, 7
    %v1616 = vsub.s32 3, %v1615
    %v1617 = vrot.slane %v1440, %v1616
    %1622 = vmatprep.subr.bf16.mxu0 %v1538
    %1623 = vmatpush1.bf16.msra.mxu0 %v1537
    %1624 = vmatprep.subr.bf16.mxu0 %v1542
    %1625 = vmatpush1.bf16.msra.mxu0 %v1541
    %1626 = vmatprep.subr.bf16.mxu0 %v1546
    %1627 = vmatpush1.bf16.msra.mxu0 %v1545
    %1628 = vmatprep.subr.bf16.mxu0 %v1550
    %1629 = vmatpush1.bf16.msra.mxu0 %v1549
    %1630 = vmatprep.subr.bf16.mxu0 %v1554
    %1631 = vmatpush1.bf16.msra.mxu0 %v1553
    %1632 = vmatprep.subr.bf16.mxu0 %v1558
    %1633 = vmatpush1.bf16.msra.mxu0 %v1557
    %1634 = vmatprep.subr.bf16.mxu0 %v1562
    %1635 = vmatpush1.bf16.msra.mxu0 %v1561
    %1636 = vmatprep.subr.bf16.mxu0 %v1566
    %1637 = vmatpush1.bf16.msra.mxu0 %v1565
    %1638 = vmatprep.subr.bf16.mxu0 0
    %1639 = vmatpush1.bf16.msra.mxu0 0
    %1640 = vmatprep.subr.bf16.mxu0 0
    %1641 = vmatpush1.bf16.msra.mxu0 0
    %1642 = vmatprep.subr.bf16.mxu0 0
    %1643 = vmatpush1.bf16.msra.mxu0 0
    %1644 = vmatprep.subr.bf16.mxu0 0
    %1645 = vmatpush1.bf16.msra.mxu0 0
    %1646 = vmatprep.subr.bf16.mxu0 0
    %1647 = vmatpush1.bf16.msra.mxu0 0
    %1648 = vmatprep.subr.bf16.mxu0 0
    %1649 = vmatpush1.bf16.msra.mxu0 0
    %1650 = vmatprep.subr.bf16.mxu0 0
    %1651 = vmatpush1.bf16.msra.mxu0 0
    %1652 = vmatprep.subr.bf16.mxu0 0
    %1653 = vmatpush1.bf16.msra.mxu0 0
    %1654 = vmatprep.mubr.bf16.mxu0 0
    %1655 = vmatmul.mubr.bf16.gmra.mrb[0].mxu0 %v1438
    %v1656 = vpop.f32.mrb[0].mxu0
    %v1657 = vadd.f32 %v1605, %v1656
    %v1658 = vpop.f32.mrb[0].mxu0
    %v1659 = vadd.f32 %v1609, %v1658
    %v1660 = vpop.f32.mrb[0].mxu0
    %v1661 = vpop.f32.mrb[0].mxu0
    %1662 = vdwg.mxu0
    %1663 = vmatprep.subr.bf16.mxu0 %v1540
    %1664 = vmatpush1.bf16.msra.mxu0 %v1539
    %1665 = vmatprep.subr.bf16.mxu0 %v1544
    %1666 = vmatpush1.bf16.msra.mxu0 %v1543
    %1667 = vmatprep.subr.bf16.mxu0 %v1548
    %1668 = vmatpush1.bf16.msra.mxu0 %v1547
    %1669 = vmatprep.subr.bf16.mxu0 %v1552
    %1670 = vmatpush1.bf16.msra.mxu0 %v1551
    %1671 = vmatprep.subr.bf16.mxu0 %v1556
    %1672 = vmatpush1.bf16.msra.mxu0 %v1555
    %1673 = vmatprep.subr.bf16.mxu0 %v1560
    %1674 = vmatpush1.bf16.msra.mxu0 %v1559
    %1675 = vmatprep.subr.bf16.mxu0 %v1564
    %1676 = vmatpush1.bf16.msra.mxu0 %v1563
    %1677 = vmatprep.subr.bf16.mxu0 %v1568
    %1678 = vmatpush1.bf16.msra.mxu0 %v1567
    %1679 = vmatprep.subr.bf16.mxu0 0
    %1680 = vmatpush1.bf16.msra.mxu0 0
    %1681 = vmatprep.subr.bf16.mxu0 0
    %1682 = vmatpush1.bf16.msra.mxu0 0
    %1683 = vmatprep.subr.bf16.mxu0 0
    %1684 = vmatpush1.bf16.msra.mxu0 0
    %1685 = vmatprep.subr.bf16.mxu0 0
    %1686 = vmatpush1.bf16.msra.mxu0 0
    %1687 = vmatprep.subr.bf16.mxu0 0
    %1688 = vmatpush1.bf16.msra.mxu0 0
    %1689 = vmatprep.subr.bf16.mxu0 0
    %1690 = vmatpush1.bf16.msra.mxu0 0
    %1691 = vmatprep.subr.bf16.mxu0 0
    %1692 = vmatpush1.bf16.msra.mxu0 0
    %1693 = vmatprep.subr.bf16.mxu0 0
    %1694 = vmatpush1.bf16.msra.mxu0 0
    %1695 = vmatprep.mubr.bf16.mxu0 0
    %1696 = vmatmul.mubr.bf16.gmra.mrb[0].mxu0 %v1438
    %v1697 = vpop.f32.mrb[0].mxu0
    %v1698 = vadd.f32 %v1613, %v1697
    %v1699 = vpop.f32.mrb[0].mxu0
    %v1700 = vadd.f32 %v1617, %v1699
    %v1701 = vpop.f32.mrb[0].mxu0
    %v1702 = vpop.f32.mrb[0].mxu0
    %1703 = vdwg.mxu0
    %s1704 = scalar_lea.vmem [#allocation10], 1792
    %v1705 = vld [vmem:[%s1704] sm:$0xff]
    %v1706 = vld [vmem:[%s1704 + $0x8] sm:$0xff]
    %v1707 = vld [vmem:[%s1704 + $0x10] sm:$0xff]
    %v1708 = vld [vmem:[%s1704 + $0x18] sm:$0xff]
    %v1709 = vld [vmem:[%s1704 + $0x20] sm:$0xff]
    %v1710 = vld [vmem:[%s1704 + $0x28] sm:$0xff]
    %v1711 = vld [vmem:[%s1704 + $0x30] sm:$0xff]
    %v1712 = vld [vmem:[%s1704 + $0x38] sm:$0xff]
    %v1713 = vld [vmem:[%s1704 + $0x40] sm:$0xff]
    %v1714 = vld [vmem:[%s1704 + $0x48] sm:$0xff]
    %v1715 = vld [vmem:[%s1704 + $0x50] sm:$0xff]
    %v1716 = vld [vmem:[%s1704 + $0x58] sm:$0xff]
    %v1717 = vld [vmem:[%s1704 + $0x60] sm:$0xff]
    %v1718 = vld [vmem:[%s1704 + $0x68] sm:$0xff]
    %v1719 = vld [vmem:[%s1704 + $0x70] sm:$0xff]
    %v1720 = vld [vmem:[%s1704 + $0x78] sm:$0xff]
    %v1721 = vld [vmem:[%s1704 + $0x80] sm:$0xff]
    %v1722 = vld [vmem:[%s1704 + $0x88] sm:$0xff]
    %v1723 = vld [vmem:[%s1704 + $0x90] sm:$0xff]
    %v1724 = vld [vmem:[%s1704 + $0x98] sm:$0xff]
    %v1725 = vld [vmem:[%s1704 + $0xa0] sm:$0xff]
    %v1726 = vld [vmem:[%s1704 + $0xa8] sm:$0xff]
    %v1727 = vld [vmem:[%s1704 + $0xb0] sm:$0xff]
    %v1728 = vld [vmem:[%s1704 + $0xb8] sm:$0xff]
    %v1729 = vld [vmem:[%s1704 + $0xc0] sm:$0xff]
    %v1730 = vld [vmem:[%s1704 + $0xc8] sm:$0xff]
    %v1731 = vld [vmem:[%s1704 + $0xd0] sm:$0xff]
    %v1732 = vld [vmem:[%s1704 + $0xd8] sm:$0xff]
    %v1733 = vld [vmem:[%s1704 + $0xe0] sm:$0xff]
    %v1734 = vld [vmem:[%s1704 + $0xe8] sm:$0xff]
    %v1735 = vld [vmem:[%s1704 + $0xf0] sm:$0xff]
    %v1736 = vld [vmem:[%s1704 + $0xf8] sm:$0xff]
    %v1737 = vpack.c.bf16 %v476, %v476
    %s1738 = scalar_lea.vmem [#allocation13], 6
    %v1739 = vld [vmem:[%s1738] ss:$8 sm:$0xf]
    %v1772 = vunpack.c.l.b16 %v1705
    %v1773 = vunpack.c.h.b16 %v1705
    %v1774 = vunpack.c.l.b16 %v1706
    %v1775 = vunpack.c.h.b16 %v1706
    %v1776 = vunpack.c.l.b16 %v1707
    %v1777 = vunpack.c.h.b16 %v1707
    %v1778 = vunpack.c.l.b16 %v1708
    %v1779 = vunpack.c.h.b16 %v1708
    %v1780 = vunpack.c.l.b16 %v1709
    %v1781 = vunpack.c.h.b16 %v1709
    %v1782 = vunpack.c.l.b16 %v1710
    %v1783 = vunpack.c.h.b16 %v1710
    %v1784 = vunpack.c.l.b16 %v1711
    %v1785 = vunpack.c.h.b16 %v1711
    %v1786 = vunpack.c.l.b16 %v1712
    %v1787 = vunpack.c.h.b16 %v1712
    %v1788 = vunpack.c.l.b16 %v1713
    %v1789 = vunpack.c.h.b16 %v1713
    %v1790 = vunpack.c.l.b16 %v1714
    %v1791 = vunpack.c.h.b16 %v1714
    %v1792 = vunpack.c.l.b16 %v1715
    %v1793 = vunpack.c.h.b16 %v1715
    %v1794 = vunpack.c.l.b16 %v1716
    %v1795 = vunpack.c.h.b16 %v1716
    %v1796 = vunpack.c.l.b16 %v1717
    %v1797 = vunpack.c.h.b16 %v1717
    %v1798 = vunpack.c.l.b16 %v1718
    %v1799 = vunpack.c.h.b16 %v1718
    %v1800 = vunpack.c.l.b16 %v1719
    %v1801 = vunpack.c.h.b16 %v1719
    %v1802 = vunpack.c.l.b16 %v1720
    %v1803 = vunpack.c.h.b16 %v1720
    %v1804 = vunpack.c.l.b16 %v1721
    %v1805 = vunpack.c.h.b16 %v1721
    %v1806 = vunpack.c.l.b16 %v1722
    %v1807 = vunpack.c.h.b16 %v1722
    %v1808 = vunpack.c.l.b16 %v1723
    %v1809 = vunpack.c.h.b16 %v1723
    %v1810 = vunpack.c.l.b16 %v1724
    %v1811 = vunpack.c.h.b16 %v1724
    %v1812 = vunpack.c.l.b16 %v1725
    %v1813 = vunpack.c.h.b16 %v1725
    %v1814 = vunpack.c.l.b16 %v1726
    %v1815 = vunpack.c.h.b16 %v1726
    %v1816 = vunpack.c.l.b16 %v1727
    %v1817 = vunpack.c.h.b16 %v1727
    %v1818 = vunpack.c.l.b16 %v1728
    %v1819 = vunpack.c.h.b16 %v1728
    %v1820 = vunpack.c.l.b16 %v1729
    %v1821 = vunpack.c.h.b16 %v1729
    %v1822 = vunpack.c.l.b16 %v1730
    %v1823 = vunpack.c.h.b16 %v1730
    %v1824 = vunpack.c.l.b16 %v1731
    %v1825 = vunpack.c.h.b16 %v1731
    %v1826 = vunpack.c.l.b16 %v1732
    %v1827 = vunpack.c.h.b16 %v1732
    %v1828 = vunpack.c.l.b16 %v1733
    %v1829 = vunpack.c.h.b16 %v1733
    %v1830 = vunpack.c.l.b16 %v1734
    %v1831 = vunpack.c.h.b16 %v1734
    %v1832 = vunpack.c.l.b16 %v1735
    %v1833 = vunpack.c.h.b16 %v1735
    %v1834 = vunpack.c.l.b16 %v1736
    %v1835 = vunpack.c.h.b16 %v1736
    %v1836 = vpack.c.b16 %v1776, %v1772
    %v1837 = vpack.c.b16 %v1777, %v1773
    %v1838 = vpack.c.b16 %v1778, %v1774
    %v1839 = vpack.c.b16 %v1779, %v1775
    %v1840 = vpack.c.b16 %v1784, %v1780
    %v1841 = vpack.c.b16 %v1785, %v1781
    %v1842 = vpack.c.b16 %v1786, %v1782
    %v1843 = vpack.c.b16 %v1787, %v1783
    %v1844 = vpack.c.b16 %v1792, %v1788
    %v1845 = vpack.c.b16 %v1793, %v1789
    %v1846 = vpack.c.b16 %v1794, %v1790
    %v1847 = vpack.c.b16 %v1795, %v1791
    %v1848 = vpack.c.b16 %v1800, %v1796
    %v1849 = vpack.c.b16 %v1801, %v1797
    %v1850 = vpack.c.b16 %v1802, %v1798
    %v1851 = vpack.c.b16 %v1803, %v1799
    %v1852 = vpack.c.b16 %v1808, %v1804
    %v1853 = vpack.c.b16 %v1809, %v1805
    %v1854 = vpack.c.b16 %v1810, %v1806
    %v1855 = vpack.c.b16 %v1811, %v1807
    %v1856 = vpack.c.b16 %v1816, %v1812
    %v1857 = vpack.c.b16 %v1817, %v1813
    %v1858 = vpack.c.b16 %v1818, %v1814
    %v1859 = vpack.c.b16 %v1819, %v1815
    %v1860 = vpack.c.b16 %v1824, %v1820
    %v1861 = vpack.c.b16 %v1825, %v1821
    %v1862 = vpack.c.b16 %v1826, %v1822
    %v1863 = vpack.c.b16 %v1827, %v1823
    %v1864 = vpack.c.b16 %v1832, %v1828
    %v1865 = vpack.c.b16 %v1833, %v1829
    %v1866 = vpack.c.b16 %v1834, %v1830
    %v1867 = vpack.c.b16 %v1835, %v1831
    %v1901 = vlaneseq
    %v1902 = vshrl.u32 %v1901, 7
    %v1903 = vsub.s32 0, %v1902
    %v1904 = vrot.slane %v1739, %v1903
    %v1905 = vlaneseq
    %v1906 = vshrl.u32 %v1905, 7
    %v1907 = vsub.s32 1, %v1906
    %v1908 = vrot.slane %v1739, %v1907
    %v1909 = vlaneseq
    %v1910 = vshrl.u32 %v1909, 7
    %v1911 = vsub.s32 2, %v1910
    %v1912 = vrot.slane %v1739, %v1911
    %v1913 = vlaneseq
    %v1914 = vshrl.u32 %v1913, 7
    %v1915 = vsub.s32 3, %v1914
    %v1916 = vrot.slane %v1739, %v1915
    %1921 = vmatprep.subr.bf16.mxu0 %v1837
    %1922 = vmatpush1.bf16.msra.mxu0 %v1836
    %1923 = vmatprep.subr.bf16.mxu0 %v1841
    %1924 = vmatpush1.bf16.msra.mxu0 %v1840
    %1925 = vmatprep.subr.bf16.mxu0 %v1845
    %1926 = vmatpush1.bf16.msra.mxu0 %v1844
    %1927 = vmatprep.subr.bf16.mxu0 %v1849
    %1928 = vmatpush1.bf16.msra.mxu0 %v1848
    %1929 = vmatprep.subr.bf16.mxu0 %v1853
    %1930 = vmatpush1.bf16.msra.mxu0 %v1852
    %1931 = vmatprep.subr.bf16.mxu0 %v1857
    %1932 = vmatpush1.bf16.msra.mxu0 %v1856
    %1933 = vmatprep.subr.bf16.mxu0 %v1861
    %1934 = vmatpush1.bf16.msra.mxu0 %v1860
    %1935 = vmatprep.subr.bf16.mxu0 %v1865
    %1936 = vmatpush1.bf16.msra.mxu0 %v1864
    %1937 = vmatprep.subr.bf16.mxu0 0
    %1938 = vmatpush1.bf16.msra.mxu0 0
    %1939 = vmatprep.subr.bf16.mxu0 0
    %1940 = vmatpush1.bf16.msra.mxu0 0
    %1941 = vmatprep.subr.bf16.mxu0 0
    %1942 = vmatpush1.bf16.msra.mxu0 0
    %1943 = vmatprep.subr.bf16.mxu0 0
    %1944 = vmatpush1.bf16.msra.mxu0 0
    %1945 = vmatprep.subr.bf16.mxu0 0
    %1946 = vmatpush1.bf16.msra.mxu0 0
    %1947 = vmatprep.subr.bf16.mxu0 0
    %1948 = vmatpush1.bf16.msra.mxu0 0
    %1949 = vmatprep.subr.bf16.mxu0 0
    %1950 = vmatpush1.bf16.msra.mxu0 0
    %1951 = vmatprep.subr.bf16.mxu0 0
    %1952 = vmatpush1.bf16.msra.mxu0 0
    %1953 = vmatprep.mubr.bf16.mxu0 0
    %1954 = vmatmul.mubr.bf16.gmra.mrb[0].mxu0 %v1737
    %v1955 = vpop.f32.mrb[0].mxu0
    %v1956 = vadd.f32 %v1904, %v1955
    %v1957 = vpop.f32.mrb[0].mxu0
    %v1958 = vadd.f32 %v1908, %v1957
    %v1959 = vpop.f32.mrb[0].mxu0
    %v1960 = vpop.f32.mrb[0].mxu0
    %1961 = vdwg.mxu0
    %1962 = vmatprep.subr.bf16.mxu0 %v1839
    %1963 = vmatpush1.bf16.msra.mxu0 %v1838
    %1964 = vmatprep.subr.bf16.mxu0 %v1843
    %1965 = vmatpush1.bf16.msra.mxu0 %v1842
    %1966 = vmatprep.subr.bf16.mxu0 %v1847
    %1967 = vmatpush1.bf16.msra.mxu0 %v1846
    %1968 = vmatprep.subr.bf16.mxu0 %v1851
    %1969 = vmatpush1.bf16.msra.mxu0 %v1850
    %1970 = vmatprep.subr.bf16.mxu0 %v1855
    %1971 = vmatpush1.bf16.msra.mxu0 %v1854
    %1972 = vmatprep.subr.bf16.mxu0 %v1859
    %1973 = vmatpush1.bf16.msra.mxu0 %v1858
    %1974 = vmatprep.subr.bf16.mxu0 %v1863
    %1975 = vmatpush1.bf16.msra.mxu0 %v1862
    %1976 = vmatprep.subr.bf16.mxu0 %v1867
    %1977 = vmatpush1.bf16.msra.mxu0 %v1866
    %1978 = vmatprep.subr.bf16.mxu0 0
    %1979 = vmatpush1.bf16.msra.mxu0 0
    %1980 = vmatprep.subr.bf16.mxu0 0
    %1981 = vmatpush1.bf16.msra.mxu0 0
    %1982 = vmatprep.subr.bf16.mxu0 0
    %1983 = vmatpush1.bf16.msra.mxu0 0
    %1984 = vmatprep.subr.bf16.mxu0 0
    %1985 = vmatpush1.bf16.msra.mxu0 0
    %1986 = vmatprep.subr.bf16.mxu0 0
    %1987 = vmatpush1.bf16.msra.mxu0 0
    %1988 = vmatprep.subr.bf16.mxu0 0
    %1989 = vmatpush1.bf16.msra.mxu0 0
    %1990 = vmatprep.subr.bf16.mxu0 0
    %1991 = vmatpush1.bf16.msra.mxu0 0
    %1992 = vmatprep.subr.bf16.mxu0 0
    %1993 = vmatpush1.bf16.msra.mxu0 0
    %1994 = vmatprep.mubr.bf16.mxu0 0
    %1995 = vmatmul.mubr.bf16.gmra.mrb[0].mxu0 %v1737
    %v1996 = vpop.f32.mrb[0].mxu0
    %v1997 = vadd.f32 %v1912, %v1996
    %v1998 = vpop.f32.mrb[0].mxu0
    %v1999 = vadd.f32 %v1916, %v1998
    %v2000 = vpop.f32.mrb[0].mxu0
    %v2001 = vpop.f32.mrb[0].mxu0
    %2002 = vdwg.mxu0
    %s2003 = scalar_lea.vmem [#allocation10], 2048
    %v2004 = vld [vmem:[%s2003] sm:$0xff]
    %v2005 = vld [vmem:[%s2003 + $0x8] sm:$0xff]
    %v2006 = vld [vmem:[%s2003 + $0x10] sm:$0xff]
    %v2007 = vld [vmem:[%s2003 + $0x18] sm:$0xff]
    %v2008 = vld [vmem:[%s2003 + $0x20] sm:$0xff]
    %v2009 = vld [vmem:[%s2003 + $0x28] sm:$0xff]
    %v2010 = vld [vmem:[%s2003 + $0x30] sm:$0xff]
    %v2011 = vld [vmem:[%s2003 + $0x38] sm:$0xff]
    %v2012 = vld [vmem:[%s2003 + $0x40] sm:$0xff]
    %v2013 = vld [vmem:[%s2003 + $0x48] sm:$0xff]
    %v2014 = vld [vmem:[%s2003 + $0x50] sm:$0xff]
    %v2015 = vld [vmem:[%s2003 + $0x58] sm:$0xff]
    %v2016 = vld [vmem:[%s2003 + $0x60] sm:$0xff]
    %v2017 = vld [vmem:[%s2003 + $0x68] sm:$0xff]
    %v2018 = vld [vmem:[%s2003 + $0x70] sm:$0xff]
    %v2019 = vld [vmem:[%s2003 + $0x78] sm:$0xff]
    %v2020 = vld [vmem:[%s2003 + $0x80] sm:$0xff]
    %v2021 = vld [vmem:[%s2003 + $0x88] sm:$0xff]
    %v2022 = vld [vmem:[%s2003 + $0x90] sm:$0xff]
    %v2023 = vld [vmem:[%s2003 + $0x98] sm:$0xff]
    %v2024 = vld [vmem:[%s2003 + $0xa0] sm:$0xff]
    %v2025 = vld [vmem:[%s2003 + $0xa8] sm:$0xff]
    %v2026 = vld [vmem:[%s2003 + $0xb0] sm:$0xff]
    %v2027 = vld [vmem:[%s2003 + $0xb8] sm:$0xff]
    %v2028 = vld [vmem:[%s2003 + $0xc0] sm:$0xff]
    %v2029 = vld [vmem:[%s2003 + $0xc8] sm:$0xff]
    %v2030 = vld [vmem:[%s2003 + $0xd0] sm:$0xff]
    %v2031 = vld [vmem:[%s2003 + $0xd8] sm:$0xff]
    %v2032 = vld [vmem:[%s2003 + $0xe0] sm:$0xff]
    %v2033 = vld [vmem:[%s2003 + $0xe8] sm:$0xff]
    %v2034 = vld [vmem:[%s2003 + $0xf0] sm:$0xff]
    %v2035 = vld [vmem:[%s2003 + $0xf8] sm:$0xff]
    %v2036 = vpack.c.bf16 %v515, %v515
    %s2037 = scalar_lea.vmem [#allocation13], 7
    %v2038 = vld [vmem:[%s2037] ss:$8 sm:$0xf]
    %v2071 = vunpack.c.l.b16 %v2004
    %v2072 = vunpack.c.h.b16 %v2004
    %v2073 = vunpack.c.l.b16 %v2005
    %v2074 = vunpack.c.h.b16 %v2005
    %v2075 = vunpack.c.l.b16 %v2006
    %v2076 = vunpack.c.h.b16 %v2006
    %v2077 = vunpack.c.l.b16 %v2007
    %v2078 = vunpack.c.h.b16 %v2007
    %v2079 = vunpack.c.l.b16 %v2008
    %v2080 = vunpack.c.h.b16 %v2008
    %v2081 = vunpack.c.l.b16 %v2009
    %v2082 = vunpack.c.h.b16 %v2009
    %v2083 = vunpack.c.l.b16 %v2010
    %v2084 = vunpack.c.h.b16 %v2010
    %v2085 = vunpack.c.l.b16 %v2011
    %v2086 = vunpack.c.h.b16 %v2011
    %v2087 = vunpack.c.l.b16 %v2012
    %v2088 = vunpack.c.h.b16 %v2012
    %v2089 = vunpack.c.l.b16 %v2013
    %v2090 = vunpack.c.h.b16 %v2013
    %v2091 = vunpack.c.l.b16 %v2014
    %v2092 = vunpack.c.h.b16 %v2014
    %v2093 = vunpack.c.l.b16 %v2015
    %v2094 = vunpack.c.h.b16 %v2015
    %v2095 = vunpack.c.l.b16 %v2016
    %v2096 = vunpack.c.h.b16 %v2016
    %v2097 = vunpack.c.l.b16 %v2017
    %v2098 = vunpack.c.h.b16 %v2017
    %v2099 = vunpack.c.l.b16 %v2018
    %v2100 = vunpack.c.h.b16 %v2018
    %v2101 = vunpack.c.l.b16 %v2019
    %v2102 = vunpack.c.h.b16 %v2019
    %v2103 = vunpack.c.l.b16 %v2020
    %v2104 = vunpack.c.h.b16 %v2020
    %v2105 = vunpack.c.l.b16 %v2021
    %v2106 = vunpack.c.h.b16 %v2021
    %v2107 = vunpack.c.l.b16 %v2022
    %v2108 = vunpack.c.h.b16 %v2022
    %v2109 = vunpack.c.l.b16 %v2023
    %v2110 = vunpack.c.h.b16 %v2023
    %v2111 = vunpack.c.l.b16 %v2024
    %v2112 = vunpack.c.h.b16 %v2024
    %v2113 = vunpack.c.l.b16 %v2025
    %v2114 = vunpack.c.h.b16 %v2025
    %v2115 = vunpack.c.l.b16 %v2026
    %v2116 = vunpack.c.h.b16 %v2026
    %v2117 = vunpack.c.l.b16 %v2027
    %v2118 = vunpack.c.h.b16 %v2027
    %v2119 = vunpack.c.l.b16 %v2028
    %v2120 = vunpack.c.h.b16 %v2028
    %v2121 = vunpack.c.l.b16 %v2029
    %v2122 = vunpack.c.h.b16 %v2029
    %v2123 = vunpack.c.l.b16 %v2030
    %v2124 = vunpack.c.h.b16 %v2030
    %v2125 = vunpack.c.l.b16 %v2031
    %v2126 = vunpack.c.h.b16 %v2031
    %v2127 = vunpack.c.l.b16 %v2032
    %v2128 = vunpack.c.h.b16 %v2032
    %v2129 = vunpack.c.l.b16 %v2033
    %v2130 = vunpack.c.h.b16 %v2033
    %v2131 = vunpack.c.l.b16 %v2034
    %v2132 = vunpack.c.h.b16 %v2034
    %v2133 = vunpack.c.l.b16 %v2035
    %v2134 = vunpack.c.h.b16 %v2035
    %v2135 = vpack.c.b16 %v2075, %v2071
    %v2136 = vpack.c.b16 %v2076, %v2072
    %v2137 = vpack.c.b16 %v2077, %v2073
    %v2138 = vpack.c.b16 %v2078, %v2074
    %v2139 = vpack.c.b16 %v2083, %v2079
    %v2140 = vpack.c.b16 %v2084, %v2080
    %v2141 = vpack.c.b16 %v2085, %v2081
    %v2142 = vpack.c.b16 %v2086, %v2082
    %v2143 = vpack.c.b16 %v2091, %v2087
    %v2144 = vpack.c.b16 %v2092, %v2088
    %v2145 = vpack.c.b16 %v2093, %v2089
    %v2146 = vpack.c.b16 %v2094, %v2090
    %v2147 = vpack.c.b16 %v2099, %v2095
    %v2148 = vpack.c.b16 %v2100, %v2096
    %v2149 = vpack.c.b16 %v2101, %v2097
    %v2150 = vpack.c.b16 %v2102, %v2098
    %v2151 = vpack.c.b16 %v2107, %v2103
    %v2152 = vpack.c.b16 %v2108, %v2104
    %v2153 = vpack.c.b16 %v2109, %v2105
    %v2154 = vpack.c.b16 %v2110, %v2106
    %v2155 = vpack.c.b16 %v2115, %v2111
    %v2156 = vpack.c.b16 %v2116, %v2112
    %v2157 = vpack.c.b16 %v2117, %v2113
    %v2158 = vpack.c.b16 %v2118, %v2114
    %v2159 = vpack.c.b16 %v2123, %v2119
    %v2160 = vpack.c.b16 %v2124, %v2120
    %v2161 = vpack.c.b16 %v2125, %v2121
    %v2162 = vpack.c.b16 %v2126, %v2122
    %v2163 = vpack.c.b16 %v2131, %v2127
    %v2164 = vpack.c.b16 %v2132, %v2128
    %v2165 = vpack.c.b16 %v2133, %v2129
    %v2166 = vpack.c.b16 %v2134, %v2130
    %v2200 = vlaneseq
    %v2201 = vshrl.u32 %v2200, 7
    %v2202 = vsub.s32 0, %v2201
    %v2203 = vrot.slane %v2038, %v2202
    %v2204 = vlaneseq
    %v2205 = vshrl.u32 %v2204, 7
    %v2206 = vsub.s32 1, %v2205
    %v2207 = vrot.slane %v2038, %v2206
    %v2208 = vlaneseq
    %v2209 = vshrl.u32 %v2208, 7
    %v2210 = vsub.s32 2, %v2209
    %v2211 = vrot.slane %v2038, %v2210
    %v2212 = vlaneseq
    %v2213 = vshrl.u32 %v2212, 7
    %v2214 = vsub.s32 3, %v2213
    %v2215 = vrot.slane %v2038, %v2214
    %2220 = vmatprep.subr.bf16.mxu0 %v2136
    %2221 = vmatpush1.bf16.msra.mxu0 %v2135
    %2222 = vmatprep.subr.bf16.mxu0 %v2140
    %2223 = vmatpush1.bf16.msra.mxu0 %v2139
    %2224 = vmatprep.subr.bf16.mxu0 %v2144
    %2225 = vmatpush1.bf16.msra.mxu0 %v2143
    %2226 = vmatprep.subr.bf16.mxu0 %v2148
    %2227 = vmatpush1.bf16.msra.mxu0 %v2147
    %2228 = vmatprep.subr.bf16.mxu0 %v2152
    %2229 = vmatpush1.bf16.msra.mxu0 %v2151
    %2230 = vmatprep.subr.bf16.mxu0 %v2156
    %2231 = vmatpush1.bf16.msra.mxu0 %v2155
    %2232 = vmatprep.subr.bf16.mxu0 %v2160
    %2233 = vmatpush1.bf16.msra.mxu0 %v2159
    %2234 = vmatprep.subr.bf16.mxu0 %v2164
    %2235 = vmatpush1.bf16.msra.mxu0 %v2163
    %2236 = vmatprep.subr.bf16.mxu0 0
    %2237 = vmatpush1.bf16.msra.mxu0 0
    %2238 = vmatprep.subr.bf16.mxu0 0
    %2239 = vmatpush1.bf16.msra.mxu0 0
    %2240 = vmatprep.subr.bf16.mxu0 0
    %2241 = vmatpush1.bf16.msra.mxu0 0
    %2242 = vmatprep.subr.bf16.mxu0 0
    %2243 = vmatpush1.bf16.msra.mxu0 0
    %2244 = vmatprep.subr.bf16.mxu0 0
    %2245 = vmatpush1.bf16.msra.mxu0 0
    %2246 = vmatprep.subr.bf16.mxu0 0
    %2247 = vmatpush1.bf16.msra.mxu0 0
    %2248 = vmatprep.subr.bf16.mxu0 0
    %2249 = vmatpush1.bf16.msra.mxu0 0
    %2250 = vmatprep.subr.bf16.mxu0 0
    %2251 = vmatpush1.bf16.msra.mxu0 0
    %2252 = vmatprep.mubr.bf16.mxu0 0
    %2253 = vmatmul.mubr.bf16.gmra.mrb[0].mxu0 %v2036
    %v2254 = vpop.f32.mrb[0].mxu0
    %v2255 = vadd.f32 %v2203, %v2254
    %v2256 = vpop.f32.mrb[0].mxu0
    %v2257 = vadd.f32 %v2207, %v2256
    %v2258 = vpop.f32.mrb[0].mxu0
    %v2259 = vpop.f32.mrb[0].mxu0
    %2260 = vdwg.mxu0
    %2261 = vmatprep.subr.bf16.mxu0 %v2138
    %2262 = vmatpush1.bf16.msra.mxu0 %v2137
    %2263 = vmatprep.subr.bf16.mxu0 %v2142
    %2264 = vmatpush1.bf16.msra.mxu0 %v2141
    %2265 = vmatprep.subr.bf16.mxu0 %v2146
    %2266 = vmatpush1.bf16.msra.mxu0 %v2145
    %2267 = vmatprep.subr.bf16.mxu0 %v2150
    %2268 = vmatpush1.bf16.msra.mxu0 %v2149
    %2269 = vmatprep.subr.bf16.mxu0 %v2154
    %2270 = vmatpush1.bf16.msra.mxu0 %v2153
    %2271 = vmatprep.subr.bf16.mxu0 %v2158
    %2272 = vmatpush1.bf16.msra.mxu0 %v2157
    %2273 = vmatprep.subr.bf16.mxu0 %v2162
    %2274 = vmatpush1.bf16.msra.mxu0 %v2161
    %2275 = vmatprep.subr.bf16.mxu0 %v2166
    %2276 = vmatpush1.bf16.msra.mxu0 %v2165
    %2277 = vmatprep.subr.bf16.mxu0 0
    %2278 = vmatpush1.bf16.msra.mxu0 0
    %2279 = vmatprep.subr.bf16.mxu0 0
    %2280 = vmatpush1.bf16.msra.mxu0 0
    %2281 = vmatprep.subr.bf16.mxu0 0
    %2282 = vmatpush1.bf16.msra.mxu0 0
    %2283 = vmatprep.subr.bf16.mxu0 0
    %2284 = vmatpush1.bf16.msra.mxu0 0
    %2285 = vmatprep.subr.bf16.mxu0 0
    %2286 = vmatpush1.bf16.msra.mxu0 0
    %2287 = vmatprep.subr.bf16.mxu0 0
    %2288 = vmatpush1.bf16.msra.mxu0 0
    %2289 = vmatprep.subr.bf16.mxu0 0
    %2290 = vmatpush1.bf16.msra.mxu0 0
    %2291 = vmatprep.subr.bf16.mxu0 0
    %2292 = vmatpush1.bf16.msra.mxu0 0
    %2293 = vmatprep.mubr.bf16.mxu0 0
    %2294 = vmatmul.mubr.bf16.gmra.mrb[0].mxu0 %v2036
    %v2295 = vpop.f32.mrb[0].mxu0
    %v2296 = vadd.f32 %v2211, %v2295
    %v2297 = vpop.f32.mrb[0].mxu0
    %v2298 = vadd.f32 %v2215, %v2297
    %v2299 = vpop.f32.mrb[0].mxu0
    %v2300 = vpop.f32.mrb[0].mxu0
    %2301 = vdwg.mxu0
    %v2302 = vld [vmem:[#allocation7 + $0x4] sm:$0xff]
    %v2303 = vld [vmem:[#allocation7 + $0xc] sm:$0xff]
    %v2306 = vcombine.high %v2302, %v2302
    %v2307 = vcombine.high %v2303, %v2303
    %v2308 = vsel %vm160, %v2302, 0
    %v2310 = vsel %vm160, %v2306, 0
    %v2312 = vsel %vm160, %v2303, 0
    %v2314 = vsel %vm160, %v2307, 0
    %2316 = vmatprep.subr.mxu0 %v2310
    %2317 = vmatpush1.msra.mxu0 %v2308
    %2318 = vmatprep.subr.mxu0 0.0
    %2319 = vmatpush1.msra.mxu0 0.0
    %2320 = vmatprep.subr.mxu0 0.0
    %2321 = vmatpush1.msra.mxu0 0.0
    %2322 = vmatprep.subr.mxu0 0.0
    %2323 = vmatpush1.msra.mxu0 0.0
    %2324 = vmatprep.subr.mxu0 0.0
    %2325 = vmatpush1.msra.mxu0 0.0
    %2326 = vmatprep.subr.mxu0 0.0
    %2327 = vmatpush1.msra.mxu0 0.0
    %2328 = vmatprep.subr.mxu0 0.0
    %2329 = vmatpush1.msra.mxu0 0.0
    %2330 = vmatprep.subr.mxu0 0.0
    %2331 = vmatpush1.msra.mxu0 0.0
    %2332 = vmatprep.subr.mxu0 0.0
    %2333 = vmatpush1.msra.mxu0 0.0
    %2334 = vmatprep.subr.mxu0 0.0
    %2335 = vmatpush1.msra.mxu0 0.0
    %2336 = vmatprep.subr.mxu0 0.0
    %2337 = vmatpush1.msra.mxu0 0.0
    %2338 = vmatprep.subr.mxu0 0.0
    %2339 = vmatpush1.msra.mxu0 0.0
    %2340 = vmatprep.subr.mxu0 0.0
    %2341 = vmatpush1.msra.mxu0 0.0
    %2342 = vmatprep.subr.mxu0 0.0
    %2343 = vmatpush1.msra.mxu0 0.0
    %2344 = vmatprep.subr.mxu0 0.0
    %2345 = vmatpush1.msra.mxu0 0.0
    %2346 = vmatprep.subr.mxu0 0.0
    %2347 = vmatpush1.msra.mxu0 0.0
    %2348 = vmatprep.subr.mxu0 0.0
    %2349 = vmatpush1.msra.mxu0 0.0
    %2350 = vmatprep.subr.mxu0 0.0
    %2351 = vmatpush1.msra.mxu0 0.0
    %2352 = vmatprep.subr.mxu0 0.0
    %2353 = vmatpush1.msra.mxu0 0.0
    %2354 = vmatprep.subr.mxu0 0.0
    %2355 = vmatpush1.msra.mxu0 0.0
    %2356 = vmatprep.subr.mxu0 0.0
    %2357 = vmatpush1.msra.mxu0 0.0
    %2358 = vmatprep.subr.mxu0 0.0
    %2359 = vmatpush1.msra.mxu0 0.0
    %2360 = vmatprep.subr.mxu0 0.0
    %2361 = vmatpush1.msra.mxu0 0.0
    %2362 = vmatprep.subr.mxu0 0.0
    %2363 = vmatpush1.msra.mxu0 0.0
    %2364 = vmatprep.subr.mxu0 0.0
    %2365 = vmatpush1.msra.mxu0 0.0
    %2366 = vmatprep.subr.mxu0 0.0
    %2367 = vmatpush1.msra.mxu0 0.0
    %2368 = vmatprep.subr.mxu0 0.0
    %2369 = vmatpush1.msra.mxu0 0.0
    %2370 = vmatprep.subr.mxu0 0.0
    %2371 = vmatpush1.msra.mxu0 0.0
    %2372 = vmatprep.subr.mxu0 0.0
    %2373 = vmatpush1.msra.mxu0 0.0
    %2374 = vmatprep.subr.mxu0 0.0
    %2375 = vmatpush1.msra.mxu0 0.0
    %2376 = vmatprep.subr.mxu0 0.0
    %2377 = vmatpush1.msra.mxu0 0.0
    %2378 = vmatprep.subr.mxu0 0.0
    %2379 = vmatpush1.msra.mxu0 0.0
    %2380 = vmatprep.mubr.f32.mxu0 0.0
    %2381 = vmatmul.mubr.f32.gmra.mrb[0].mxu0 %v158
    %v2382 = vpop.f32.mrb[0].mxu0
    %v2383 = vadd.f32 %v1059, %v2382
    %v2384 = vpop.f32.mrb[0].mxu0
    %v2385 = vadd.f32 %v1061, %v2384
    %2386 = vdwg.mxu0
    %2387 = vmatprep.subr.mxu0 %v2314
    %2388 = vmatpush1.msra.mxu0 %v2312
    %2389 = vmatprep.subr.mxu0 0.0
    %2390 = vmatpush1.msra.mxu0 0.0
    %2391 = vmatprep.subr.mxu0 0.0
    %2392 = vmatpush1.msra.mxu0 0.0
    %2393 = vmatprep.subr.mxu0 0.0
    %2394 = vmatpush1.msra.mxu0 0.0
    %2395 = vmatprep.subr.mxu0 0.0
    %2396 = vmatpush1.msra.mxu0 0.0
    %2397 = vmatprep.subr.mxu0 0.0
    %2398 = vmatpush1.msra.mxu0 0.0
    %2399 = vmatprep.subr.mxu0 0.0
    %2400 = vmatpush1.msra.mxu0 0.0
    %2401 = vmatprep.subr.mxu0 0.0
    %2402 = vmatpush1.msra.mxu0 0.0
    %2403 = vmatprep.subr.mxu0 0.0
    %2404 = vmatpush1.msra.mxu0 0.0
    %2405 = vmatprep.subr.mxu0 0.0
    %2406 = vmatpush1.msra.mxu0 0.0
    %2407 = vmatprep.subr.mxu0 0.0
    %2408 = vmatpush1.msra.mxu0 0.0
    %2409 = vmatprep.subr.mxu0 0.0
    %2410 = vmatpush1.msra.mxu0 0.0
    %2411 = vmatprep.subr.mxu0 0.0
    %2412 = vmatpush1.msra.mxu0 0.0
    %2413 = vmatprep.subr.mxu0 0.0
    %2414 = vmatpush1.msra.mxu0 0.0
    %2415 = vmatprep.subr.mxu0 0.0
    %2416 = vmatpush1.msra.mxu0 0.0
    %2417 = vmatprep.subr.mxu0 0.0
    %2418 = vmatpush1.msra.mxu0 0.0
    %2419 = vmatprep.subr.mxu0 0.0
    %2420 = vmatpush1.msra.mxu0 0.0
    %2421 = vmatprep.subr.mxu0 0.0
    %2422 = vmatpush1.msra.mxu0 0.0
    %2423 = vmatprep.subr.mxu0 0.0
    %2424 = vmatpush1.msra.mxu0 0.0
    %2425 = vmatprep.subr.mxu0 0.0
    %2426 = vmatpush1.msra.mxu0 0.0
    %2427 = vmatprep.subr.mxu0 0.0
    %2428 = vmatpush1.msra.mxu0 0.0
    %2429 = vmatprep.subr.mxu0 0.0
    %2430 = vmatpush1.msra.mxu0 0.0
    %2431 = vmatprep.subr.mxu0 0.0
    %2432 = vmatpush1.msra.mxu0 0.0
    %2433 = vmatprep.subr.mxu0 0.0
    %2434 = vmatpush1.msra.mxu0 0.0
    %2435 = vmatprep.subr.mxu0 0.0
    %2436 = vmatpush1.msra.mxu0 0.0
    %2437 = vmatprep.subr.mxu0 0.0
    %2438 = vmatpush1.msra.mxu0 0.0
    %2439 = vmatprep.subr.mxu0 0.0
    %2440 = vmatpush1.msra.mxu0 0.0
    %2441 = vmatprep.subr.mxu0 0.0
    %2442 = vmatpush1.msra.mxu0 0.0
    %2443 = vmatprep.subr.mxu0 0.0
    %2444 = vmatpush1.msra.mxu0 0.0
    %2445 = vmatprep.subr.mxu0 0.0
    %2446 = vmatpush1.msra.mxu0 0.0
    %2447 = vmatprep.subr.mxu0 0.0
    %2448 = vmatpush1.msra.mxu0 0.0
    %2449 = vmatprep.subr.mxu0 0.0
    %2450 = vmatpush1.msra.mxu0 0.0
    %2451 = vmatprep.mubr.f32.mxu0 0.0
    %2452 = vmatmul.mubr.f32.gmra.mrb[0].mxu0 %v158
    %v2453 = vpop.f32.mrb[0].mxu0
    %v2454 = vadd.f32 %v1100, %v2453
    %v2455 = vpop.f32.mrb[0].mxu0
    %v2456 = vadd.f32 %v1102, %v2455
    %2457 = vdwg.mxu0
    %v2458 = vxor.u32 %v2383, 2147483648
    %v2459 = vxor.u32 %v2385, 2147483648
    %v2460 = vxor.u32 %v2454, 2147483648
    %v2461 = vmul.f32 %v2458, 1.442695
    %v2462 = vpow.pop %v2461
    %v2463 = vmul.f32 %v2459, 1.442695
    %v2464 = vpow.pop %v2463
    %v2465 = vmul.f32 %v2460, 1.442695
    %v2466 = vpow.pop %v2465
    %v2467 = vadd.f32 %v2462, 1.0
    %v2468 = vadd.f32 %v2464, 1.0
    %v2469 = vadd.f32 %v2466, 1.0
    %v2470 = vrcp.pop %v2467
    %v2471 = vmul.f32 1.0, %v2470
    %v2472 = vrcp.pop %v2468
    %v2473 = vmul.f32 1.0, %v2472
    %v2474 = vrcp.pop %v2469
    %v2475 = vmul.f32 1.0, %v2474
    %v2476 = vtanh.pop %v2456
    %v2477 = vmul.f32 %v2473, %v719
    %v2478 = vmul.f32 %v2471, %v2476
    %v2479 = vadd.f32 %v2477, %v2478
    %v2480 = vtanh.pop %v2479
    %v2481 = vmul.f32 %v2475, %v2480
    %v2482 = vld [vmem:[#allocation10] sm:$0xff]
    %v2483 = vld [vmem:[#allocation10 + $0x8] sm:$0xff]
    %v2484 = vld [vmem:[#allocation10 + $0x10] sm:$0xff]
    %v2485 = vld [vmem:[#allocation10 + $0x18] sm:$0xff]
    %v2486 = vld [vmem:[#allocation10 + $0x20] sm:$0xff]
    %v2487 = vld [vmem:[#allocation10 + $0x28] sm:$0xff]
    %v2488 = vld [vmem:[#allocation10 + $0x30] sm:$0xff]
    %v2489 = vld [vmem:[#allocation10 + $0x38] sm:$0xff]
    %v2490 = vld [vmem:[#allocation10 + $0x40] sm:$0xff]
    %v2491 = vld [vmem:[#allocation10 + $0x48] sm:$0xff]
    %v2492 = vld [vmem:[#allocation10 + $0x50] sm:$0xff]
    %v2493 = vld [vmem:[#allocation10 + $0x58] sm:$0xff]
    %v2494 = vld [vmem:[#allocation10 + $0x60] sm:$0xff]
    %v2495 = vld [vmem:[#allocation10 + $0x68] sm:$0xff]
    %v2496 = vld [vmem:[#allocation10 + $0x70] sm:$0xff]
    %v2497 = vld [vmem:[#allocation10 + $0x78] sm:$0xff]
    %v2498 = vld [vmem:[#allocation10 + $0x80] sm:$0xff]
    %v2499 = vld [vmem:[#allocation10 + $0x88] sm:$0xff]
    %v2500 = vld [vmem:[#allocation10 + $0x90] sm:$0xff]
    %v2501 = vld [vmem:[#allocation10 + $0x98] sm:$0xff]
    %v2502 = vld [vmem:[#allocation10 + $0xa0] sm:$0xff]
    %v2503 = vld [vmem:[#allocation10 + $0xa8] sm:$0xff]
    %v2504 = vld [vmem:[#allocation10 + $0xb0] sm:$0xff]
    %v2505 = vld [vmem:[#allocation10 + $0xb8] sm:$0xff]
    %v2506 = vld [vmem:[#allocation10 + $0xc0] sm:$0xff]
    %v2507 = vld [vmem:[#allocation10 + $0xc8] sm:$0xff]
    %v2508 = vld [vmem:[#allocation10 + $0xd0] sm:$0xff]
    %v2509 = vld [vmem:[#allocation10 + $0xd8] sm:$0xff]
    %v2510 = vld [vmem:[#allocation10 + $0xe0] sm:$0xff]
    %v2511 = vld [vmem:[#allocation10 + $0xe8] sm:$0xff]
    %v2512 = vld [vmem:[#allocation10 + $0xf0] sm:$0xff]
    %v2513 = vld [vmem:[#allocation10 + $0xf8] sm:$0xff]
    %v2514 = vpack.c.bf16 %v2481, %v2481
    %v2547 = vunpack.c.l.b16 %v2482
    %v2548 = vunpack.c.h.b16 %v2482
    %v2549 = vunpack.c.l.b16 %v2483
    %v2550 = vunpack.c.h.b16 %v2483
    %v2551 = vunpack.c.l.b16 %v2484
    %v2552 = vunpack.c.h.b16 %v2484
    %v2553 = vunpack.c.l.b16 %v2485
    %v2554 = vunpack.c.h.b16 %v2485
    %v2555 = vunpack.c.l.b16 %v2486
    %v2556 = vunpack.c.h.b16 %v2486
    %v2557 = vunpack.c.l.b16 %v2487
    %v2558 = vunpack.c.h.b16 %v2487
    %v2559 = vunpack.c.l.b16 %v2488
    %v2560 = vunpack.c.h.b16 %v2488
    %v2561 = vunpack.c.l.b16 %v2489
    %v2562 = vunpack.c.h.b16 %v2489
    %v2563 = vunpack.c.l.b16 %v2490
    %v2564 = vunpack.c.h.b16 %v2490
    %v2565 = vunpack.c.l.b16 %v2491
    %v2566 = vunpack.c.h.b16 %v2491
    %v2567 = vunpack.c.l.b16 %v2492
    %v2568 = vunpack.c.h.b16 %v2492
    %v2569 = vunpack.c.l.b16 %v2493
    %v2570 = vunpack.c.h.b16 %v2493
    %v2571 = vunpack.c.l.b16 %v2494
    %v2572 = vunpack.c.h.b16 %v2494
    %v2573 = vunpack.c.l.b16 %v2495
    %v2574 = vunpack.c.h.b16 %v2495
    %v2575 = vunpack.c.l.b16 %v2496
    %v2576 = vunpack.c.h.b16 %v2496
    %v2577 = vunpack.c.l.b16 %v2497
    %v2578 = vunpack.c.h.b16 %v2497
    %v2579 = vunpack.c.l.b16 %v2498
    %v2580 = vunpack.c.h.b16 %v2498
    %v2581 = vunpack.c.l.b16 %v2499
    %v2582 = vunpack.c.h.b16 %v2499
    %v2583 = vunpack.c.l.b16 %v2500
    %v2584 = vunpack.c.h.b16 %v2500
    %v2585 = vunpack.c.l.b16 %v2501
    %v2586 = vunpack.c.h.b16 %v2501
    %v2587 = vunpack.c.l.b16 %v2502
    %v2588 = vunpack.c.h.b16 %v2502
    %v2589 = vunpack.c.l.b16 %v2503
    %v2590 = vunpack.c.h.b16 %v2503
    %v2591 = vunpack.c.l.b16 %v2504
    %v2592 = vunpack.c.h.b16 %v2504
    %v2593 = vunpack.c.l.b16 %v2505
    %v2594 = vunpack.c.h.b16 %v2505
    %v2595 = vunpack.c.l.b16 %v2506
    %v2596 = vunpack.c.h.b16 %v2506
    %v2597 = vunpack.c.l.b16 %v2507
    %v2598 = vunpack.c.h.b16 %v2507
    %v2599 = vunpack.c.l.b16 %v2508
    %v2600 = vunpack.c.h.b16 %v2508
    %v2601 = vunpack.c.l.b16 %v2509
    %v2602 = vunpack.c.h.b16 %v2509
    %v2603 = vunpack.c.l.b16 %v2510
    %v2604 = vunpack.c.h.b16 %v2510
    %v2605 = vunpack.c.l.b16 %v2511
    %v2606 = vunpack.c.h.b16 %v2511
    %v2607 = vunpack.c.l.b16 %v2512
    %v2608 = vunpack.c.h.b16 %v2512
    %v2609 = vunpack.c.l.b16 %v2513
    %v2610 = vunpack.c.h.b16 %v2513
    %v2611 = vpack.c.b16 %v2551, %v2547
    %v2612 = vpack.c.b16 %v2552, %v2548
    %v2613 = vpack.c.b16 %v2553, %v2549
    %v2614 = vpack.c.b16 %v2554, %v2550
    %v2615 = vpack.c.b16 %v2559, %v2555
    %v2616 = vpack.c.b16 %v2560, %v2556
    %v2617 = vpack.c.b16 %v2561, %v2557
    %v2618 = vpack.c.b16 %v2562, %v2558
    %v2619 = vpack.c.b16 %v2567, %v2563
    %v2620 = vpack.c.b16 %v2568, %v2564
    %v2621 = vpack.c.b16 %v2569, %v2565
    %v2622 = vpack.c.b16 %v2570, %v2566
    %v2623 = vpack.c.b16 %v2575, %v2571
    %v2624 = vpack.c.b16 %v2576, %v2572
    %v2625 = vpack.c.b16 %v2577, %v2573
    %v2626 = vpack.c.b16 %v2578, %v2574
    %v2627 = vpack.c.b16 %v2583, %v2579
    %v2628 = vpack.c.b16 %v2584, %v2580
    %v2629 = vpack.c.b16 %v2585, %v2581
    %v2630 = vpack.c.b16 %v2586, %v2582
    %v2631 = vpack.c.b16 %v2591, %v2587
    %v2632 = vpack.c.b16 %v2592, %v2588
    %v2633 = vpack.c.b16 %v2593, %v2589
    %v2634 = vpack.c.b16 %v2594, %v2590
    %v2635 = vpack.c.b16 %v2599, %v2595
    %v2636 = vpack.c.b16 %v2600, %v2596
    %v2637 = vpack.c.b16 %v2601, %v2597
    %v2638 = vpack.c.b16 %v2602, %v2598
    %v2639 = vpack.c.b16 %v2607, %v2603
    %v2640 = vpack.c.b16 %v2608, %v2604
    %v2641 = vpack.c.b16 %v2609, %v2605
    %v2642 = vpack.c.b16 %v2610, %v2606
    %2675 = vmatprep.subr.bf16.mxu0 %v2612
    %2676 = vmatpush1.bf16.msra.mxu0 %v2611
    %2677 = vmatprep.subr.bf16.mxu0 %v2616
    %2678 = vmatpush1.bf16.msra.mxu0 %v2615
    %2679 = vmatprep.subr.bf16.mxu0 %v2620
    %2680 = vmatpush1.bf16.msra.mxu0 %v2619
    %2681 = vmatprep.subr.bf16.mxu0 %v2624
    %2682 = vmatpush1.bf16.msra.mxu0 %v2623
    %2683 = vmatprep.subr.bf16.mxu0 %v2628
    %2684 = vmatpush1.bf16.msra.mxu0 %v2627
    %2685 = vmatprep.subr.bf16.mxu0 %v2632
    %2686 = vmatpush1.bf16.msra.mxu0 %v2631
    %2687 = vmatprep.subr.bf16.mxu0 %v2636
    %2688 = vmatpush1.bf16.msra.mxu0 %v2635
    %2689 = vmatprep.subr.bf16.mxu0 %v2640
    %2690 = vmatpush1.bf16.msra.mxu0 %v2639
    %2691 = vmatprep.subr.bf16.mxu0 0
    %2692 = vmatpush1.bf16.msra.mxu0 0
    %2693 = vmatprep.subr.bf16.mxu0 0
    %2694 = vmatpush1.bf16.msra.mxu0 0
    %2695 = vmatprep.subr.bf16.mxu0 0
    %2696 = vmatpush1.bf16.msra.mxu0 0
    %2697 = vmatprep.subr.bf16.mxu0 0
    %2698 = vmatpush1.bf16.msra.mxu0 0
    %2699 = vmatprep.subr.bf16.mxu0 0
    %2700 = vmatpush1.bf16.msra.mxu0 0
    %2701 = vmatprep.subr.bf16.mxu0 0
    %2702 = vmatpush1.bf16.msra.mxu0 0
    %2703 = vmatprep.subr.bf16.mxu0 0
    %2704 = vmatpush1.bf16.msra.mxu0 0
    %2705 = vmatprep.subr.bf16.mxu0 0
    %2706 = vmatpush1.bf16.msra.mxu0 0
    %2707 = vmatprep.mubr.bf16.mxu0 0
    %2708 = vmatmul.mubr.bf16.gmra.mrb[0].mxu0 %v2514
    %v2709 = vpop.f32.mrb[0].mxu0
    %v2710 = vadd.f32 %v1358, %v2709
    %v2711 = vpop.f32.mrb[0].mxu0
    %v2712 = vadd.f32 %v1360, %v2711
    %v2713 = vpop.f32.mrb[0].mxu0
    %v2714 = vpop.f32.mrb[0].mxu0
    %2715 = vdwg.mxu0
    %2716 = vmatprep.subr.bf16.mxu0 %v2614
    %2717 = vmatpush1.bf16.msra.mxu0 %v2613
    %2718 = vmatprep.subr.bf16.mxu0 %v2618
    %2719 = vmatpush1.bf16.msra.mxu0 %v2617
    %2720 = vmatprep.subr.bf16.mxu0 %v2622
    %2721 = vmatpush1.bf16.msra.mxu0 %v2621
    %2722 = vmatprep.subr.bf16.mxu0 %v2626
    %2723 = vmatpush1.bf16.msra.mxu0 %v2625
    %2724 = vmatprep.subr.bf16.mxu0 %v2630
    %2725 = vmatpush1.bf16.msra.mxu0 %v2629
    %2726 = vmatprep.subr.bf16.mxu0 %v2634
    %2727 = vmatpush1.bf16.msra.mxu0 %v2633
    %2728 = vmatprep.subr.bf16.mxu0 %v2638
    %2729 = vmatpush1.bf16.msra.mxu0 %v2637
    %2730 = vmatprep.subr.bf16.mxu0 %v2642
    %2731 = vmatpush1.bf16.msra.mxu0 %v2641
    %2732 = vmatprep.subr.bf16.mxu0 0
    %2733 = vmatpush1.bf16.msra.mxu0 0
    %2734 = vmatprep.subr.bf16.mxu0 0
    %2735 = vmatpush1.bf16.msra.mxu0 0
    %2736 = vmatprep.subr.bf16.mxu0 0
    %2737 = vmatpush1.bf16.msra.mxu0 0
    %2738 = vmatprep.subr.bf16.mxu0 0
    %2739 = vmatpush1.bf16.msra.mxu0 0
    %2740 = vmatprep.subr.bf16.mxu0 0
    %2741 = vmatpush1.bf16.msra.mxu0 0
    %2742 = vmatprep.subr.bf16.mxu0 0
    %2743 = vmatpush1.bf16.msra.mxu0 0
    %2744 = vmatprep.subr.bf16.mxu0 0
    %2745 = vmatpush1.bf16.msra.mxu0 0
    %2746 = vmatprep.subr.bf16.mxu0 0
    %2747 = vmatpush1.bf16.msra.mxu0 0
    %2748 = vmatprep.mubr.bf16.mxu0 0
    %2749 = vmatmul.mubr.bf16.gmra.mrb[0].mxu0 %v2514
    %v2750 = vpop.f32.mrb[0].mxu0
    %v2751 = vadd.f32 %v1399, %v2750
    %v2752 = vpop.f32.mrb[0].mxu0
    %v2753 = vadd.f32 %v1401, %v2752
    %v2754 = vpop.f32.mrb[0].mxu0
    %v2755 = vpop.f32.mrb[0].mxu0
    %2756 = vdwg.mxu0
    %v2757 = vxor.u32 %v2710, 2147483648
    %v2758 = vxor.u32 %v2712, 2147483648
    %v2759 = vxor.u32 %v2751, 2147483648
    %v2760 = vmul.f32 %v2757, 1.442695
    %v2761 = vpow.pop %v2760
    %v2762 = vmul.f32 %v2758, 1.442695
    %v2763 = vpow.pop %v2762
    %v2764 = vmul.f32 %v2759, 1.442695
    %v2765 = vpow.pop %v2764
    %v2766 = vadd.f32 %v2761, 1.0
    %v2767 = vadd.f32 %v2763, 1.0
    %v2768 = vadd.f32 %v2765, 1.0
    %v2769 = vrcp.pop %v2766
    %v2770 = vmul.f32 1.0, %v2769
    %v2771 = vrcp.pop %v2767
    %v2772 = vmul.f32 1.0, %v2771
    %v2773 = vrcp.pop %v2768
    %v2774 = vmul.f32 1.0, %v2773
    %v2775 = vtanh.pop %v2753
    %v2776 = vmul.f32 %v2772, %v721
    %v2777 = vmul.f32 %v2770, %v2775
    %v2778 = vadd.f32 %v2776, %v2777
    %v2779 = vtanh.pop %v2778
    %v2780 = vmul.f32 %v2774, %v2779
    %s2781 = scalar_lea.vmem [#allocation10], 256
    %v2782 = vld [vmem:[%s2781] sm:$0xff]
    %v2783 = vld [vmem:[%s2781 + $0x8] sm:$0xff]
    %v2784 = vld [vmem:[%s2781 + $0x10] sm:$0xff]
    %v2785 = vld [vmem:[%s2781 + $0x18] sm:$0xff]
    %v2786 = vld [vmem:[%s2781 + $0x20] sm:$0xff]
    %v2787 = vld [vmem:[%s2781 + $0x28] sm:$0xff]
    %v2788 = vld [vmem:[%s2781 + $0x30] sm:$0xff]
    %v2789 = vld [vmem:[%s2781 + $0x38] sm:$0xff]
    %v2790 = vld [vmem:[%s2781 + $0x40] sm:$0xff]
    %v2791 = vld [vmem:[%s2781 + $0x48] sm:$0xff]
    %v2792 = vld [vmem:[%s2781 + $0x50] sm:$0xff]
    %v2793 = vld [vmem:[%s2781 + $0x58] sm:$0xff]
    %v2794 = vld [vmem:[%s2781 + $0x60] sm:$0xff]
    %v2795 = vld [vmem:[%s2781 + $0x68] sm:$0xff]
    %v2796 = vld [vmem:[%s2781 + $0x70] sm:$0xff]
    %v2797 = vld [vmem:[%s2781 + $0x78] sm:$0xff]
    %v2798 = vld [vmem:[%s2781 + $0x80] sm:$0xff]
    %v2799 = vld [vmem:[%s2781 + $0x88] sm:$0xff]
    %v2800 = vld [vmem:[%s2781 + $0x90] sm:$0xff]
    %v2801 = vld [vmem:[%s2781 + $0x98] sm:$0xff]
    %v2802 = vld [vmem:[%s2781 + $0xa0] sm:$0xff]
    %v2803 = vld [vmem:[%s2781 + $0xa8] sm:$0xff]
    %v2804 = vld [vmem:[%s2781 + $0xb0] sm:$0xff]
    %v2805 = vld [vmem:[%s2781 + $0xb8] sm:$0xff]
    %v2806 = vld [vmem:[%s2781 + $0xc0] sm:$0xff]
    %v2807 = vld [vmem:[%s2781 + $0xc8] sm:$0xff]
    %v2808 = vld [vmem:[%s2781 + $0xd0] sm:$0xff]
    %v2809 = vld [vmem:[%s2781 + $0xd8] sm:$0xff]
    %v2810 = vld [vmem:[%s2781 + $0xe0] sm:$0xff]
    %v2811 = vld [vmem:[%s2781 + $0xe8] sm:$0xff]
    %v2812 = vld [vmem:[%s2781 + $0xf0] sm:$0xff]
    %v2813 = vld [vmem:[%s2781 + $0xf8] sm:$0xff]
    %v2814 = vpack.c.bf16 %v2780, %v2780
    %v2847 = vunpack.c.l.b16 %v2782
    %v2848 = vunpack.c.h.b16 %v2782
    %v2849 = vunpack.c.l.b16 %v2783
    %v2850 = vunpack.c.h.b16 %v2783
    %v2851 = vunpack.c.l.b16 %v2784
    %v2852 = vunpack.c.h.b16 %v2784
    %v2853 = vunpack.c.l.b16 %v2785
    %v2854 = vunpack.c.h.b16 %v2785
    %v2855 = vunpack.c.l.b16 %v2786
    %v2856 = vunpack.c.h.b16 %v2786
    %v2857 = vunpack.c.l.b16 %v2787
    %v2858 = vunpack.c.h.b16 %v2787
    %v2859 = vunpack.c.l.b16 %v2788
    %v2860 = vunpack.c.h.b16 %v2788
    %v2861 = vunpack.c.l.b16 %v2789
    %v2862 = vunpack.c.h.b16 %v2789
    %v2863 = vunpack.c.l.b16 %v2790
    %v2864 = vunpack.c.h.b16 %v2790
    %v2865 = vunpack.c.l.b16 %v2791
    %v2866 = vunpack.c.h.b16 %v2791
    %v2867 = vunpack.c.l.b16 %v2792
    %v2868 = vunpack.c.h.b16 %v2792
    %v2869 = vunpack.c.l.b16 %v2793
    %v2870 = vunpack.c.h.b16 %v2793
    %v2871 = vunpack.c.l.b16 %v2794
    %v2872 = vunpack.c.h.b16 %v2794
    %v2873 = vunpack.c.l.b16 %v2795
    %v2874 = vunpack.c.h.b16 %v2795
    %v2875 = vunpack.c.l.b16 %v2796
    %v2876 = vunpack.c.h.b16 %v2796
    %v2877 = vunpack.c.l.b16 %v2797
    %v2878 = vunpack.c.h.b16 %v2797
    %v2879 = vunpack.c.l.b16 %v2798
    %v2880 = vunpack.c.h.b16 %v2798
    %v2881 = vunpack.c.l.b16 %v2799
    %v2882 = vunpack.c.h.b16 %v2799
    %v2883 = vunpack.c.l.b16 %v2800
    %v2884 = vunpack.c.h.b16 %v2800
    %v2885 = vunpack.c.l.b16 %v2801
    %v2886 = vunpack.c.h.b16 %v2801
    %v2887 = vunpack.c.l.b16 %v2802
    %v2888 = vunpack.c.h.b16 %v2802
    %v2889 = vunpack.c.l.b16 %v2803
    %v2890 = vunpack.c.h.b16 %v2803
    %v2891 = vunpack.c.l.b16 %v2804
    %v2892 = vunpack.c.h.b16 %v2804
    %v2893 = vunpack.c.l.b16 %v2805
    %v2894 = vunpack.c.h.b16 %v2805
    %v2895 = vunpack.c.l.b16 %v2806
    %v2896 = vunpack.c.h.b16 %v2806
    %v2897 = vunpack.c.l.b16 %v2807
    %v2898 = vunpack.c.h.b16 %v2807
    %v2899 = vunpack.c.l.b16 %v2808
    %v2900 = vunpack.c.h.b16 %v2808
    %v2901 = vunpack.c.l.b16 %v2809
    %v2902 = vunpack.c.h.b16 %v2809
    %v2903 = vunpack.c.l.b16 %v2810
    %v2904 = vunpack.c.h.b16 %v2810
    %v2905 = vunpack.c.l.b16 %v2811
    %v2906 = vunpack.c.h.b16 %v2811
    %v2907 = vunpack.c.l.b16 %v2812
    %v2908 = vunpack.c.h.b16 %v2812
    %v2909 = vunpack.c.l.b16 %v2813
    %v2910 = vunpack.c.h.b16 %v2813
    %v2911 = vpack.c.b16 %v2851, %v2847
    %v2912 = vpack.c.b16 %v2852, %v2848
    %v2913 = vpack.c.b16 %v2853, %v2849
    %v2914 = vpack.c.b16 %v2854, %v2850
    %v2915 = vpack.c.b16 %v2859, %v2855
    %v2916 = vpack.c.b16 %v2860, %v2856
    %v2917 = vpack.c.b16 %v2861, %v2857
    %v2918 = vpack.c.b16 %v2862, %v2858
    %v2919 = vpack.c.b16 %v2867, %v2863
    %v2920 = vpack.c.b16 %v2868, %v2864
    %v2921 = vpack.c.b16 %v2869, %v2865
    %v2922 = vpack.c.b16 %v2870, %v2866
    %v2923 = vpack.c.b16 %v2875, %v2871
    %v2924 = vpack.c.b16 %v2876, %v2872
    %v2925 = vpack.c.b16 %v2877, %v2873
    %v2926 = vpack.c.b16 %v2878, %v2874
    %v2927 = vpack.c.b16 %v2883, %v2879
    %v2928 = vpack.c.b16 %v2884, %v2880
    %v2929 = vpack.c.b16 %v2885, %v2881
    %v2930 = vpack.c.b16 %v2886, %v2882
    %v2931 = vpack.c.b16 %v2891, %v2887
    %v2932 = vpack.c.b16 %v2892, %v2888
    %v2933 = vpack.c.b16 %v2893, %v2889
    %v2934 = vpack.c.b16 %v2894, %v2890
    %v2935 = vpack.c.b16 %v2899, %v2895
    %v2936 = vpack.c.b16 %v2900, %v2896
    %v2937 = vpack.c.b16 %v2901, %v2897
    %v2938 = vpack.c.b16 %v2902, %v2898
    %v2939 = vpack.c.b16 %v2907, %v2903
    %v2940 = vpack.c.b16 %v2908, %v2904
    %v2941 = vpack.c.b16 %v2909, %v2905
    %v2942 = vpack.c.b16 %v2910, %v2906
    %2975 = vmatprep.subr.bf16.mxu0 %v2912
    %2976 = vmatpush1.bf16.msra.mxu0 %v2911
    %2977 = vmatprep.subr.bf16.mxu0 %v2916
    %2978 = vmatpush1.bf16.msra.mxu0 %v2915
    %2979 = vmatprep.subr.bf16.mxu0 %v2920
    %2980 = vmatpush1.bf16.msra.mxu0 %v2919
    %2981 = vmatprep.subr.bf16.mxu0 %v2924
    %2982 = vmatpush1.bf16.msra.mxu0 %v2923
    %2983 = vmatprep.subr.bf16.mxu0 %v2928
    %2984 = vmatpush1.bf16.msra.mxu0 %v2927
    %2985 = vmatprep.subr.bf16.mxu0 %v2932
    %2986 = vmatpush1.bf16.msra.mxu0 %v2931
    %2987 = vmatprep.subr.bf16.mxu0 %v2936
    %2988 = vmatpush1.bf16.msra.mxu0 %v2935
    %2989 = vmatprep.subr.bf16.mxu0 %v2940
    %2990 = vmatpush1.bf16.msra.mxu0 %v2939
    %2991 = vmatprep.subr.bf16.mxu0 0
    %2992 = vmatpush1.bf16.msra.mxu0 0
    %2993 = vmatprep.subr.bf16.mxu0 0
    %2994 = vmatpush1.bf16.msra.mxu0 0
    %2995 = vmatprep.subr.bf16.mxu0 0
    %2996 = vmatpush1.bf16.msra.mxu0 0
    %2997 = vmatprep.subr.bf16.mxu0 0
    %2998 = vmatpush1.bf16.msra.mxu0 0
    %2999 = vmatprep.subr.bf16.mxu0 0
    %3000 = vmatpush1.bf16.msra.mxu0 0
    %3001 = vmatprep.subr.bf16.mxu0 0
    %3002 = vmatpush1.bf16.msra.mxu0 0
    %3003 = vmatprep.subr.bf16.mxu0 0
    %3004 = vmatpush1.bf16.msra.mxu0 0
    %3005 = vmatprep.subr.bf16.mxu0 0
    %3006 = vmatpush1.bf16.msra.mxu0 0
    %3007 = vmatprep.mubr.bf16.mxu0 0
    %3008 = vmatmul.mubr.bf16.gmra.mrb[0].mxu0 %v2814
    %v3009 = vpop.f32.mrb[0].mxu0
    %v3010 = vadd.f32 %v1657, %v3009
    %v3011 = vpop.f32.mrb[0].mxu0
    %v3012 = vadd.f32 %v1659, %v3011
    %v3013 = vpop.f32.mrb[0].mxu0
    %v3014 = vpop.f32.mrb[0].mxu0
    %3015 = vdwg.mxu0
    %3016 = vmatprep.subr.bf16.mxu0 %v2914
    %3017 = vmatpush1.bf16.msra.mxu0 %v2913
    %3018 = vmatprep.subr.bf16.mxu0 %v2918
    %3019 = vmatpush1.bf16.msra.mxu0 %v2917
    %3020 = vmatprep.subr.bf16.mxu0 %v2922
    %3021 = vmatpush1.bf16.msra.mxu0 %v2921
    %3022 = vmatprep.subr.bf16.mxu0 %v2926
    %3023 = vmatpush1.bf16.msra.mxu0 %v2925
    %3024 = vmatprep.subr.bf16.mxu0 %v2930
    %3025 = vmatpush1.bf16.msra.mxu0 %v2929
    %3026 = vmatprep.subr.bf16.mxu0 %v2934
    %3027 = vmatpush1.bf16.msra.mxu0 %v2933
    %3028 = vmatprep.subr.bf16.mxu0 %v2938
    %3029 = vmatpush1.bf16.msra.mxu0 %v2937
    %3030 = vmatprep.subr.bf16.mxu0 %v2942
    %3031 = vmatpush1.bf16.msra.mxu0 %v2941
    %3032 = vmatprep.subr.bf16.mxu0 0
    %3033 = vmatpush1.bf16.msra.mxu0 0
    %3034 = vmatprep.subr.bf16.mxu0 0
    %3035 = vmatpush1.bf16.msra.mxu0 0
    %3036 = vmatprep.subr.bf16.mxu0 0
    %3037 = vmatpush1.bf16.msra.mxu0 0
    %3038 = vmatprep.subr.bf16.mxu0 0
    %3039 = vmatpush1.bf16.msra.mxu0 0
    %3040 = vmatprep.subr.bf16.mxu0 0
    %3041 = vmatpush1.bf16.msra.mxu0 0
    %3042 = vmatprep.subr.bf16.mxu0 0
    %3043 = vmatpush1.bf16.msra.mxu0 0
    %3044 = vmatprep.subr.bf16.mxu0 0
    %3045 = vmatpush1.bf16.msra.mxu0 0
    %3046 = vmatprep.subr.bf16.mxu0 0
    %3047 = vmatpush1.bf16.msra.mxu0 0
    %3048 = vmatprep.mubr.bf16.mxu0 0
    %3049 = vmatmul.mubr.bf16.gmra.mrb[0].mxu0 %v2814
    %v3050 = vpop.f32.mrb[0].mxu0
    %v3051 = vadd.f32 %v1698, %v3050
    %v3052 = vpop.f32.mrb[0].mxu0
    %v3053 = vadd.f32 %v1700, %v3052
    %v3054 = vpop.f32.mrb[0].mxu0
    %v3055 = vpop.f32.mrb[0].mxu0
    %3056 = vdwg.mxu0
    %v3057 = vxor.u32 %v3010, 2147483648
    %v3058 = vxor.u32 %v3012, 2147483648
    %v3059 = vxor.u32 %v3051, 2147483648
    %v3060 = vmul.f32 %v3057, 1.442695
    %v3061 = vpow.pop %v3060
    %v3062 = vmul.f32 %v3058, 1.442695
    %v3063 = vpow.pop %v3062
    %v3064 = vmul.f32 %v3059, 1.442695
    %v3065 = vpow.pop %v3064
    %v3066 = vadd.f32 %v3061, 1.0
    %v3067 = vadd.f32 %v3063, 1.0
    %v3068 = vadd.f32 %v3065, 1.0
    %v3069 = vrcp.pop %v3066
    %v3070 = vmul.f32 1.0, %v3069
    %v3071 = vrcp.pop %v3067
    %v3072 = vmul.f32 1.0, %v3071
    %v3073 = vrcp.pop %v3068
    %v3074 = vmul.f32 1.0, %v3073
    %v3075 = vtanh.pop %v3053
    %v3076 = vmul.f32 %v3072, %v760
    %v3077 = vmul.f32 %v3070, %v3075
    %v3078 = vadd.f32 %v3076, %v3077
    %v3079 = vtanh.pop %v3078
    %v3080 = vmul.f32 %v3074, %v3079
    %s3081 = scalar_lea.vmem [#allocation10], 512
    %v3082 = vld [vmem:[%s3081] sm:$0xff]
    %v3083 = vld [vmem:[%s3081 + $0x8] sm:$0xff]
    %v3084 = vld [vmem:[%s3081 + $0x10] sm:$0xff]
    %v3085 = vld [vmem:[%s3081 + $0x18] sm:$0xff]
    %v3086 = vld [vmem:[%s3081 + $0x20] sm:$0xff]
    %v3087 = vld [vmem:[%s3081 + $0x28] sm:$0xff]
    %v3088 = vld [vmem:[%s3081 + $0x30] sm:$0xff]
    %v3089 = vld [vmem:[%s3081 + $0x38] sm:$0xff]
    %v3090 = vld [vmem:[%s3081 + $0x40] sm:$0xff]
    %v3091 = vld [vmem:[%s3081 + $0x48] sm:$0xff]
    %v3092 = vld [vmem:[%s3081 + $0x50] sm:$0xff]
    %v3093 = vld [vmem:[%s3081 + $0x58] sm:$0xff]
    %v3094 = vld [vmem:[%s3081 + $0x60] sm:$0xff]
    %v3095 = vld [vmem:[%s3081 + $0x68] sm:$0xff]
    %v3096 = vld [vmem:[%s3081 + $0x70] sm:$0xff]
    %v3097 = vld [vmem:[%s3081 + $0x78] sm:$0xff]
    %v3098 = vld [vmem:[%s3081 + $0x80] sm:$0xff]
    %v3099 = vld [vmem:[%s3081 + $0x88] sm:$0xff]
    %v3100 = vld [vmem:[%s3081 + $0x90] sm:$0xff]
    %v3101 = vld [vmem:[%s3081 + $0x98] sm:$0xff]
    %v3102 = vld [vmem:[%s3081 + $0xa0] sm:$0xff]
    %v3103 = vld [vmem:[%s3081 + $0xa8] sm:$0xff]
    %v3104 = vld [vmem:[%s3081 + $0xb0] sm:$0xff]
    %v3105 = vld [vmem:[%s3081 + $0xb8] sm:$0xff]
    %v3106 = vld [vmem:[%s3081 + $0xc0] sm:$0xff]
    %v3107 = vld [vmem:[%s3081 + $0xc8] sm:$0xff]
    %v3108 = vld [vmem:[%s3081 + $0xd0] sm:$0xff]
    %v3109 = vld [vmem:[%s3081 + $0xd8] sm:$0xff]
    %v3110 = vld [vmem:[%s3081 + $0xe0] sm:$0xff]
    %v3111 = vld [vmem:[%s3081 + $0xe8] sm:$0xff]
    %v3112 = vld [vmem:[%s3081 + $0xf0] sm:$0xff]
    %v3113 = vld [vmem:[%s3081 + $0xf8] sm:$0xff]
    %v3114 = vpack.c.bf16 %v3080, %v3080
    %v3147 = vunpack.c.l.b16 %v3082
    %v3148 = vunpack.c.h.b16 %v3082
    %v3149 = vunpack.c.l.b16 %v3083
    %v3150 = vunpack.c.h.b16 %v3083
    %v3151 = vunpack.c.l.b16 %v3084
    %v3152 = vunpack.c.h.b16 %v3084
    %v3153 = vunpack.c.l.b16 %v3085
    %v3154 = vunpack.c.h.b16 %v3085
    %v3155 = vunpack.c.l.b16 %v3086
    %v3156 = vunpack.c.h.b16 %v3086
    %v3157 = vunpack.c.l.b16 %v3087
    %v3158 = vunpack.c.h.b16 %v3087
    %v3159 = vunpack.c.l.b16 %v3088
    %v3160 = vunpack.c.h.b16 %v3088
    %v3161 = vunpack.c.l.b16 %v3089
    %v3162 = vunpack.c.h.b16 %v3089
    %v3163 = vunpack.c.l.b16 %v3090
    %v3164 = vunpack.c.h.b16 %v3090
    %v3165 = vunpack.c.l.b16 %v3091
    %v3166 = vunpack.c.h.b16 %v3091
    %v3167 = vunpack.c.l.b16 %v3092
    %v3168 = vunpack.c.h.b16 %v3092
    %v3169 = vunpack.c.l.b16 %v3093
    %v3170 = vunpack.c.h.b16 %v3093
    %v3171 = vunpack.c.l.b16 %v3094
    %v3172 = vunpack.c.h.b16 %v3094
    %v3173 = vunpack.c.l.b16 %v3095
    %v3174 = vunpack.c.h.b16 %v3095
    %v3175 = vunpack.c.l.b16 %v3096
    %v3176 = vunpack.c.h.b16 %v3096
    %v3177 = vunpack.c.l.b16 %v3097
    %v3178 = vunpack.c.h.b16 %v3097
    %v3179 = vunpack.c.l.b16 %v3098
    %v3180 = vunpack.c.h.b16 %v3098
    %v3181 = vunpack.c.l.b16 %v3099
    %v3182 = vunpack.c.h.b16 %v3099
    %v3183 = vunpack.c.l.b16 %v3100
    %v3184 = vunpack.c.h.b16 %v3100
    %v3185 = vunpack.c.l.b16 %v3101
    %v3186 = vunpack.c.h.b16 %v3101
    %v3187 = vunpack.c.l.b16 %v3102
    %v3188 = vunpack.c.h.b16 %v3102
    %v3189 = vunpack.c.l.b16 %v3103
    %v3190 = vunpack.c.h.b16 %v3103
    %v3191 = vunpack.c.l.b16 %v3104
    %v3192 = vunpack.c.h.b16 %v3104
    %v3193 = vunpack.c.l.b16 %v3105
    %v3194 = vunpack.c.h.b16 %v3105
    %v3195 = vunpack.c.l.b16 %v3106
    %v3196 = vunpack.c.h.b16 %v3106
    %v3197 = vunpack.c.l.b16 %v3107
    %v3198 = vunpack.c.h.b16 %v3107
    %v3199 = vunpack.c.l.b16 %v3108
    %v3200 = vunpack.c.h.b16 %v3108
    %v3201 = vunpack.c.l.b16 %v3109
    %v3202 = vunpack.c.h.b16 %v3109
    %v3203 = vunpack.c.l.b16 %v3110
    %v3204 = vunpack.c.h.b16 %v3110
    %v3205 = vunpack.c.l.b16 %v3111
    %v3206 = vunpack.c.h.b16 %v3111
    %v3207 = vunpack.c.l.b16 %v3112
    %v3208 = vunpack.c.h.b16 %v3112
    %v3209 = vunpack.c.l.b16 %v3113
    %v3210 = vunpack.c.h.b16 %v3113
    %v3211 = vpack.c.b16 %v3151, %v3147
    %v3212 = vpack.c.b16 %v3152, %v3148
    %v3213 = vpack.c.b16 %v3153, %v3149
    %v3214 = vpack.c.b16 %v3154, %v3150
    %v3215 = vpack.c.b16 %v3159, %v3155
    %v3216 = vpack.c.b16 %v3160, %v3156
    %v3217 = vpack.c.b16 %v3161, %v3157
    %v3218 = vpack.c.b16 %v3162, %v3158
    %v3219 = vpack.c.b16 %v3167, %v3163
    %v3220 = vpack.c.b16 %v3168, %v3164
    %v3221 = vpack.c.b16 %v3169, %v3165
    %v3222 = vpack.c.b16 %v3170, %v3166
    %v3223 = vpack.c.b16 %v3175, %v3171
    %v3224 = vpack.c.b16 %v3176, %v3172
    %v3225 = vpack.c.b16 %v3177, %v3173
    %v3226 = vpack.c.b16 %v3178, %v3174
    %v3227 = vpack.c.b16 %v3183, %v3179
    %v3228 = vpack.c.b16 %v3184, %v3180
    %v3229 = vpack.c.b16 %v3185, %v3181
    %v3230 = vpack.c.b16 %v3186, %v3182
    %v3231 = vpack.c.b16 %v3191, %v3187
    %v3232 = vpack.c.b16 %v3192, %v3188
    %v3233 = vpack.c.b16 %v3193, %v3189
    %v3234 = vpack.c.b16 %v3194, %v3190
    %v3235 = vpack.c.b16 %v3199, %v3195
    %v3236 = vpack.c.b16 %v3200, %v3196
    %v3237 = vpack.c.b16 %v3201, %v3197
    %v3238 = vpack.c.b16 %v3202, %v3198
    %v3239 = vpack.c.b16 %v3207, %v3203
    %v3240 = vpack.c.b16 %v3208, %v3204
    %v3241 = vpack.c.b16 %v3209, %v3205
    %v3242 = vpack.c.b16 %v3210, %v3206
    %3275 = vmatprep.subr.bf16.mxu0 %v3212
    %3276 = vmatpush1.bf16.msra.mxu0 %v3211
    %3277 = vmatprep.subr.bf16.mxu0 %v3216
    %3278 = vmatpush1.bf16.msra.mxu0 %v3215
    %3279 = vmatprep.subr.bf16.mxu0 %v3220
    %3280 = vmatpush1.bf16.msra.mxu0 %v3219
    %3281 = vmatprep.subr.bf16.mxu0 %v3224
    %3282 = vmatpush1.bf16.msra.mxu0 %v3223
    %3283 = vmatprep.subr.bf16.mxu0 %v3228
    %3284 = vmatpush1.bf16.msra.mxu0 %v3227
    %3285 = vmatprep.subr.bf16.mxu0 %v3232
    %3286 = vmatpush1.bf16.msra.mxu0 %v3231
    %3287 = vmatprep.subr.bf16.mxu0 %v3236
    %3288 = vmatpush1.bf16.msra.mxu0 %v3235
    %3289 = vmatprep.subr.bf16.mxu0 %v3240
    %3290 = vmatpush1.bf16.msra.mxu0 %v3239
    %3291 = vmatprep.subr.bf16.mxu0 0
    %3292 = vmatpush1.bf16.msra.mxu0 0
    %3293 = vmatprep.subr.bf16.mxu0 0
    %3294 = vmatpush1.bf16.msra.mxu0 0
    %3295 = vmatprep.subr.bf16.mxu0 0
    %3296 = vmatpush1.bf16.msra.mxu0 0
    %3297 = vmatprep.subr.bf16.mxu0 0
    %3298 = vmatpush1.bf16.msra.mxu0 0
    %3299 = vmatprep.subr.bf16.mxu0 0
    %3300 = vmatpush1.bf16.msra.mxu0 0
    %3301 = vmatprep.subr.bf16.mxu0 0
    %3302 = vmatpush1.bf16.msra.mxu0 0
    %3303 = vmatprep.subr.bf16.mxu0 0
    %3304 = vmatpush1.bf16.msra.mxu0 0
    %3305 = vmatprep.subr.bf16.mxu0 0
    %3306 = vmatpush1.bf16.msra.mxu0 0
    %3307 = vmatprep.mubr.bf16.mxu0 0
    %3308 = vmatmul.mubr.bf16.gmra.mrb[0].mxu0 %v3114
    %v3309 = vpop.f32.mrb[0].mxu0
    %v3310 = vadd.f32 %v1956, %v3309
    %v3311 = vpop.f32.mrb[0].mxu0
    %v3312 = vadd.f32 %v1958, %v3311
    %v3313 = vpop.f32.mrb[0].mxu0
    %v3314 = vpop.f32.mrb[0].mxu0
    %3315 = vdwg.mxu0
    %3316 = vmatprep.subr.bf16.mxu0 %v3214
    %3317 = vmatpush1.bf16.msra.mxu0 %v3213
    %3318 = vmatprep.subr.bf16.mxu0 %v3218
    %3319 = vmatpush1.bf16.msra.mxu0 %v3217
    %3320 = vmatprep.subr.bf16.mxu0 %v3222
    %3321 = vmatpush1.bf16.msra.mxu0 %v3221
    %3322 = vmatprep.subr.bf16.mxu0 %v3226
    %3323 = vmatpush1.bf16.msra.mxu0 %v3225
    %3324 = vmatprep.subr.bf16.mxu0 %v3230
    %3325 = vmatpush1.bf16.msra.mxu0 %v3229
    %3326 = vmatprep.subr.bf16.mxu0 %v3234
    %3327 = vmatpush1.bf16.msra.mxu0 %v3233
    %3328 = vmatprep.subr.bf16.mxu0 %v3238
    %3329 = vmatpush1.bf16.msra.mxu0 %v3237
    %3330 = vmatprep.subr.bf16.mxu0 %v3242
    %3331 = vmatpush1.bf16.msra.mxu0 %v3241
    %3332 = vmatprep.subr.bf16.mxu0 0
    %3333 = vmatpush1.bf16.msra.mxu0 0
    %3334 = vmatprep.subr.bf16.mxu0 0
    %3335 = vmatpush1.bf16.msra.mxu0 0
    %3336 = vmatprep.subr.bf16.mxu0 0
    %3337 = vmatpush1.bf16.msra.mxu0 0
    %3338 = vmatprep.subr.bf16.mxu0 0
    %3339 = vmatpush1.bf16.msra.mxu0 0
    %3340 = vmatprep.subr.bf16.mxu0 0
    %3341 = vmatpush1.bf16.msra.mxu0 0
    %3342 = vmatprep.subr.bf16.mxu0 0
    %3343 = vmatpush1.bf16.msra.mxu0 0
    %3344 = vmatprep.subr.bf16.mxu0 0
    %3345 = vmatpush1.bf16.msra.mxu0 0
    %3346 = vmatprep.subr.bf16.mxu0 0
    %3347 = vmatpush1.bf16.msra.mxu0 0
    %3348 = vmatprep.mubr.bf16.mxu0 0
    %3349 = vmatmul.mubr.bf16.gmra.mrb[0].mxu0 %v3114
    %v3350 = vpop.f32.mrb[0].mxu0
    %v3351 = vadd.f32 %v1997, %v3350
    %v3352 = vpop.f32.mrb[0].mxu0
    %v3353 = vadd.f32 %v1999, %v3352
    %v3354 = vpop.f32.mrb[0].mxu0
    %v3355 = vpop.f32.mrb[0].mxu0
    %3356 = vdwg.mxu0
    %v3357 = vxor.u32 %v3310, 2147483648
    %v3358 = vxor.u32 %v3312, 2147483648
    %v3359 = vxor.u32 %v3351, 2147483648
    %v3360 = vmul.f32 %v3357, 1.442695
    %v3361 = vpow.pop %v3360
    %v3362 = vmul.f32 %v3358, 1.442695
    %v3363 = vpow.pop %v3362
    %v3364 = vmul.f32 %v3359, 1.442695
    %v3365 = vpow.pop %v3364
    %v3366 = vadd.f32 %v3361, 1.0
    %v3367 = vadd.f32 %v3363, 1.0
    %v3368 = vadd.f32 %v3365, 1.0
    %v3369 = vrcp.pop %v3366
    %v3370 = vmul.f32 1.0, %v3369
    %v3371 = vrcp.pop %v3367
    %v3372 = vmul.f32 1.0, %v3371
    %v3373 = vrcp.pop %v3368
    %v3374 = vmul.f32 1.0, %v3373
    %v3375 = vtanh.pop %v3353
    %v3376 = vmul.f32 %v3372, %v762
    %v3377 = vmul.f32 %v3370, %v3375
    %v3378 = vadd.f32 %v3376, %v3377
    %v3379 = vtanh.pop %v3378
    %v3380 = vmul.f32 %v3374, %v3379
    %s3381 = scalar_lea.vmem [#allocation10], 768
    %v3382 = vld [vmem:[%s3381] sm:$0xff]
    %v3383 = vld [vmem:[%s3381 + $0x8] sm:$0xff]
    %v3384 = vld [vmem:[%s3381 + $0x10] sm:$0xff]
    %v3385 = vld [vmem:[%s3381 + $0x18] sm:$0xff]
    %v3386 = vld [vmem:[%s3381 + $0x20] sm:$0xff]
    %v3387 = vld [vmem:[%s3381 + $0x28] sm:$0xff]
    %v3388 = vld [vmem:[%s3381 + $0x30] sm:$0xff]
    %v3389 = vld [vmem:[%s3381 + $0x38] sm:$0xff]
    %v3390 = vld [vmem:[%s3381 + $0x40] sm:$0xff]
    %v3391 = vld [vmem:[%s3381 + $0x48] sm:$0xff]
    %v3392 = vld [vmem:[%s3381 + $0x50] sm:$0xff]
    %v3393 = vld [vmem:[%s3381 + $0x58] sm:$0xff]
    %v3394 = vld [vmem:[%s3381 + $0x60] sm:$0xff]
    %v3395 = vld [vmem:[%s3381 + $0x68] sm:$0xff]
    %v3396 = vld [vmem:[%s3381 + $0x70] sm:$0xff]
    %v3397 = vld [vmem:[%s3381 + $0x78] sm:$0xff]
    %v3398 = vld [vmem:[%s3381 + $0x80] sm:$0xff]
    %v3399 = vld [vmem:[%s3381 + $0x88] sm:$0xff]
    %v3400 = vld [vmem:[%s3381 + $0x90] sm:$0xff]
    %v3401 = vld [vmem:[%s3381 + $0x98] sm:$0xff]
    %v3402 = vld [vmem:[%s3381 + $0xa0] sm:$0xff]
    %v3403 = vld [vmem:[%s3381 + $0xa8] sm:$0xff]
    %v3404 = vld [vmem:[%s3381 + $0xb0] sm:$0xff]
    %v3405 = vld [vmem:[%s3381 + $0xb8] sm:$0xff]
    %v3406 = vld [vmem:[%s3381 + $0xc0] sm:$0xff]
    %v3407 = vld [vmem:[%s3381 + $0xc8] sm:$0xff]
    %v3408 = vld [vmem:[%s3381 + $0xd0] sm:$0xff]
    %v3409 = vld [vmem:[%s3381 + $0xd8] sm:$0xff]
    %v3410 = vld [vmem:[%s3381 + $0xe0] sm:$0xff]
    %v3411 = vld [vmem:[%s3381 + $0xe8] sm:$0xff]
    %v3412 = vld [vmem:[%s3381 + $0xf0] sm:$0xff]
    %v3413 = vld [vmem:[%s3381 + $0xf8] sm:$0xff]
    %v3414 = vpack.c.bf16 %v3380, %v3380
    %v3447 = vunpack.c.l.b16 %v3382
    %v3448 = vunpack.c.h.b16 %v3382
    %v3449 = vunpack.c.l.b16 %v3383
    %v3450 = vunpack.c.h.b16 %v3383
    %v3451 = vunpack.c.l.b16 %v3384
    %v3452 = vunpack.c.h.b16 %v3384
    %v3453 = vunpack.c.l.b16 %v3385
    %v3454 = vunpack.c.h.b16 %v3385
    %v3455 = vunpack.c.l.b16 %v3386
    %v3456 = vunpack.c.h.b16 %v3386
    %v3457 = vunpack.c.l.b16 %v3387
    %v3458 = vunpack.c.h.b16 %v3387
    %v3459 = vunpack.c.l.b16 %v3388
    %v3460 = vunpack.c.h.b16 %v3388
    %v3461 = vunpack.c.l.b16 %v3389
    %v3462 = vunpack.c.h.b16 %v3389
    %v3463 = vunpack.c.l.b16 %v3390
    %v3464 = vunpack.c.h.b16 %v3390
    %v3465 = vunpack.c.l.b16 %v3391
    %v3466 = vunpack.c.h.b16 %v3391
    %v3467 = vunpack.c.l.b16 %v3392
    %v3468 = vunpack.c.h.b16 %v3392
    %v3469 = vunpack.c.l.b16 %v3393
    %v3470 = vunpack.c.h.b16 %v3393
    %v3471 = vunpack.c.l.b16 %v3394
    %v3472 = vunpack.c.h.b16 %v3394
    %v3473 = vunpack.c.l.b16 %v3395
    %v3474 = vunpack.c.h.b16 %v3395
    %v3475 = vunpack.c.l.b16 %v3396
    %v3476 = vunpack.c.h.b16 %v3396
    %v3477 = vunpack.c.l.b16 %v3397
    %v3478 = vunpack.c.h.b16 %v3397
    %v3479 = vunpack.c.l.b16 %v3398
    %v3480 = vunpack.c.h.b16 %v3398
    %v3481 = vunpack.c.l.b16 %v3399
    %v3482 = vunpack.c.h.b16 %v3399
    %v3483 = vunpack.c.l.b16 %v3400
    %v3484 = vunpack.c.h.b16 %v3400
    %v3485 = vunpack.c.l.b16 %v3401
    %v3486 = vunpack.c.h.b16 %v3401
    %v3487 = vunpack.c.l.b16 %v3402
    %v3488 = vunpack.c.h.b16 %v3402
    %v3489 = vunpack.c.l.b16 %v3403
    %v3490 = vunpack.c.h.b16 %v3403
    %v3491 = vunpack.c.l.b16 %v3404
    %v3492 = vunpack.c.h.b16 %v3404
    %v3493 = vunpack.c.l.b16 %v3405
    %v3494 = vunpack.c.h.b16 %v3405
    %v3495 = vunpack.c.l.b16 %v3406
    %v3496 = vunpack.c.h.b16 %v3406
    %v3497 = vunpack.c.l.b16 %v3407
    %v3498 = vunpack.c.h.b16 %v3407
    %v3499 = vunpack.c.l.b16 %v3408
    %v3500 = vunpack.c.h.b16 %v3408
    %v3501 = vunpack.c.l.b16 %v3409
    %v3502 = vunpack.c.h.b16 %v3409
    %v3503 = vunpack.c.l.b16 %v3410
    %v3504 = vunpack.c.h.b16 %v3410
    %v3505 = vunpack.c.l.b16 %v3411
    %v3506 = vunpack.c.h.b16 %v3411
    %v3507 = vunpack.c.l.b16 %v3412
    %v3508 = vunpack.c.h.b16 %v3412
    %v3509 = vunpack.c.l.b16 %v3413
    %v3510 = vunpack.c.h.b16 %v3413
    %v3511 = vpack.c.b16 %v3451, %v3447
    %v3512 = vpack.c.b16 %v3452, %v3448
    %v3513 = vpack.c.b16 %v3453, %v3449
    %v3514 = vpack.c.b16 %v3454, %v3450
    %v3515 = vpack.c.b16 %v3459, %v3455
    %v3516 = vpack.c.b16 %v3460, %v3456
    %v3517 = vpack.c.b16 %v3461, %v3457
    %v3518 = vpack.c.b16 %v3462, %v3458
    %v3519 = vpack.c.b16 %v3467, %v3463
    %v3520 = vpack.c.b16 %v3468, %v3464
    %v3521 = vpack.c.b16 %v3469, %v3465
    %v3522 = vpack.c.b16 %v3470, %v3466
    %v3523 = vpack.c.b16 %v3475, %v3471
    %v3524 = vpack.c.b16 %v3476, %v3472
    %v3525 = vpack.c.b16 %v3477, %v3473
    %v3526 = vpack.c.b16 %v3478, %v3474
    %v3527 = vpack.c.b16 %v3483, %v3479
    %v3528 = vpack.c.b16 %v3484, %v3480
    %v3529 = vpack.c.b16 %v3485, %v3481
    %v3530 = vpack.c.b16 %v3486, %v3482
    %v3531 = vpack.c.b16 %v3491, %v3487
    %v3532 = vpack.c.b16 %v3492, %v3488
    %v3533 = vpack.c.b16 %v3493, %v3489
    %v3534 = vpack.c.b16 %v3494, %v3490
    %v3535 = vpack.c.b16 %v3499, %v3495
    %v3536 = vpack.c.b16 %v3500, %v3496
    %v3537 = vpack.c.b16 %v3501, %v3497
    %v3538 = vpack.c.b16 %v3502, %v3498
    %v3539 = vpack.c.b16 %v3507, %v3503
    %v3540 = vpack.c.b16 %v3508, %v3504
    %v3541 = vpack.c.b16 %v3509, %v3505
    %v3542 = vpack.c.b16 %v3510, %v3506
    %3575 = vmatprep.subr.bf16.mxu0 %v3512
    %3576 = vmatpush1.bf16.msra.mxu0 %v3511
    %3577 = vmatprep.subr.bf16.mxu0 %v3516
    %3578 = vmatpush1.bf16.msra.mxu0 %v3515
    %3579 = vmatprep.subr.bf16.mxu0 %v3520
    %3580 = vmatpush1.bf16.msra.mxu0 %v3519
    %3581 = vmatprep.subr.bf16.mxu0 %v3524
    %3582 = vmatpush1.bf16.msra.mxu0 %v3523
    %3583 = vmatprep.subr.bf16.mxu0 %v3528
    %3584 = vmatpush1.bf16.msra.mxu0 %v3527
    %3585 = vmatprep.subr.bf16.mxu0 %v3532
    %3586 = vmatpush1.bf16.msra.mxu0 %v3531
    %3587 = vmatprep.subr.bf16.mxu0 %v3536
    %3588 = vmatpush1.bf16.msra.mxu0 %v3535
    %3589 = vmatprep.subr.bf16.mxu0 %v3540
    %3590 = vmatpush1.bf16.msra.mxu0 %v3539
    %3591 = vmatprep.subr.bf16.mxu0 0
    %3592 = vmatpush1.bf16.msra.mxu0 0
    %3593 = vmatprep.subr.bf16.mxu0 0
    %3594 = vmatpush1.bf16.msra.mxu0 0
    %3595 = vmatprep.subr.bf16.mxu0 0
    %3596 = vmatpush1.bf16.msra.mxu0 0
    %3597 = vmatprep.subr.bf16.mxu0 0
    %3598 = vmatpush1.bf16.msra.mxu0 0
    %3599 = vmatprep.subr.bf16.mxu0 0
    %3600 = vmatpush1.bf16.msra.mxu0 0
    %3601 = vmatprep.subr.bf16.mxu0 0
    %3602 = vmatpush1.bf16.msra.mxu0 0
    %3603 = vmatprep.subr.bf16.mxu0 0
    %3604 = vmatpush1.bf16.msra.mxu0 0
    %3605 = vmatprep.subr.bf16.mxu0 0
    %3606 = vmatpush1.bf16.msra.mxu0 0
    %3607 = vmatprep.mubr.bf16.mxu0 0
    %3608 = vmatmul.mubr.bf16.gmra.mrb[0].mxu0 %v3414
    %v3609 = vpop.f32.mrb[0].mxu0
    %v3610 = vadd.f32 %v2255, %v3609
    %v3611 = vpop.f32.mrb[0].mxu0
    %v3612 = vadd.f32 %v2257, %v3611
    %v3613 = vpop.f32.mrb[0].mxu0
    %v3614 = vpop.f32.mrb[0].mxu0
    %3615 = vdwg.mxu0
    %3616 = vmatprep.subr.bf16.mxu0 %v3514
    %3617 = vmatpush1.bf16.msra.mxu0 %v3513
    %3618 = vmatprep.subr.bf16.mxu0 %v3518
    %3619 = vmatpush1.bf16.msra.mxu0 %v3517
    %3620 = vmatprep.subr.bf16.mxu0 %v3522
    %3621 = vmatpush1.bf16.msra.mxu0 %v3521
    %3622 = vmatprep.subr.bf16.mxu0 %v3526
    %3623 = vmatpush1.bf16.msra.mxu0 %v3525
    %3624 = vmatprep.subr.bf16.mxu0 %v3530
    %3625 = vmatpush1.bf16.msra.mxu0 %v3529
    %3626 = vmatprep.subr.bf16.mxu0 %v3534
    %3627 = vmatpush1.bf16.msra.mxu0 %v3533
    %3628 = vmatprep.subr.bf16.mxu0 %v3538
    %3629 = vmatpush1.bf16.msra.mxu0 %v3537
    %3630 = vmatprep.subr.bf16.mxu0 %v3542
    %3631 = vmatpush1.bf16.msra.mxu0 %v3541
    %3632 = vmatprep.subr.bf16.mxu0 0
    %3633 = vmatpush1.bf16.msra.mxu0 0
    %3634 = vmatprep.subr.bf16.mxu0 0
    %3635 = vmatpush1.bf16.msra.mxu0 0
    %3636 = vmatprep.subr.bf16.mxu0 0
    %3637 = vmatpush1.bf16.msra.mxu0 0
    %3638 = vmatprep.subr.bf16.mxu0 0
    %3639 = vmatpush1.bf16.msra.mxu0 0
    %3640 = vmatprep.subr.bf16.mxu0 0
    %3641 = vmatpush1.bf16.msra.mxu0 0
    %3642 = vmatprep.subr.bf16.mxu0 0
    %3643 = vmatpush1.bf16.msra.mxu0 0
    %3644 = vmatprep.subr.bf16.mxu0 0
    %3645 = vmatpush1.bf16.msra.mxu0 0
    %3646 = vmatprep.subr.bf16.mxu0 0
    %3647 = vmatpush1.bf16.msra.mxu0 0
    %3648 = vmatprep.mubr.bf16.mxu0 0
    %3649 = vmatmul.mubr.bf16.gmra.mrb[0].mxu0 %v3414
    %v3650 = vpop.f32.mrb[0].mxu0
    %v3651 = vadd.f32 %v2296, %v3650
    %v3652 = vpop.f32.mrb[0].mxu0
    %v3653 = vadd.f32 %v2298, %v3652
    %v3654 = vpop.f32.mrb[0].mxu0
    %v3655 = vpop.f32.mrb[0].mxu0
    %3656 = vdwg.mxu0
    %v3657 = vxor.u32 %v3610, 2147483648
    %v3658 = vxor.u32 %v3612, 2147483648
    %v3659 = vxor.u32 %v3651, 2147483648
    %v3660 = vmul.f32 %v3657, 1.442695
    %v3661 = vpow.pop %v3660
    %v3662 = vmul.f32 %v3658, 1.442695
    %v3663 = vpow.pop %v3662
    %v3664 = vmul.f32 %v3659, 1.442695
    %v3665 = vpow.pop %v3664
    %v3666 = vadd.f32 %v3661, 1.0
    %v3667 = vadd.f32 %v3663, 1.0
    %v3668 = vadd.f32 %v3665, 1.0
    %v3669 = vrcp.pop %v3666
    %v3670 = vmul.f32 1.0, %v3669
    %v3671 = vrcp.pop %v3667
    %v3672 = vmul.f32 1.0, %v3671
    %v3673 = vrcp.pop %v3668
    %v3674 = vmul.f32 1.0, %v3673
    %v3675 = vtanh.pop %v3653
    %v3676 = vmul.f32 %v3672, %v801
    %v3677 = vmul.f32 %v3670, %v3675
    %v3678 = vadd.f32 %v3676, %v3677
    %v3679 = vtanh.pop %v3678
    %v3680 = vmul.f32 %v3674, %v3679
    %v3681 = vld [vmem:[#allocation11] sm:$0xff]
    %v3682 = vld [vmem:[#allocation11 + $0x8] sm:$0xff]
    %v3683 = vld [vmem:[#allocation11 + $0x10] sm:$0xff]
    %v3684 = vld [vmem:[#allocation11 + $0x18] sm:$0xff]
    %v3685 = vld [vmem:[#allocation11 + $0x20] sm:$0xff]
    %v3686 = vld [vmem:[#allocation11 + $0x28] sm:$0xff]
    %v3687 = vld [vmem:[#allocation11 + $0x30] sm:$0xff]
    %v3688 = vld [vmem:[#allocation11 + $0x38] sm:$0xff]
    %v3689 = vld [vmem:[#allocation11 + $0x40] sm:$0xff]
    %v3690 = vld [vmem:[#allocation11 + $0x48] sm:$0xff]
    %v3691 = vld [vmem:[#allocation11 + $0x50] sm:$0xff]
    %v3692 = vld [vmem:[#allocation11 + $0x58] sm:$0xff]
    %v3693 = vld [vmem:[#allocation11 + $0x60] sm:$0xff]
    %v3694 = vld [vmem:[#allocation11 + $0x68] sm:$0xff]
    %v3695 = vld [vmem:[#allocation11 + $0x70] sm:$0xff]
    %v3696 = vld [vmem:[#allocation11 + $0x78] sm:$0xff]
    %v3697 = vpack.c.bf16 %v3680, %v3680
    %s3698 = scalar_lea.vmem [#allocation13], 40
    %v3699 = vld [vmem:[%s3698] ss:$8 sm:$0x3]
    %v3716 = vunpack.c.l.b16 %v3681
    %v3717 = vunpack.c.h.b16 %v3681
    %v3718 = vunpack.c.l.b16 %v3682
    %v3719 = vunpack.c.h.b16 %v3682
    %v3720 = vunpack.c.l.b16 %v3683
    %v3721 = vunpack.c.h.b16 %v3683
    %v3722 = vunpack.c.l.b16 %v3684
    %v3723 = vunpack.c.h.b16 %v3684
    %v3724 = vunpack.c.l.b16 %v3685
    %v3725 = vunpack.c.h.b16 %v3685
    %v3726 = vunpack.c.l.b16 %v3686
    %v3727 = vunpack.c.h.b16 %v3686
    %v3728 = vunpack.c.l.b16 %v3687
    %v3729 = vunpack.c.h.b16 %v3687
    %v3730 = vunpack.c.l.b16 %v3688
    %v3731 = vunpack.c.h.b16 %v3688
    %v3732 = vunpack.c.l.b16 %v3689
    %v3733 = vunpack.c.h.b16 %v3689
    %v3734 = vunpack.c.l.b16 %v3690
    %v3735 = vunpack.c.h.b16 %v3690
    %v3736 = vunpack.c.l.b16 %v3691
    %v3737 = vunpack.c.h.b16 %v3691
    %v3738 = vunpack.c.l.b16 %v3692
    %v3739 = vunpack.c.h.b16 %v3692
    %v3740 = vunpack.c.l.b16 %v3693
    %v3741 = vunpack.c.h.b16 %v3693
    %v3742 = vunpack.c.l.b16 %v3694
    %v3743 = vunpack.c.h.b16 %v3694
    %v3744 = vunpack.c.l.b16 %v3695
    %v3745 = vunpack.c.h.b16 %v3695
    %v3746 = vunpack.c.l.b16 %v3696
    %v3747 = vunpack.c.h.b16 %v3696
    %v3748 = vpack.c.b16 %v3718, %v3716
    %v3749 = vpack.c.b16 %v3719, %v3717
    %v3750 = vpack.c.b16 %v3722, %v3720
    %v3751 = vpack.c.b16 %v3723, %v3721
    %v3752 = vpack.c.b16 %v3726, %v3724
    %v3753 = vpack.c.b16 %v3727, %v3725
    %v3754 = vpack.c.b16 %v3730, %v3728
    %v3755 = vpack.c.b16 %v3731, %v3729
    %v3756 = vpack.c.b16 %v3734, %v3732
    %v3757 = vpack.c.b16 %v3735, %v3733
    %v3758 = vpack.c.b16 %v3738, %v3736
    %v3759 = vpack.c.b16 %v3739, %v3737
    %v3760 = vpack.c.b16 %v3742, %v3740
    %v3761 = vpack.c.b16 %v3743, %v3741
    %v3762 = vpack.c.b16 %v3746, %v3744
    %v3763 = vpack.c.b16 %v3747, %v3745
    %v3781 = vlaneseq
    %v3782 = vshrl.u32 %v3781, 7
    %v3783 = vsub.s32 0, %v3782
    %v3784 = vrot.slane %v3699, %v3783
    %v3785 = vlaneseq
    %v3786 = vshrl.u32 %v3785, 7
    %v3787 = vsub.s32 1, %v3786
    %v3788 = vrot.slane %v3699, %v3787
    %3791 = vmatprep.subr.bf16.mxu0 %v3749
    %3792 = vmatpush1.bf16.msra.mxu0 %v3748
    %3793 = vmatprep.subr.bf16.mxu0 %v3751
    %3794 = vmatpush1.bf16.msra.mxu0 %v3750
    %3795 = vmatprep.subr.bf16.mxu0 %v3753
    %3796 = vmatpush1.bf16.msra.mxu0 %v3752
    %3797 = vmatprep.subr.bf16.mxu0 %v3755
    %3798 = vmatpush1.bf16.msra.mxu0 %v3754
    %3799 = vmatprep.subr.bf16.mxu0 %v3757
    %3800 = vmatpush1.bf16.msra.mxu0 %v3756
    %3801 = vmatprep.subr.bf16.mxu0 %v3759
    %3802 = vmatpush1.bf16.msra.mxu0 %v3758
    %3803 = vmatprep.subr.bf16.mxu0 %v3761
    %3804 = vmatpush1.bf16.msra.mxu0 %v3760
    %3805 = vmatprep.subr.bf16.mxu0 %v3763
    %3806 = vmatpush1.bf16.msra.mxu0 %v3762
    %3807 = vmatprep.subr.bf16.mxu0 0
    %3808 = vmatpush1.bf16.msra.mxu0 0
    %3809 = vmatprep.subr.bf16.mxu0 0
    %3810 = vmatpush1.bf16.msra.mxu0 0
    %3811 = vmatprep.subr.bf16.mxu0 0
    %3812 = vmatpush1.bf16.msra.mxu0 0
    %3813 = vmatprep.subr.bf16.mxu0 0
    %3814 = vmatpush1.bf16.msra.mxu0 0
    %3815 = vmatprep.subr.bf16.mxu0 0
    %3816 = vmatpush1.bf16.msra.mxu0 0
    %3817 = vmatprep.subr.bf16.mxu0 0
    %3818 = vmatpush1.bf16.msra.mxu0 0
    %3819 = vmatprep.subr.bf16.mxu0 0
    %3820 = vmatpush1.bf16.msra.mxu0 0
    %3821 = vmatprep.subr.bf16.mxu0 0
    %3822 = vmatpush1.bf16.msra.mxu0 0
    %3823 = vmatprep.mubr.bf16.mxu0 0
    %3824 = vmatmul.mubr.bf16.gmra.mrb[0].mxu0 %v3697
    %v3825 = vpop.f32.mrb[0].mxu0
    %v3826 = vadd.f32 %v3784, %v3825
    %v3827 = vpop.f32.mrb[0].mxu0
    %v3828 = vadd.f32 %v3788, %v3827
    %v3829 = vpop.f32.mrb[0].mxu0
    %v3830 = vpop.f32.mrb[0].mxu0
    %3831 = vdwg.mxu0
    %v3832 = vmax.f32 %v3826, 0.0
    %v3833 = vmax.f32 %v3828, 0.0
    %v3834 = vld [vmem:[#allocation14 + $0x10] sm:$0xf]
    %v3835 = vld [vmem:[#allocation14 + $0x24] sm:$0xf]
    %v3836 = vld [vmem:[#allocation14 + $0x38] sm:$0xf]
    %v3837 = vld [vmem:[#allocation14 + $0x4c] sm:$0xf]
    %v3838 = vld [vmem:[#allocation14 + $0x60] sm:$0xf]
    %v3839 = vld [vmem:[#allocation14 + $0x74] sm:$0xf]
    %v3840 = vld [vmem:[#allocation14 + $0x88] sm:$0xf]
    %v3841 = vld [vmem:[#allocation14 + $0x9c] sm:$0xf]
    %v3842 = vld [vmem:[#allocation14 + $0xb0] sm:$0xf]
    %v3843 = vld [vmem:[#allocation14 + $0xc4] sm:$0xf]
    %v3844 = vld [vmem:[#allocation14 + $0xd8] sm:$0xf]
    %v3845 = vld [vmem:[#allocation14 + $0xec] sm:$0xf]
    %v3846 = vld [vmem:[#allocation14 + $0x100] sm:$0xf]
    %v3847 = vld [vmem:[#allocation14 + $0x114] sm:$0xf]
    %v3848 = vld [vmem:[#allocation14 + $0x128] sm:$0xf]
    %v3849 = vld [vmem:[#allocation14 + $0x13c] sm:$0xf]
    %v3850 = vld [vmem:[#allocation14 + $0x150] sm:$0xf]
    %v3851 = vld [vmem:[#allocation14 + $0x164] sm:$0xf]
    %v3852 = vld [vmem:[#allocation14 + $0x178] sm:$0xf]
    %v3853 = vld [vmem:[#allocation14 + $0x18c] sm:$0xf]
    %v3854 = vld [vmem:[#allocation14 + $0x1a0] sm:$0xf]
    %v3855 = vld [vmem:[#allocation14 + $0x1b4] sm:$0xf]
    %v3856 = vld [vmem:[#allocation14 + $0x1c8] sm:$0xf]
    %v3857 = vld [vmem:[#allocation14 + $0x1dc] sm:$0xf]
    %v3858 = vld [vmem:[#allocation14 + $0x1f0] sm:$0xf]
    %v3859 = vld [vmem:[#allocation14 + $0x204] sm:$0xf]
    %v3860 = vld [vmem:[#allocation14 + $0x218] sm:$0xf]
    %v3861 = vld [vmem:[#allocation14 + $0x22c] sm:$0xf]
    %v3862 = vld [vmem:[#allocation14 + $0x240] sm:$0xf]
    %v3863 = vld [vmem:[#allocation14 + $0x254] sm:$0xf]
    %v3864 = vld [vmem:[#allocation14 + $0x268] sm:$0xf]
    %v3865 = vld [vmem:[#allocation14 + $0x27c] sm:$0xf]
    %v3866 = vpack.c.bf16 %v3832, %v3832
    %v3867 = vpack.c.bf16 %v3833, %v3833
    %v3900 = vunpack.c.l.b16 %v3834
    %v3901 = vunpack.c.l.b16 %v3835
    %v3902 = vunpack.c.l.b16 %v3836
    %v3903 = vunpack.c.l.b16 %v3837
    %v3904 = vunpack.c.l.b16 %v3838
    %v3905 = vunpack.c.l.b16 %v3839
    %v3906 = vunpack.c.l.b16 %v3840
    %v3907 = vunpack.c.l.b16 %v3841
    %v3908 = vunpack.c.l.b16 %v3842
    %v3909 = vunpack.c.l.b16 %v3843
    %v3910 = vunpack.c.l.b16 %v3844
    %v3911 = vunpack.c.l.b16 %v3845
    %v3912 = vunpack.c.l.b16 %v3846
    %v3913 = vunpack.c.l.b16 %v3847
    %v3914 = vunpack.c.l.b16 %v3848
    %v3915 = vunpack.c.l.b16 %v3849
    %v3916 = vunpack.c.l.b16 %v3850
    %v3917 = vunpack.c.l.b16 %v3851
    %v3918 = vunpack.c.l.b16 %v3852
    %v3919 = vunpack.c.l.b16 %v3853
    %v3920 = vunpack.c.l.b16 %v3854
    %v3921 = vunpack.c.l.b16 %v3855
    %v3922 = vunpack.c.l.b16 %v3856
    %v3923 = vunpack.c.l.b16 %v3857
    %v3924 = vunpack.c.l.b16 %v3858
    %v3925 = vunpack.c.l.b16 %v3859
    %v3926 = vunpack.c.l.b16 %v3860
    %v3927 = vunpack.c.l.b16 %v3861
    %v3928 = vunpack.c.l.b16 %v3862
    %v3929 = vunpack.c.l.b16 %v3863
    %v3930 = vunpack.c.l.b16 %v3864
    %v3931 = vunpack.c.l.b16 %v3865
    %v3932 = vpack.c.b16 %v3901, %v3900
    %v3933 = vpack.c.b16 %v3903, %v3902
    %v3934 = vpack.c.b16 %v3905, %v3904
    %v3935 = vpack.c.b16 %v3907, %v3906
    %v3936 = vpack.c.b16 %v3909, %v3908
    %v3937 = vpack.c.b16 %v3911, %v3910
    %v3938 = vpack.c.b16 %v3913, %v3912
    %v3939 = vpack.c.b16 %v3915, %v3914
    %v3940 = vpack.c.b16 %v3917, %v3916
    %v3941 = vpack.c.b16 %v3919, %v3918
    %v3942 = vpack.c.b16 %v3921, %v3920
    %v3943 = vpack.c.b16 %v3923, %v3922
    %v3944 = vpack.c.b16 %v3925, %v3924
    %v3945 = vpack.c.b16 %v3927, %v3926
    %v3946 = vpack.c.b16 %v3929, %v3928
    %v3947 = vpack.c.b16 %v3931, %v3930
    %3964 = vmatprep.subr.bf16.mxu0 0
    %3965 = vmatpush1.bf16.msra.mxu0 %v3932
    %3966 = vmatprep.subr.bf16.mxu0 0
    %3967 = vmatpush1.bf16.msra.mxu0 %v3933
    %3968 = vmatprep.subr.bf16.mxu0 0
    %3969 = vmatpush1.bf16.msra.mxu0 %v3934
    %3970 = vmatprep.subr.bf16.mxu0 0
    %3971 = vmatpush1.bf16.msra.mxu0 %v3935
    %3972 = vmatprep.subr.bf16.mxu0 0
    %3973 = vmatpush1.bf16.msra.mxu0 %v3936
    %3974 = vmatprep.subr.bf16.mxu0 0
    %3975 = vmatpush1.bf16.msra.mxu0 %v3937
    %3976 = vmatprep.subr.bf16.mxu0 0
    %3977 = vmatpush1.bf16.msra.mxu0 %v3938
    %3978 = vmatprep.subr.bf16.mxu0 0
    %3979 = vmatpush1.bf16.msra.mxu0 %v3939
    %3980 = vmatprep.subr.bf16.mxu0 0
    %3981 = vmatpush1.bf16.msra.mxu0 %v3940
    %3982 = vmatprep.subr.bf16.mxu0 0
    %3983 = vmatpush1.bf16.msra.mxu0 %v3941
    %3984 = vmatprep.subr.bf16.mxu0 0
    %3985 = vmatpush1.bf16.msra.mxu0 %v3942
    %3986 = vmatprep.subr.bf16.mxu0 0
    %3987 = vmatpush1.bf16.msra.mxu0 %v3943
    %3988 = vmatprep.subr.bf16.mxu0 0
    %3989 = vmatpush1.bf16.msra.mxu0 %v3944
    %3990 = vmatprep.subr.bf16.mxu0 0
    %3991 = vmatpush1.bf16.msra.mxu0 %v3945
    %3992 = vmatprep.subr.bf16.mxu0 0
    %3993 = vmatpush1.bf16.msra.mxu0 %v3946
    %3994 = vmatprep.subr.bf16.mxu0 0
    %3995 = vmatpush1.bf16.msra.mxu0 %v3947
    %3996 = vmatprep.mubr.bf16.mxu0 %v3867
    %3997 = vmatmul.mubr.bf16.gmra.mrb[0].mxu0 %v3866
    %v3998 = vpop.f32.mrb[0].mxu0
    %v3999 = vadd.f32 0.0, %v3998
    %v4000 = vpop.f32.mrb[0].mxu0
    %v4001 = vpop.f32.mrb[0].mxu0
    %v4002 = vpop.f32.mrb[0].mxu0
    %4003 = vdwg.mxu0
    %v4004 = vld [vmem:[#allocation13 + $0x29] ss:$0 sm:$0xff]
    %v4005 = vadd.f32 %v3999, %v4004
    %vm4006 = vcmask 24576
    %v4007 = vsel %vm4006, %v4005, -inf
    %4008 = vmax.xlane.f32.xlu0 %v4007
    %v4009 = vpop.xlane.xlu0 %4008
    %v4010 = vsub.f32 %v4005, %v4009
    %v4011 = vmul.f32 %v4010, 1.442695
    %v4012 = vpow.pop %v4011
    %v4013 = vsel %vm4006, %v4012, 0.0
    %4014 = vadd.xlane.f32.xlu0 %v4013
    %v4015 = vpop.xlane.xlu0 %4014
    %v4016 = vrcp.pop %v4015
    %v4017 = vmul.f32 %v4012, %v4016
    %v4018 = vld [vmem:[#allocation7 + $0x14] sm:$0xff]
    %v4020 = vcombine.high %v4018, %v4018
    %v4022 = vlaneseq
    %v4023 = vshrl.u32 %v4022, 7
    %v4024 = vsub.s32 0, %v4023
    %v4025 = vrot.slane %v806, %v4024
    %v4026 = vlaneseq
    %v4027 = vshrl.u32 %v4026, 7
    %v4028 = vsub.s32 1, %v4027
    %v4029 = vrot.slane %v806, %v4028
    %v4033 = vsel %vm156, %v4005, 0
    %v4035 = vsel %vm160, %v4018, 0
    %v4037 = vsel %vm160, %v4020, 0
    %4039 = vmatprep.subr.mxu0 %v4037
    %4040 = vmatpush1.msra.mxu0 %v4035
    %4041 = vmatprep.subr.mxu0 0.0
    %4042 = vmatpush1.msra.mxu0 0.0
    %4043 = vmatprep.subr.mxu0 0.0
    %4044 = vmatpush1.msra.mxu0 0.0
    %4045 = vmatprep.subr.mxu0 0.0
    %4046 = vmatpush1.msra.mxu0 0.0
    %4047 = vmatprep.subr.mxu0 0.0
    %4048 = vmatpush1.msra.mxu0 0.0
    %4049 = vmatprep.subr.mxu0 0.0
    %4050 = vmatpush1.msra.mxu0 0.0
    %4051 = vmatprep.subr.mxu0 0.0
    %4052 = vmatpush1.msra.mxu0 0.0
    %4053 = vmatprep.subr.mxu0 0.0
    %4054 = vmatpush1.msra.mxu0 0.0
    %4055 = vmatprep.subr.mxu0 0.0
    %4056 = vmatpush1.msra.mxu0 0.0
    %4057 = vmatprep.subr.mxu0 0.0
    %4058 = vmatpush1.msra.mxu0 0.0
    %4059 = vmatprep.subr.mxu0 0.0
    %4060 = vmatpush1.msra.mxu0 0.0
    %4061 = vmatprep.subr.mxu0 0.0
    %4062 = vmatpush1.msra.mxu0 0.0
    %4063 = vmatprep.subr.mxu0 0.0
    %4064 = vmatpush1.msra.mxu0 0.0
    %4065 = vmatprep.subr.mxu0 0.0
    %4066 = vmatpush1.msra.mxu0 0.0
    %4067 = vmatprep.subr.mxu0 0.0
    %4068 = vmatpush1.msra.mxu0 0.0
    %4069 = vmatprep.subr.mxu0 0.0
    %4070 = vmatpush1.msra.mxu0 0.0
    %4071 = vmatprep.subr.mxu0 0.0
    %4072 = vmatpush1.msra.mxu0 0.0
    %4073 = vmatprep.subr.mxu0 0.0
    %4074 = vmatpush1.msra.mxu0 0.0
    %4075 = vmatprep.subr.mxu0 0.0
    %4076 = vmatpush1.msra.mxu0 0.0
    %4077 = vmatprep.subr.mxu0 0.0
    %4078 = vmatpush1.msra.mxu0 0.0
    %4079 = vmatprep.subr.mxu0 0.0
    %4080 = vmatpush1.msra.mxu0 0.0
    %4081 = vmatprep.subr.mxu0 0.0
    %4082 = vmatpush1.msra.mxu0 0.0
    %4083 = vmatprep.subr.mxu0 0.0
    %4084 = vmatpush1.msra.mxu0 0.0
    %4085 = vmatprep.subr.mxu0 0.0
    %4086 = vmatpush1.msra.mxu0 0.0
    %4087 = vmatprep.subr.mxu0 0.0
    %4088 = vmatpush1.msra.mxu0 0.0
    %4089 = vmatprep.subr.mxu0 0.0
    %4090 = vmatpush1.msra.mxu0 0.0
    %4091 = vmatprep.subr.mxu0 0.0
    %4092 = vmatpush1.msra.mxu0 0.0
    %4093 = vmatprep.subr.mxu0 0.0
    %4094 = vmatpush1.msra.mxu0 0.0
    %4095 = vmatprep.subr.mxu0 0.0
    %4096 = vmatpush1.msra.mxu0 0.0
    %4097 = vmatprep.subr.mxu0 0.0
    %4098 = vmatpush1.msra.mxu0 0.0
    %4099 = vmatprep.subr.mxu0 0.0
    %4100 = vmatpush1.msra.mxu0 0.0
    %4101 = vmatprep.subr.mxu0 0.0
    %4102 = vmatpush1.msra.mxu0 0.0
    %4103 = vmatprep.mubr.f32.mxu0 0.0
    %4104 = vmatmul.mubr.f32.gmra.mrb[0].mxu0 %v4033
    %v4105 = vpop.f32.mrb[0].mxu0
    %v4106 = vadd.f32 %v4025, %v4105
    %v4107 = vpop.f32.mrb[0].mxu0
    %v4108 = vadd.f32 %v4029, %v4107
    %4109 = vdwg.mxu0
    %v4110 = vmax.f32 %v4106, 0.0
    %v4111 = vmax.f32 %v4108, 0.0
    %v4112 = vld [vmem:[#allocation14] sm:$0xff]
    %v4113 = vld [vmem:[#allocation14 + $0x8] sm:$0xff]
    %v4114 = vld [vmem:[#allocation14 + $0x14] sm:$0xff]
    %v4115 = vld [vmem:[#allocation14 + $0x1c] sm:$0xff]
    %v4116 = vld [vmem:[#allocation14 + $0x28] sm:$0xff]
    %v4117 = vld [vmem:[#allocation14 + $0x30] sm:$0xff]
    %v4118 = vld [vmem:[#allocation14 + $0x3c] sm:$0xff]
    %v4119 = vld [vmem:[#allocation14 + $0x44] sm:$0xff]
    %v4120 = vld [vmem:[#allocation14 + $0x50] sm:$0xff]
    %v4121 = vld [vmem:[#allocation14 + $0x58] sm:$0xff]
    %v4122 = vld [vmem:[#allocation14 + $0x64] sm:$0xff]
    %v4123 = vld [vmem:[#allocation14 + $0x6c] sm:$0xff]
    %v4124 = vld [vmem:[#allocation14 + $0x78] sm:$0xff]
    %v4125 = vld [vmem:[#allocation14 + $0x80] sm:$0xff]
    %v4126 = vld [vmem:[#allocation14 + $0x8c] sm:$0xff]
    %v4127 = vld [vmem:[#allocation14 + $0x94] sm:$0xff]
    %v4128 = vld [vmem:[#allocation14 + $0xa0] sm:$0xff]
    %v4129 = vld [vmem:[#allocation14 + $0xa8] sm:$0xff]
    %v4130 = vld [vmem:[#allocation14 + $0xb4] sm:$0xff]
    %v4131 = vld [vmem:[#allocation14 + $0xbc] sm:$0xff]
    %v4132 = vld [vmem:[#allocation14 + $0xc8] sm:$0xff]
    %v4133 = vld [vmem:[#allocation14 + $0xd0] sm:$0xff]
    %v4134 = vld [vmem:[#allocation14 + $0xdc] sm:$0xff]
    %v4135 = vld [vmem:[#allocation14 + $0xe4] sm:$0xff]
    %v4136 = vld [vmem:[#allocation14 + $0xf0] sm:$0xff]
    %v4137 = vld [vmem:[#allocation14 + $0xf8] sm:$0xff]
    %v4138 = vld [vmem:[#allocation14 + $0x104] sm:$0xff]
    %v4139 = vld [vmem:[#allocation14 + $0x10c] sm:$0xff]
    %v4140 = vld [vmem:[#allocation14 + $0x118] sm:$0xff]
    %v4141 = vld [vmem:[#allocation14 + $0x120] sm:$0xff]
    %v4142 = vld [vmem:[#allocation14 + $0x12c] sm:$0xff]
    %v4143 = vld [vmem:[#allocation14 + $0x134] sm:$0xff]
    %v4144 = vld [vmem:[#allocation14 + $0x140] sm:$0xff]
    %v4145 = vld [vmem:[#allocation14 + $0x148] sm:$0xff]
    %v4146 = vld [vmem:[#allocation14 + $0x154] sm:$0xff]
    %v4147 = vld [vmem:[#allocation14 + $0x15c] sm:$0xff]
    %v4148 = vld [vmem:[#allocation14 + $0x168] sm:$0xff]
    %v4149 = vld [vmem:[#allocation14 + $0x170] sm:$0xff]
    %v4150 = vld [vmem:[#allocation14 + $0x17c] sm:$0xff]
    %v4151 = vld [vmem:[#allocation14 + $0x184] sm:$0xff]
    %v4152 = vld [vmem:[#allocation14 + $0x190] sm:$0xff]
    %v4153 = vld [vmem:[#allocation14 + $0x198] sm:$0xff]
    %v4154 = vld [vmem:[#allocation14 + $0x1a4] sm:$0xff]
    %v4155 = vld [vmem:[#allocation14 + $0x1ac] sm:$0xff]
    %v4156 = vld [vmem:[#allocation14 + $0x1b8] sm:$0xff]
    %v4157 = vld [vmem:[#allocation14 + $0x1c0] sm:$0xff]
    %v4158 = vld [vmem:[#allocation14 + $0x1cc] sm:$0xff]
    %v4159 = vld [vmem:[#allocation14 + $0x1d4] sm:$0xff]
    %v4160 = vld [vmem:[#allocation14 + $0x1e0] sm:$0xff]
    %v4161 = vld [vmem:[#allocation14 + $0x1e8] sm:$0xff]
    %v4162 = vld [vmem:[#allocation14 + $0x1f4] sm:$0xff]
    %v4163 = vld [vmem:[#allocation14 + $0x1fc] sm:$0xff]
    %v4164 = vld [vmem:[#allocation14 + $0x208] sm:$0xff]
    %v4165 = vld [vmem:[#allocation14 + $0x210] sm:$0xff]
    %v4166 = vld [vmem:[#allocation14 + $0x21c] sm:$0xff]
    %v4167 = vld [vmem:[#allocation14 + $0x224] sm:$0xff]
    %v4168 = vld [vmem:[#allocation14 + $0x230] sm:$0xff]
    %v4169 = vld [vmem:[#allocation14 + $0x238] sm:$0xff]
    %v4170 = vld [vmem:[#allocation14 + $0x244] sm:$0xff]
    %v4171 = vld [vmem:[#allocation14 + $0x24c] sm:$0xff]
    %v4172 = vld [vmem:[#allocation14 + $0x258] sm:$0xff]
    %v4173 = vld [vmem:[#allocation14 + $0x260] sm:$0xff]
    %v4174 = vld [vmem:[#allocation14 + $0x26c] sm:$0xff]
    %v4175 = vld [vmem:[#allocation14 + $0x274] sm:$0xff]
    %v4176 = vpack.c.bf16 %v4110, %v4110
    %v4177 = vpack.c.bf16 %v4111, %v4111
    %s4178 = scalar_lea.vmem [#allocation13], 42
    %v4179 = vld [vmem:[%s4178] ss:$8 sm:$0xf]
    %v4244 = vunpack.c.l.b16 %v4112
    %v4245 = vunpack.c.h.b16 %v4112
    %v4246 = vunpack.c.l.b16 %v4113
    %v4247 = vunpack.c.h.b16 %v4113
    %v4248 = vunpack.c.l.b16 %v4114
    %v4249 = vunpack.c.h.b16 %v4114
    %v4250 = vunpack.c.l.b16 %v4115
    %v4251 = vunpack.c.h.b16 %v4115
    %v4252 = vunpack.c.l.b16 %v4116
    %v4253 = vunpack.c.h.b16 %v4116
    %v4254 = vunpack.c.l.b16 %v4117
    %v4255 = vunpack.c.h.b16 %v4117
    %v4256 = vunpack.c.l.b16 %v4118
    %v4257 = vunpack.c.h.b16 %v4118
    %v4258 = vunpack.c.l.b16 %v4119
    %v4259 = vunpack.c.h.b16 %v4119
    %v4260 = vunpack.c.l.b16 %v4120
    %v4261 = vunpack.c.h.b16 %v4120
    %v4262 = vunpack.c.l.b16 %v4121
    %v4263 = vunpack.c.h.b16 %v4121
    %v4264 = vunpack.c.l.b16 %v4122
    %v4265 = vunpack.c.h.b16 %v4122
    %v4266 = vunpack.c.l.b16 %v4123
    %v4267 = vunpack.c.h.b16 %v4123
    %v4268 = vunpack.c.l.b16 %v4124
    %v4269 = vunpack.c.h.b16 %v4124
    %v4270 = vunpack.c.l.b16 %v4125
    %v4271 = vunpack.c.h.b16 %v4125
    %v4272 = vunpack.c.l.b16 %v4126
    %v4273 = vunpack.c.h.b16 %v4126
    %v4274 = vunpack.c.l.b16 %v4127
    %v4275 = vunpack.c.h.b16 %v4127
    %v4276 = vunpack.c.l.b16 %v4128
    %v4277 = vunpack.c.h.b16 %v4128
    %v4278 = vunpack.c.l.b16 %v4129
    %v4279 = vunpack.c.h.b16 %v4129
    %v4280 = vunpack.c.l.b16 %v4130
    %v4281 = vunpack.c.h.b16 %v4130
    %v4282 = vunpack.c.l.b16 %v4131
    %v4283 = vunpack.c.h.b16 %v4131
    %v4284 = vunpack.c.l.b16 %v4132
    %v4285 = vunpack.c.h.b16 %v4132
    %v4286 = vunpack.c.l.b16 %v4133
    %v4287 = vunpack.c.h.b16 %v4133
    %v4288 = vunpack.c.l.b16 %v4134
    %v4289 = vunpack.c.h.b16 %v4134
    %v4290 = vunpack.c.l.b16 %v4135
    %v4291 = vunpack.c.h.b16 %v4135
    %v4292 = vunpack.c.l.b16 %v4136
    %v4293 = vunpack.c.h.b16 %v4136
    %v4294 = vunpack.c.l.b16 %v4137
    %v4295 = vunpack.c.h.b16 %v4137
    %v4296 = vunpack.c.l.b16 %v4138
    %v4297 = vunpack.c.h.b16 %v4138
    %v4298 = vunpack.c.l.b16 %v4139
    %v4299 = vunpack.c.h.b16 %v4139
    %v4300 = vunpack.c.l.b16 %v4140
    %v4301 = vunpack.c.h.b16 %v4140
    %v4302 = vunpack.c.l.b16 %v4141
    %v4303 = vunpack.c.h.b16 %v4141
    %v4304 = vunpack.c.l.b16 %v4142
    %v4305 = vunpack.c.h.b16 %v4142
    %v4306 = vunpack.c.l.b16 %v4143
    %v4307 = vunpack.c.h.b16 %v4143
    %v4308 = vunpack.c.l.b16 %v4144
    %v4309 = vunpack.c.h.b16 %v4144
    %v4310 = vunpack.c.l.b16 %v4145
    %v4311 = vunpack.c.h.b16 %v4145
    %v4312 = vunpack.c.l.b16 %v4146
    %v4313 = vunpack.c.h.b16 %v4146
    %v4314 = vunpack.c.l.b16 %v4147
    %v4315 = vunpack.c.h.b16 %v4147
    %v4316 = vunpack.c.l.b16 %v4148
    %v4317 = vunpack.c.h.b16 %v4148
    %v4318 = vunpack.c.l.b16 %v4149
    %v4319 = vunpack.c.h.b16 %v4149
    %v4320 = vunpack.c.l.b16 %v4150
    %v4321 = vunpack.c.h.b16 %v4150
    %v4322 = vunpack.c.l.b16 %v4151
    %v4323 = vunpack.c.h.b16 %v4151
    %v4324 = vunpack.c.l.b16 %v4152
    %v4325 = vunpack.c.h.b16 %v4152
    %v4326 = vunpack.c.l.b16 %v4153
    %v4327 = vunpack.c.h.b16 %v4153
    %v4328 = vunpack.c.l.b16 %v4154
    %v4329 = vunpack.c.h.b16 %v4154
    %v4330 = vunpack.c.l.b16 %v4155
    %v4331 = vunpack.c.h.b16 %v4155
    %v4332 = vunpack.c.l.b16 %v4156
    %v4333 = vunpack.c.h.b16 %v4156
    %v4334 = vunpack.c.l.b16 %v4157
    %v4335 = vunpack.c.h.b16 %v4157
    %v4336 = vunpack.c.l.b16 %v4158
    %v4337 = vunpack.c.h.b16 %v4158
    %v4338 = vunpack.c.l.b16 %v4159
    %v4339 = vunpack.c.h.b16 %v4159
    %v4340 = vunpack.c.l.b16 %v4160
    %v4341 = vunpack.c.h.b16 %v4160
    %v4342 = vunpack.c.l.b16 %v4161
    %v4343 = vunpack.c.h.b16 %v4161
    %v4344 = vunpack.c.l.b16 %v4162
    %v4345 = vunpack.c.h.b16 %v4162
    %v4346 = vunpack.c.l.b16 %v4163
    %v4347 = vunpack.c.h.b16 %v4163
    %v4348 = vunpack.c.l.b16 %v4164
    %v4349 = vunpack.c.h.b16 %v4164
    %v4350 = vunpack.c.l.b16 %v4165
    %v4351 = vunpack.c.h.b16 %v4165
    %v4352 = vunpack.c.l.b16 %v4166
    %v4353 = vunpack.c.h.b16 %v4166
    %v4354 = vunpack.c.l.b16 %v4167
    %v4355 = vunpack.c.h.b16 %v4167
    %v4356 = vunpack.c.l.b16 %v4168
    %v4357 = vunpack.c.h.b16 %v4168
    %v4358 = vunpack.c.l.b16 %v4169
    %v4359 = vunpack.c.h.b16 %v4169
    %v4360 = vunpack.c.l.b16 %v4170
    %v4361 = vunpack.c.h.b16 %v4170
    %v4362 = vunpack.c.l.b16 %v4171
    %v4363 = vunpack.c.h.b16 %v4171
    %v4364 = vunpack.c.l.b16 %v4172
    %v4365 = vunpack.c.h.b16 %v4172
    %v4366 = vunpack.c.l.b16 %v4173
    %v4367 = vunpack.c.h.b16 %v4173
    %v4368 = vunpack.c.l.b16 %v4174
    %v4369 = vunpack.c.h.b16 %v4174
    %v4370 = vunpack.c.l.b16 %v4175
    %v4371 = vunpack.c.h.b16 %v4175
    %v4372 = vpack.c.b16 %v4248, %v4244
    %v4373 = vpack.c.b16 %v4249, %v4245
    %v4374 = vpack.c.b16 %v4250, %v4246
    %v4375 = vpack.c.b16 %v4251, %v4247
    %v4376 = vpack.c.b16 %v4256, %v4252
    %v4377 = vpack.c.b16 %v4257, %v4253
    %v4378 = vpack.c.b16 %v4258, %v4254
    %v4379 = vpack.c.b16 %v4259, %v4255
    %v4380 = vpack.c.b16 %v4264, %v4260
    %v4381 = vpack.c.b16 %v4265, %v4261
    %v4382 = vpack.c.b16 %v4266, %v4262
    %v4383 = vpack.c.b16 %v4267, %v4263
    %v4384 = vpack.c.b16 %v4272, %v4268
    %v4385 = vpack.c.b16 %v4273, %v4269
    %v4386 = vpack.c.b16 %v4274, %v4270
    %v4387 = vpack.c.b16 %v4275, %v4271
    %v4388 = vpack.c.b16 %v4280, %v4276
    %v4389 = vpack.c.b16 %v4281, %v4277
    %v4390 = vpack.c.b16 %v4282, %v4278
    %v4391 = vpack.c.b16 %v4283, %v4279
    %v4392 = vpack.c.b16 %v4288, %v4284
    %v4393 = vpack.c.b16 %v4289, %v4285
    %v4394 = vpack.c.b16 %v4290, %v4286
    %v4395 = vpack.c.b16 %v4291, %v4287
    %v4396 = vpack.c.b16 %v4296, %v4292
    %v4397 = vpack.c.b16 %v4297, %v4293
    %v4398 = vpack.c.b16 %v4298, %v4294
    %v4399 = vpack.c.b16 %v4299, %v4295
    %v4400 = vpack.c.b16 %v4304, %v4300
    %v4401 = vpack.c.b16 %v4305, %v4301
    %v4402 = vpack.c.b16 %v4306, %v4302
    %v4403 = vpack.c.b16 %v4307, %v4303
    %v4404 = vpack.c.b16 %v4312, %v4308
    %v4405 = vpack.c.b16 %v4313, %v4309
    %v4406 = vpack.c.b16 %v4314, %v4310
    %v4407 = vpack.c.b16 %v4315, %v4311
    %v4408 = vpack.c.b16 %v4320, %v4316
    %v4409 = vpack.c.b16 %v4321, %v4317
    %v4410 = vpack.c.b16 %v4322, %v4318
    %v4411 = vpack.c.b16 %v4323, %v4319
    %v4412 = vpack.c.b16 %v4328, %v4324
    %v4413 = vpack.c.b16 %v4329, %v4325
    %v4414 = vpack.c.b16 %v4330, %v4326
    %v4415 = vpack.c.b16 %v4331, %v4327
    %v4416 = vpack.c.b16 %v4336, %v4332
    %v4417 = vpack.c.b16 %v4337, %v4333
    %v4418 = vpack.c.b16 %v4338, %v4334
    %v4419 = vpack.c.b16 %v4339, %v4335
    %v4420 = vpack.c.b16 %v4344, %v4340
    %v4421 = vpack.c.b16 %v4345, %v4341
    %v4422 = vpack.c.b16 %v4346, %v4342
    %v4423 = vpack.c.b16 %v4347, %v4343
    %v4424 = vpack.c.b16 %v4352, %v4348
    %v4425 = vpack.c.b16 %v4353, %v4349
    %v4426 = vpack.c.b16 %v4354, %v4350
    %v4427 = vpack.c.b16 %v4355, %v4351
    %v4428 = vpack.c.b16 %v4360, %v4356
    %v4429 = vpack.c.b16 %v4361, %v4357
    %v4430 = vpack.c.b16 %v4362, %v4358
    %v4431 = vpack.c.b16 %v4363, %v4359
    %v4432 = vpack.c.b16 %v4368, %v4364
    %v4433 = vpack.c.b16 %v4369, %v4365
    %v4434 = vpack.c.b16 %v4370, %v4366
    %v4435 = vpack.c.b16 %v4371, %v4367
    %v4501 = vlaneseq
    %v4502 = vshrl.u32 %v4501, 7
    %v4503 = vsub.s32 0, %v4502
    %v4504 = vrot.slane %v4179, %v4503
    %v4505 = vlaneseq
    %v4506 = vshrl.u32 %v4505, 7
    %v4507 = vsub.s32 1, %v4506
    %v4508 = vrot.slane %v4179, %v4507
    %v4509 = vlaneseq
    %v4510 = vshrl.u32 %v4509, 7
    %v4511 = vsub.s32 2, %v4510
    %v4512 = vrot.slane %v4179, %v4511
    %v4513 = vlaneseq
    %v4514 = vshrl.u32 %v4513, 7
    %v4515 = vsub.s32 3, %v4514
    %v4516 = vrot.slane %v4179, %v4515
    %4521 = vmatprep.subr.bf16.mxu0 %v4373
    %4522 = vmatpush1.bf16.msra.mxu0 %v4372
    %4523 = vmatprep.subr.bf16.mxu0 %v4377
    %4524 = vmatpush1.bf16.msra.mxu0 %v4376
    %4525 = vmatprep.subr.bf16.mxu0 %v4381
    %4526 = vmatpush1.bf16.msra.mxu0 %v4380
    %4527 = vmatprep.subr.bf16.mxu0 %v4385
    %4528 = vmatpush1.bf16.msra.mxu0 %v4384
    %4529 = vmatprep.subr.bf16.mxu0 %v4389
    %4530 = vmatpush1.bf16.msra.mxu0 %v4388
    %4531 = vmatprep.subr.bf16.mxu0 %v4393
    %4532 = vmatpush1.bf16.msra.mxu0 %v4392
    %4533 = vmatprep.subr.bf16.mxu0 %v4397
    %4534 = vmatpush1.bf16.msra.mxu0 %v4396
    %4535 = vmatprep.subr.bf16.mxu0 %v4401
    %4536 = vmatpush1.bf16.msra.mxu0 %v4400
    %4537 = vmatprep.subr.bf16.mxu0 %v4405
    %4538 = vmatpush1.bf16.msra.mxu0 %v4404
    %4539 = vmatprep.subr.bf16.mxu0 %v4409
    %4540 = vmatpush1.bf16.msra.mxu0 %v4408
    %4541 = vmatprep.subr.bf16.mxu0 %v4413
    %4542 = vmatpush1.bf16.msra.mxu0 %v4412
    %4543 = vmatprep.subr.bf16.mxu0 %v4417
    %4544 = vmatpush1.bf16.msra.mxu0 %v4416
    %4545 = vmatprep.subr.bf16.mxu0 %v4421
    %4546 = vmatpush1.bf16.msra.mxu0 %v4420
    %4547 = vmatprep.subr.bf16.mxu0 %v4425
    %4548 = vmatpush1.bf16.msra.mxu0 %v4424
    %4549 = vmatprep.subr.bf16.mxu0 %v4429
    %4550 = vmatpush1.bf16.msra.mxu0 %v4428
    %4551 = vmatprep.subr.bf16.mxu0 %v4433
    %4552 = vmatpush1.bf16.msra.mxu0 %v4432
    %4553 = vmatprep.mubr.bf16.mxu0 %v4177
    %4554 = vmatmul.mubr.bf16.gmra.mrb[0].mxu0 %v4176
    %v4555 = vpop.f32.mrb[0].mxu0
    %v4556 = vadd.f32 %v4504, %v4555
    %v4557 = vpop.f32.mrb[0].mxu0
    %v4558 = vadd.f32 %v4508, %v4557
    %v4559 = vpop.f32.mrb[0].mxu0
    %v4560 = vpop.f32.mrb[0].mxu0
    %4561 = vdwg.mxu0
    %4562 = vmatprep.subr.bf16.mxu0 %v4375
    %4563 = vmatpush1.bf16.msra.mxu0 %v4374
    %4564 = vmatprep.subr.bf16.mxu0 %v4379
    %4565 = vmatpush1.bf16.msra.mxu0 %v4378
    %4566 = vmatprep.subr.bf16.mxu0 %v4383
    %4567 = vmatpush1.bf16.msra.mxu0 %v4382
    %4568 = vmatprep.subr.bf16.mxu0 %v4387
    %4569 = vmatpush1.bf16.msra.mxu0 %v4386
    %4570 = vmatprep.subr.bf16.mxu0 %v4391
    %4571 = vmatpush1.bf16.msra.mxu0 %v4390
    %4572 = vmatprep.subr.bf16.mxu0 %v4395
    %4573 = vmatpush1.bf16.msra.mxu0 %v4394
    %4574 = vmatprep.subr.bf16.mxu0 %v4399
    %4575 = vmatpush1.bf16.msra.mxu0 %v4398
    %4576 = vmatprep.subr.bf16.mxu0 %v4403
    %4577 = vmatpush1.bf16.msra.mxu0 %v4402
    %4578 = vmatprep.subr.bf16.mxu0 %v4407
    %4579 = vmatpush1.bf16.msra.mxu0 %v4406
    %4580 = vmatprep.subr.bf16.mxu0 %v4411
    %4581 = vmatpush1.bf16.msra.mxu0 %v4410
    %4582 = vmatprep.subr.bf16.mxu0 %v4415
    %4583 = vmatpush1.bf16.msra.mxu0 %v4414
    %4584 = vmatprep.subr.bf16.mxu0 %v4419
    %4585 = vmatpush1.bf16.msra.mxu0 %v4418
    %4586 = vmatprep.subr.bf16.mxu0 %v4423
    %4587 = vmatpush1.bf16.msra.mxu0 %v4422
    %4588 = vmatprep.subr.bf16.mxu0 %v4427
    %4589 = vmatpush1.bf16.msra.mxu0 %v4426
    %4590 = vmatprep.subr.bf16.mxu0 %v4431
    %4591 = vmatpush1.bf16.msra.mxu0 %v4430
    %4592 = vmatprep.subr.bf16.mxu0 %v4435
    %4593 = vmatpush1.bf16.msra.mxu0 %v4434
    %4594 = vmatprep.mubr.bf16.mxu0 %v4177
    %4595 = vmatmul.mubr.bf16.gmra.mrb[0].mxu0 %v4176
    %v4596 = vpop.f32.mrb[0].mxu0
    %v4597 = vadd.f32 %v4512, %v4596
    %v4598 = vpop.f32.mrb[0].mxu0
    %v4599 = vadd.f32 %v4516, %v4598
    %v4600 = vpop.f32.mrb[0].mxu0
    %v4601 = vpop.f32.mrb[0].mxu0
    %4602 = vdwg.mxu0
    %v4603 = vmax.f32 %v4556, 0.0
    %v4604 = vmax.f32 %v4558, 0.0
    %v4605 = vmax.f32 %v4597, 0.0
    %v4606 = vmax.f32 %v4599, 0.0
    %v4607 = vld [vmem:[#allocation16] sm:$0xff]
    %v4608 = vld [vmem:[#allocation16 + $0x8] sm:$0xff]
    %v4609 = vld [vmem:[#allocation16 + $0x10] sm:$0xf]
    %v4610 = vld [vmem:[#allocation16 + $0x14] sm:$0xff]
    %v4611 = vld [vmem:[#allocation16 + $0x1c] sm:$0xff]
    %v4612 = vld [vmem:[#allocation16 + $0x24] sm:$0xf]
    %v4613 = vld [vmem:[#allocation16 + $0x28] sm:$0xff]
    %v4614 = vld [vmem:[#allocation16 + $0x30] sm:$0xff]
    %v4615 = vld [vmem:[#allocation16 + $0x38] sm:$0xf]
    %v4616 = vld [vmem:[#allocation16 + $0x3c] sm:$0xff]
    %v4617 = vld [vmem:[#allocation16 + $0x44] sm:$0xff]
    %v4618 = vld [vmem:[#allocation16 + $0x4c] sm:$0xf]
    %v4619 = vld [vmem:[#allocation16 + $0x50] sm:$0xff]
    %v4620 = vld [vmem:[#allocation16 + $0x58] sm:$0xff]
    %v4621 = vld [vmem:[#allocation16 + $0x60] sm:$0xf]
    %v4622 = vld [vmem:[#allocation16 + $0x64] sm:$0xff]
    %v4623 = vld [vmem:[#allocation16 + $0x6c] sm:$0xff]
    %v4624 = vld [vmem:[#allocation16 + $0x74] sm:$0xf]
    %v4625 = vld [vmem:[#allocation16 + $0x78] sm:$0xff]
    %v4626 = vld [vmem:[#allocation16 + $0x80] sm:$0xff]
    %v4627 = vld [vmem:[#allocation16 + $0x88] sm:$0xf]
    %v4628 = vld [vmem:[#allocation16 + $0x8c] sm:$0xff]
    %v4629 = vld [vmem:[#allocation16 + $0x94] sm:$0xff]
    %v4630 = vld [vmem:[#allocation16 + $0x9c] sm:$0xf]
    %v4631 = vld [vmem:[#allocation16 + $0xa0] sm:$0xff]
    %v4632 = vld [vmem:[#allocation16 + $0xa8] sm:$0xff]
    %v4633 = vld [vmem:[#allocation16 + $0xb0] sm:$0xf]
    %v4634 = vld [vmem:[#allocation16 + $0xb4] sm:$0xff]
    %v4635 = vld [vmem:[#allocation16 + $0xbc] sm:$0xff]
    %v4636 = vld [vmem:[#allocation16 + $0xc4] sm:$0xf]
    %v4637 = vld [vmem:[#allocation16 + $0xc8] sm:$0xff]
    %v4638 = vld [vmem:[#allocation16 + $0xd0] sm:$0xff]
    %v4639 = vld [vmem:[#allocation16 + $0xd8] sm:$0xf]
    %v4640 = vld [vmem:[#allocation16 + $0xdc] sm:$0xff]
    %v4641 = vld [vmem:[#allocation16 + $0xe4] sm:$0xff]
    %v4642 = vld [vmem:[#allocation16 + $0xec] sm:$0xf]
    %v4643 = vld [vmem:[#allocation16 + $0xf0] sm:$0xff]
    %v4644 = vld [vmem:[#allocation16 + $0xf8] sm:$0xff]
    %v4645 = vld [vmem:[#allocation16 + $0x100] sm:$0xf]
    %v4646 = vld [vmem:[#allocation16 + $0x104] sm:$0xff]
    %v4647 = vld [vmem:[#allocation16 + $0x10c] sm:$0xff]
    %v4648 = vld [vmem:[#allocation16 + $0x114] sm:$0xf]
    %v4649 = vld [vmem:[#allocation16 + $0x118] sm:$0xff]
    %v4650 = vld [vmem:[#allocation16 + $0x120] sm:$0xff]
    %v4651 = vld [vmem:[#allocation16 + $0x128] sm:$0xf]
    %v4652 = vld [vmem:[#allocation16 + $0x12c] sm:$0xff]
    %v4653 = vld [vmem:[#allocation16 + $0x134] sm:$0xff]
    %v4654 = vld [vmem:[#allocation16 + $0x13c] sm:$0xf]
    %v4655 = vld [vmem:[#allocation16 + $0x140] sm:$0xff]
    %v4656 = vld [vmem:[#allocation16 + $0x148] sm:$0xff]
    %v4657 = vld [vmem:[#allocation16 + $0x150] sm:$0xf]
    %v4658 = vld [vmem:[#allocation16 + $0x154] sm:$0xff]
    %v4659 = vld [vmem:[#allocation16 + $0x15c] sm:$0xff]
    %v4660 = vld [vmem:[#allocation16 + $0x164] sm:$0xf]
    %v4661 = vld [vmem:[#allocation16 + $0x168] sm:$0xff]
    %v4662 = vld [vmem:[#allocation16 + $0x170] sm:$0xff]
    %v4663 = vld [vmem:[#allocation16 + $0x178] sm:$0xf]
    %v4664 = vld [vmem:[#allocation16 + $0x17c] sm:$0xff]
    %v4665 = vld [vmem:[#allocation16 + $0x184] sm:$0xff]
    %v4666 = vld [vmem:[#allocation16 + $0x18c] sm:$0xf]
    %v4667 = vld [vmem:[#allocation16 + $0x190] sm:$0xff]
    %v4668 = vld [vmem:[#allocation16 + $0x198] sm:$0xff]
    %v4669 = vld [vmem:[#allocation16 + $0x1a0] sm:$0xf]
    %v4670 = vld [vmem:[#allocation16 + $0x1a4] sm:$0xff]
    %v4671 = vld [vmem:[#allocation16 + $0x1ac] sm:$0xff]
    %v4672 = vld [vmem:[#allocation16 + $0x1b4] sm:$0xf]
    %v4673 = vld [vmem:[#allocation16 + $0x1b8] sm:$0xff]
    %v4674 = vld [vmem:[#allocation16 + $0x1c0] sm:$0xff]
    %v4675 = vld [vmem:[#allocation16 + $0x1c8] sm:$0xf]
    %v4676 = vld [vmem:[#allocation16 + $0x1cc] sm:$0xff]
    %v4677 = vld [vmem:[#allocation16 + $0x1d4] sm:$0xff]
    %v4678 = vld [vmem:[#allocation16 + $0x1dc] sm:$0xf]
    %v4679 = vld [vmem:[#allocation16 + $0x1e0] sm:$0xff]
    %v4680 = vld [vmem:[#allocation16 + $0x1e8] sm:$0xff]
    %v4681 = vld [vmem:[#allocation16 + $0x1f0] sm:$0xf]
    %v4682 = vld [vmem:[#allocation16 + $0x1f4] sm:$0xff]
    %v4683 = vld [vmem:[#allocation16 + $0x1fc] sm:$0xff]
    %v4684 = vld [vmem:[#allocation16 + $0x204] sm:$0xf]
    %v4685 = vld [vmem:[#allocation16 + $0x208] sm:$0xff]
    %v4686 = vld [vmem:[#allocation16 + $0x210] sm:$0xff]
    %v4687 = vld [vmem:[#allocation16 + $0x218] sm:$0xf]
    %v4688 = vld [vmem:[#allocation16 + $0x21c] sm:$0xff]
    %v4689 = vld [vmem:[#allocation16 + $0x224] sm:$0xff]
    %v4690 = vld [vmem:[#allocation16 + $0x22c] sm:$0xf]
    %v4691 = vld [vmem:[#allocation16 + $0x230] sm:$0xff]
    %v4692 = vld [vmem:[#allocation16 + $0x238] sm:$0xff]
    %v4693 = vld [vmem:[#allocation16 + $0x240] sm:$0xf]
    %v4694 = vld [vmem:[#allocation16 + $0x244] sm:$0xff]
    %v4695 = vld [vmem:[#allocation16 + $0x24c] sm:$0xff]
    %v4696 = vld [vmem:[#allocation16 + $0x254] sm:$0xf]
    %v4697 = vld [vmem:[#allocation16 + $0x258] sm:$0xff]
    %v4698 = vld [vmem:[#allocation16 + $0x260] sm:$0xff]
    %v4699 = vld [vmem:[#allocation16 + $0x268] sm:$0xf]
    %v4700 = vld [vmem:[#allocation16 + $0x26c] sm:$0xff]
    %v4701 = vld [vmem:[#allocation16 + $0x274] sm:$0xff]
    %v4702 = vld [vmem:[#allocation16 + $0x27c] sm:$0xf]
    %v4703 = vld [vmem:[#allocation16 + $0x280] sm:$0xff]
    %v4704 = vld [vmem:[#allocation16 + $0x288] sm:$0xff]
    %v4705 = vld [vmem:[#allocation16 + $0x290] sm:$0xf]
    %v4706 = vld [vmem:[#allocation16 + $0x294] sm:$0xff]
    %v4707 = vld [vmem:[#allocation16 + $0x29c] sm:$0xff]
    %v4708 = vld [vmem:[#allocation16 + $0x2a4] sm:$0xf]
    %v4709 = vld [vmem:[#allocation16 + $0x2a8] sm:$0xff]
    %v4710 = vld [vmem:[#allocation16 + $0x2b0] sm:$0xff]
    %v4711 = vld [vmem:[#allocation16 + $0x2b8] sm:$0xf]
    %v4712 = vld [vmem:[#allocation16 + $0x2bc] sm:$0xff]
    %v4713 = vld [vmem:[#allocation16 + $0x2c4] sm:$0xff]
    %v4714 = vld [vmem:[#allocation16 + $0x2cc] sm:$0xf]
    %v4715 = vld [vmem:[#allocation16 + $0x2d0] sm:$0xff]
    %v4716 = vld [vmem:[#allocation16 + $0x2d8] sm:$0xff]
    %v4717 = vld [vmem:[#allocation16 + $0x2e0] sm:$0xf]
    %v4718 = vld [vmem:[#allocation16 + $0x2e4] sm:$0xff]
    %v4719 = vld [vmem:[#allocation16 + $0x2ec] sm:$0xff]
    %v4720 = vld [vmem:[#allocation16 + $0x2f4] sm:$0xf]
    %v4721 = vld [vmem:[#allocation16 + $0x2f8] sm:$0xff]
    %v4722 = vld [vmem:[#allocation16 + $0x300] sm:$0xff]
    %v4723 = vld [vmem:[#allocation16 + $0x308] sm:$0xf]
    %v4724 = vld [vmem:[#allocation16 + $0x30c] sm:$0xff]
    %v4725 = vld [vmem:[#allocation16 + $0x314] sm:$0xff]
    %v4726 = vld [vmem:[#allocation16 + $0x31c] sm:$0xf]
    %v4727 = vld [vmem:[#allocation16 + $0x320] sm:$0xff]
    %v4728 = vld [vmem:[#allocation16 + $0x328] sm:$0xff]
    %v4729 = vld [vmem:[#allocation16 + $0x330] sm:$0xf]
    %v4730 = vld [vmem:[#allocation16 + $0x334] sm:$0xff]
    %v4731 = vld [vmem:[#allocation16 + $0x33c] sm:$0xff]
    %v4732 = vld [vmem:[#allocation16 + $0x344] sm:$0xf]
    %v4733 = vld [vmem:[#allocation16 + $0x348] sm:$0xff]
    %v4734 = vld [vmem:[#allocation16 + $0x350] sm:$0xff]
    %v4735 = vld [vmem:[#allocation16 + $0x358] sm:$0xf]
    %v4736 = vld [vmem:[#allocation16 + $0x35c] sm:$0xff]
    %v4737 = vld [vmem:[#allocation16 + $0x364] sm:$0xff]
    %v4738 = vld [vmem:[#allocation16 + $0x36c] sm:$0xf]
    %v4739 = vld [vmem:[#allocation16 + $0x370] sm:$0xff]
    %v4740 = vld [vmem:[#allocation16 + $0x378] sm:$0xff]
    %v4741 = vld [vmem:[#allocation16 + $0x380] sm:$0xf]
    %v4742 = vld [vmem:[#allocation16 + $0x384] sm:$0xff]
    %v4743 = vld [vmem:[#allocation16 + $0x38c] sm:$0xff]
    %v4744 = vld [vmem:[#allocation16 + $0x394] sm:$0xf]
    %v4745 = vld [vmem:[#allocation16 + $0x398] sm:$0xff]
    %v4746 = vld [vmem:[#allocation16 + $0x3a0] sm:$0xff]
    %v4747 = vld [vmem:[#allocation16 + $0x3a8] sm:$0xf]
    %v4748 = vld [vmem:[#allocation16 + $0x3ac] sm:$0xff]
    %v4749 = vld [vmem:[#allocation16 + $0x3b4] sm:$0xff]
    %v4750 = vld [vmem:[#allocation16 + $0x3bc] sm:$0xf]
    %v4751 = vld [vmem:[#allocation16 + $0x3c0] sm:$0xff]
    %v4752 = vld [vmem:[#allocation16 + $0x3c8] sm:$0xff]
    %v4753 = vld [vmem:[#allocation16 + $0x3d0] sm:$0xf]
    %v4754 = vld [vmem:[#allocation16 + $0x3d4] sm:$0xff]
    %v4755 = vld [vmem:[#allocation16 + $0x3dc] sm:$0xff]
    %v4756 = vld [vmem:[#allocation16 + $0x3e4] sm:$0xf]
    %v4757 = vld [vmem:[#allocation16 + $0x3e8] sm:$0xff]
    %v4758 = vld [vmem:[#allocation16 + $0x3f0] sm:$0xff]
    %v4759 = vld [vmem:[#allocation16 + $0x3f8] sm:$0xf]
    %v4760 = vld [vmem:[#allocation16 + $0x3fc] sm:$0xff]
    %v4761 = vld [vmem:[#allocation16 + $0x404] sm:$0xff]
    %v4762 = vld [vmem:[#allocation16 + $0x40c] sm:$0xf]
    %v4763 = vld [vmem:[#allocation16 + $0x410] sm:$0xff]
    %v4764 = vld [vmem:[#allocation16 + $0x418] sm:$0xff]
    %v4765 = vld [vmem:[#allocation16 + $0x420] sm:$0xf]
    %v4766 = vld [vmem:[#allocation16 + $0x424] sm:$0xff]
    %v4767 = vld [vmem:[#allocation16 + $0x42c] sm:$0xff]
    %v4768 = vld [vmem:[#allocation16 + $0x434] sm:$0xf]
    %v4769 = vld [vmem:[#allocation16 + $0x438] sm:$0xff]
    %v4770 = vld [vmem:[#allocation16 + $0x440] sm:$0xff]
    %v4771 = vld [vmem:[#allocation16 + $0x448] sm:$0xf]
    %v4772 = vld [vmem:[#allocation16 + $0x44c] sm:$0xff]
    %v4773 = vld [vmem:[#allocation16 + $0x454] sm:$0xff]
    %v4774 = vld [vmem:[#allocation16 + $0x45c] sm:$0xf]
    %v4775 = vld [vmem:[#allocation16 + $0x460] sm:$0xff]
    %v4776 = vld [vmem:[#allocation16 + $0x468] sm:$0xff]
    %v4777 = vld [vmem:[#allocation16 + $0x470] sm:$0xf]
    %v4778 = vld [vmem:[#allocation16 + $0x474] sm:$0xff]
    %v4779 = vld [vmem:[#allocation16 + $0x47c] sm:$0xff]
    %v4780 = vld [vmem:[#allocation16 + $0x484] sm:$0xf]
    %v4781 = vld [vmem:[#allocation16 + $0x488] sm:$0xff]
    %v4782 = vld [vmem:[#allocation16 + $0x490] sm:$0xff]
    %v4783 = vld [vmem:[#allocation16 + $0x498] sm:$0xf]
    %v4784 = vld [vmem:[#allocation16 + $0x49c] sm:$0xff]
    %v4785 = vld [vmem:[#allocation16 + $0x4a4] sm:$0xff]
    %v4786 = vld [vmem:[#allocation16 + $0x4ac] sm:$0xf]
    %v4787 = vld [vmem:[#allocation16 + $0x4b0] sm:$0xff]
    %v4788 = vld [vmem:[#allocation16 + $0x4b8] sm:$0xff]
    %v4789 = vld [vmem:[#allocation16 + $0x4c0] sm:$0xf]
    %v4790 = vld [vmem:[#allocation16 + $0x4c4] sm:$0xff]
    %v4791 = vld [vmem:[#allocation16 + $0x4cc] sm:$0xff]
    %v4792 = vld [vmem:[#allocation16 + $0x4d4] sm:$0xf]
    %v4793 = vld [vmem:[#allocation16 + $0x4d8] sm:$0xff]
    %v4794 = vld [vmem:[#allocation16 + $0x4e0] sm:$0xff]
    %v4795 = vld [vmem:[#allocation16 + $0x4e8] sm:$0xf]
    %v4796 = vld [vmem:[#allocation16 + $0x4ec] sm:$0xff]
    %v4797 = vld [vmem:[#allocation16 + $0x4f4] sm:$0xff]
    %v4798 = vld [vmem:[#allocation16 + $0x4fc] sm:$0xf]
    %v4799 = vpack.c.bf16 %v4603, %v4603
    %v4800 = vpack.c.bf16 %v4604, %v4604
    %v4801 = vpack.c.bf16 %v4605, %v4605
    %v4802 = vpack.c.bf16 %v4606, %v4606
    %s4803 = scalar_lea.vmem [#allocation13], 43
    %v4804 = vld [vmem:[%s4803] ss:$8 sm:$0xf]
    %v4805 = vld [vmem:[%s4803] ss:$8 sm:$0x10]
    %v4806 = vor.u32 %v4804, %v4805
    %v4999 = vunpack.c.l.b16 %v4607
    %v5000 = vunpack.c.h.b16 %v4607
    %v5001 = vunpack.c.l.b16 %v4608
    %v5002 = vunpack.c.h.b16 %v4608
    %v5003 = vunpack.c.l.b16 %v4609
    %v5004 = vunpack.c.l.b16 %v4610
    %v5005 = vunpack.c.h.b16 %v4610
    %v5006 = vunpack.c.l.b16 %v4611
    %v5007 = vunpack.c.h.b16 %v4611
    %v5008 = vunpack.c.l.b16 %v4612
    %v5009 = vunpack.c.l.b16 %v4613
    %v5010 = vunpack.c.h.b16 %v4613
    %v5011 = vunpack.c.l.b16 %v4614
    %v5012 = vunpack.c.h.b16 %v4614
    %v5013 = vunpack.c.l.b16 %v4615
    %v5014 = vunpack.c.l.b16 %v4616
    %v5015 = vunpack.c.h.b16 %v4616
    %v5016 = vunpack.c.l.b16 %v4617
    %v5017 = vunpack.c.h.b16 %v4617
    %v5018 = vunpack.c.l.b16 %v4618
    %v5019 = vunpack.c.l.b16 %v4619
    %v5020 = vunpack.c.h.b16 %v4619
    %v5021 = vunpack.c.l.b16 %v4620
    %v5022 = vunpack.c.h.b16 %v4620
    %v5023 = vunpack.c.l.b16 %v4621
    %v5024 = vunpack.c.l.b16 %v4622
    %v5025 = vunpack.c.h.b16 %v4622
    %v5026 = vunpack.c.l.b16 %v4623
    %v5027 = vunpack.c.h.b16 %v4623
    %v5028 = vunpack.c.l.b16 %v4624
    %v5029 = vunpack.c.l.b16 %v4625
    %v5030 = vunpack.c.h.b16 %v4625
    %v5031 = vunpack.c.l.b16 %v4626
    %v5032 = vunpack.c.h.b16 %v4626
    %v5033 = vunpack.c.l.b16 %v4627
    %v5034 = vunpack.c.l.b16 %v4628
    %v5035 = vunpack.c.h.b16 %v4628
    %v5036 = vunpack.c.l.b16 %v4629
    %v5037 = vunpack.c.h.b16 %v4629
    %v5038 = vunpack.c.l.b16 %v4630
    %v5039 = vunpack.c.l.b16 %v4631
    %v5040 = vunpack.c.h.b16 %v4631
    %v5041 = vunpack.c.l.b16 %v4632
    %v5042 = vunpack.c.h.b16 %v4632
    %v5043 = vunpack.c.l.b16 %v4633
    %v5044 = vunpack.c.l.b16 %v4634
    %v5045 = vunpack.c.h.b16 %v4634
    %v5046 = vunpack.c.l.b16 %v4635
    %v5047 = vunpack.c.h.b16 %v4635
    %v5048 = vunpack.c.l.b16 %v4636
    %v5049 = vunpack.c.l.b16 %v4637
    %v5050 = vunpack.c.h.b16 %v4637
    %v5051 = vunpack.c.l.b16 %v4638
    %v5052 = vunpack.c.h.b16 %v4638
    %v5053 = vunpack.c.l.b16 %v4639
    %v5054 = vunpack.c.l.b16 %v4640
    %v5055 = vunpack.c.h.b16 %v4640
    %v5056 = vunpack.c.l.b16 %v4641
    %v5057 = vunpack.c.h.b16 %v4641
    %v5058 = vunpack.c.l.b16 %v4642
    %v5059 = vunpack.c.l.b16 %v4643
    %v5060 = vunpack.c.h.b16 %v4643
    %v5061 = vunpack.c.l.b16 %v4644
    %v5062 = vunpack.c.h.b16 %v4644
    %v5063 = vunpack.c.l.b16 %v4645
    %v5064 = vunpack.c.l.b16 %v4646
    %v5065 = vunpack.c.h.b16 %v4646
    %v5066 = vunpack.c.l.b16 %v4647
    %v5067 = vunpack.c.h.b16 %v4647
    %v5068 = vunpack.c.l.b16 %v4648
    %v5069 = vunpack.c.l.b16 %v4649
    %v5070 = vunpack.c.h.b16 %v4649
    %v5071 = vunpack.c.l.b16 %v4650
    %v5072 = vunpack.c.h.b16 %v4650
    %v5073 = vunpack.c.l.b16 %v4651
    %v5074 = vunpack.c.l.b16 %v4652
    %v5075 = vunpack.c.h.b16 %v4652
    %v5076 = vunpack.c.l.b16 %v4653
    %v5077 = vunpack.c.h.b16 %v4653
    %v5078 = vunpack.c.l.b16 %v4654
    %v5079 = vunpack.c.l.b16 %v4655
    %v5080 = vunpack.c.h.b16 %v4655
    %v5081 = vunpack.c.l.b16 %v4656
    %v5082 = vunpack.c.h.b16 %v4656
    %v5083 = vunpack.c.l.b16 %v4657
    %v5084 = vunpack.c.l.b16 %v4658
    %v5085 = vunpack.c.h.b16 %v4658
    %v5086 = vunpack.c.l.b16 %v4659
    %v5087 = vunpack.c.h.b16 %v4659
    %v5088 = vunpack.c.l.b16 %v4660
    %v5089 = vunpack.c.l.b16 %v4661
    %v5090 = vunpack.c.h.b16 %v4661
    %v5091 = vunpack.c.l.b16 %v4662
    %v5092 = vunpack.c.h.b16 %v4662
    %v5093 = vunpack.c.l.b16 %v4663
    %v5094 = vunpack.c.l.b16 %v4664
    %v5095 = vunpack.c.h.b16 %v4664
    %v5096 = vunpack.c.l.b16 %v4665
    %v5097 = vunpack.c.h.b16 %v4665
    %v5098 = vunpack.c.l.b16 %v4666
    %v5099 = vunpack.c.l.b16 %v4667
    %v5100 = vunpack.c.h.b16 %v4667
    %v5101 = vunpack.c.l.b16 %v4668
    %v5102 = vunpack.c.h.b16 %v4668
    %v5103 = vunpack.c.l.b16 %v4669
    %v5104 = vunpack.c.l.b16 %v4670
    %v5105 = vunpack.c.h.b16 %v4670
    %v5106 = vunpack.c.l.b16 %v4671
    %v5107 = vunpack.c.h.b16 %v4671
    %v5108 = vunpack.c.l.b16 %v4672
    %v5109 = vunpack.c.l.b16 %v4673
    %v5110 = vunpack.c.h.b16 %v4673
    %v5111 = vunpack.c.l.b16 %v4674
    %v5112 = vunpack.c.h.b16 %v4674
    %v5113 = vunpack.c.l.b16 %v4675
    %v5114 = vunpack.c.l.b16 %v4676
    %v5115 = vunpack.c.h.b16 %v4676
    %v5116 = vunpack.c.l.b16 %v4677
    %v5117 = vunpack.c.h.b16 %v4677
    %v5118 = vunpack.c.l.b16 %v4678
    %v5119 = vunpack.c.l.b16 %v4679
    %v5120 = vunpack.c.h.b16 %v4679
    %v5121 = vunpack.c.l.b16 %v4680
    %v5122 = vunpack.c.h.b16 %v4680
    %v5123 = vunpack.c.l.b16 %v4681
    %v5124 = vunpack.c.l.b16 %v4682
    %v5125 = vunpack.c.h.b16 %v4682
    %v5126 = vunpack.c.l.b16 %v4683
    %v5127 = vunpack.c.h.b16 %v4683
    %v5128 = vunpack.c.l.b16 %v4684
    %v5129 = vunpack.c.l.b16 %v4685
    %v5130 = vunpack.c.h.b16 %v4685
    %v5131 = vunpack.c.l.b16 %v4686
    %v5132 = vunpack.c.h.b16 %v4686
    %v5133 = vunpack.c.l.b16 %v4687
    %v5134 = vunpack.c.l.b16 %v4688
    %v5135 = vunpack.c.h.b16 %v4688
    %v5136 = vunpack.c.l.b16 %v4689
    %v5137 = vunpack.c.h.b16 %v4689
    %v5138 = vunpack.c.l.b16 %v4690
    %v5139 = vunpack.c.l.b16 %v4691
    %v5140 = vunpack.c.h.b16 %v4691
    %v5141 = vunpack.c.l.b16 %v4692
    %v5142 = vunpack.c.h.b16 %v4692
    %v5143 = vunpack.c.l.b16 %v4693
    %v5144 = vunpack.c.l.b16 %v4694
    %v5145 = vunpack.c.h.b16 %v4694
    %v5146 = vunpack.c.l.b16 %v4695
    %v5147 = vunpack.c.h.b16 %v4695
    %v5148 = vunpack.c.l.b16 %v4696
    %v5149 = vunpack.c.l.b16 %v4697
    %v5150 = vunpack.c.h.b16 %v4697
    %v5151 = vunpack.c.l.b16 %v4698
    %v5152 = vunpack.c.h.b16 %v4698
    %v5153 = vunpack.c.l.b16 %v4699
    %v5154 = vunpack.c.l.b16 %v4700
    %v5155 = vunpack.c.h.b16 %v4700
    %v5156 = vunpack.c.l.b16 %v4701
    %v5157 = vunpack.c.h.b16 %v4701
    %v5158 = vunpack.c.l.b16 %v4702
    %v5159 = vunpack.c.l.b16 %v4703
    %v5160 = vunpack.c.h.b16 %v4703
    %v5161 = vunpack.c.l.b16 %v4704
    %v5162 = vunpack.c.h.b16 %v4704
    %v5163 = vunpack.c.l.b16 %v4705
    %v5164 = vunpack.c.l.b16 %v4706
    %v5165 = vunpack.c.h.b16 %v4706
    %v5166 = vunpack.c.l.b16 %v4707
    %v5167 = vunpack.c.h.b16 %v4707
    %v5168 = vunpack.c.l.b16 %v4708
    %v5169 = vunpack.c.l.b16 %v4709
    %v5170 = vunpack.c.h.b16 %v4709
    %v5171 = vunpack.c.l.b16 %v4710
    %v5172 = vunpack.c.h.b16 %v4710
    %v5173 = vunpack.c.l.b16 %v4711
    %v5174 = vunpack.c.l.b16 %v4712
    %v5175 = vunpack.c.h.b16 %v4712
    %v5176 = vunpack.c.l.b16 %v4713
    %v5177 = vunpack.c.h.b16 %v4713
    %v5178 = vunpack.c.l.b16 %v4714
    %v5179 = vunpack.c.l.b16 %v4715
    %v5180 = vunpack.c.h.b16 %v4715
    %v5181 = vunpack.c.l.b16 %v4716
    %v5182 = vunpack.c.h.b16 %v4716
    %v5183 = vunpack.c.l.b16 %v4717
    %v5184 = vunpack.c.l.b16 %v4718
    %v5185 = vunpack.c.h.b16 %v4718
    %v5186 = vunpack.c.l.b16 %v4719
    %v5187 = vunpack.c.h.b16 %v4719
    %v5188 = vunpack.c.l.b16 %v4720
    %v5189 = vunpack.c.l.b16 %v4721
    %v5190 = vunpack.c.h.b16 %v4721
    %v5191 = vunpack.c.l.b16 %v4722
    %v5192 = vunpack.c.h.b16 %v4722
    %v5193 = vunpack.c.l.b16 %v4723
    %v5194 = vunpack.c.l.b16 %v4724
    %v5195 = vunpack.c.h.b16 %v4724
    %v5196 = vunpack.c.l.b16 %v4725
    %v5197 = vunpack.c.h.b16 %v4725
    %v5198 = vunpack.c.l.b16 %v4726
    %v5199 = vunpack.c.l.b16 %v4727
    %v5200 = vunpack.c.h.b16 %v4727
    %v5201 = vunpack.c.l.b16 %v4728
    %v5202 = vunpack.c.h.b16 %v4728
    %v5203 = vunpack.c.l.b16 %v4729
    %v5204 = vunpack.c.l.b16 %v4730
    %v5205 = vunpack.c.h.b16 %v4730
    %v5206 = vunpack.c.l.b16 %v4731
    %v5207 = vunpack.c.h.b16 %v4731
    %v5208 = vunpack.c.l.b16 %v4732
    %v5209 = vunpack.c.l.b16 %v4733
    %v5210 = vunpack.c.h.b16 %v4733
    %v5211 = vunpack.c.l.b16 %v4734
    %v5212 = vunpack.c.h.b16 %v4734
    %v5213 = vunpack.c.l.b16 %v4735
    %v5214 = vunpack.c.l.b16 %v4736
    %v5215 = vunpack.c.h.b16 %v4736
    %v5216 = vunpack.c.l.b16 %v4737
    %v5217 = vunpack.c.h.b16 %v4737
    %v5218 = vunpack.c.l.b16 %v4738
    %v5219 = vunpack.c.l.b16 %v4739
    %v5220 = vunpack.c.h.b16 %v4739
    %v5221 = vunpack.c.l.b16 %v4740
    %v5222 = vunpack.c.h.b16 %v4740
    %v5223 = vunpack.c.l.b16 %v4741
    %v5224 = vunpack.c.l.b16 %v4742
    %v5225 = vunpack.c.h.b16 %v4742
    %v5226 = vunpack.c.l.b16 %v4743
    %v5227 = vunpack.c.h.b16 %v4743
    %v5228 = vunpack.c.l.b16 %v4744
    %v5229 = vunpack.c.l.b16 %v4745
    %v5230 = vunpack.c.h.b16 %v4745
    %v5231 = vunpack.c.l.b16 %v4746
    %v5232 = vunpack.c.h.b16 %v4746
    %v5233 = vunpack.c.l.b16 %v4747
    %v5234 = vunpack.c.l.b16 %v4748
    %v5235 = vunpack.c.h.b16 %v4748
    %v5236 = vunpack.c.l.b16 %v4749
    %v5237 = vunpack.c.h.b16 %v4749
    %v5238 = vunpack.c.l.b16 %v4750
    %v5239 = vunpack.c.l.b16 %v4751
    %v5240 = vunpack.c.h.b16 %v4751
    %v5241 = vunpack.c.l.b16 %v4752
    %v5242 = vunpack.c.h.b16 %v4752
    %v5243 = vunpack.c.l.b16 %v4753
    %v5244 = vunpack.c.l.b16 %v4754
    %v5245 = vunpack.c.h.b16 %v4754
    %v5246 = vunpack.c.l.b16 %v4755
    %v5247 = vunpack.c.h.b16 %v4755
    %v5248 = vunpack.c.l.b16 %v4756
    %v5249 = vunpack.c.l.b16 %v4757
    %v5250 = vunpack.c.h.b16 %v4757
    %v5251 = vunpack.c.l.b16 %v4758
    %v5252 = vunpack.c.h.b16 %v4758
    %v5253 = vunpack.c.l.b16 %v4759
    %v5254 = vunpack.c.l.b16 %v4760
    %v5255 = vunpack.c.h.b16 %v4760
    %v5256 = vunpack.c.l.b16 %v4761
    %v5257 = vunpack.c.h.b16 %v4761
    %v5258 = vunpack.c.l.b16 %v4762
    %v5259 = vunpack.c.l.b16 %v4763
    %v5260 = vunpack.c.h.b16 %v4763
    %v5261 = vunpack.c.l.b16 %v4764
    %v5262 = vunpack.c.h.b16 %v4764
    %v5263 = vunpack.c.l.b16 %v4765
    %v5264 = vunpack.c.l.b16 %v4766
    %v5265 = vunpack.c.h.b16 %v4766
    %v5266 = vunpack.c.l.b16 %v4767
    %v5267 = vunpack.c.h.b16 %v4767
    %v5268 = vunpack.c.l.b16 %v4768
    %v5269 = vunpack.c.l.b16 %v4769
    %v5270 = vunpack.c.h.b16 %v4769
    %v5271 = vunpack.c.l.b16 %v4770
    %v5272 = vunpack.c.h.b16 %v4770
    %v5273 = vunpack.c.l.b16 %v4771
    %v5274 = vunpack.c.l.b16 %v4772
    %v5275 = vunpack.c.h.b16 %v4772
    %v5276 = vunpack.c.l.b16 %v4773
    %v5277 = vunpack.c.h.b16 %v4773
    %v5278 = vunpack.c.l.b16 %v4774
    %v5279 = vunpack.c.l.b16 %v4775
    %v5280 = vunpack.c.h.b16 %v4775
    %v5281 = vunpack.c.l.b16 %v4776
    %v5282 = vunpack.c.h.b16 %v4776
    %v5283 = vunpack.c.l.b16 %v4777
    %v5284 = vunpack.c.l.b16 %v4778
    %v5285 = vunpack.c.h.b16 %v4778
    %v5286 = vunpack.c.l.b16 %v4779
    %v5287 = vunpack.c.h.b16 %v4779
    %v5288 = vunpack.c.l.b16 %v4780
    %v5289 = vunpack.c.l.b16 %v4781
    %v5290 = vunpack.c.h.b16 %v4781
    %v5291 = vunpack.c.l.b16 %v4782
    %v5292 = vunpack.c.h.b16 %v4782
    %v5293 = vunpack.c.l.b16 %v4783
    %v5294 = vunpack.c.l.b16 %v4784
    %v5295 = vunpack.c.h.b16 %v4784
    %v5296 = vunpack.c.l.b16 %v4785
    %v5297 = vunpack.c.h.b16 %v4785
    %v5298 = vunpack.c.l.b16 %v4786
    %v5299 = vunpack.c.l.b16 %v4787
    %v5300 = vunpack.c.h.b16 %v4787
    %v5301 = vunpack.c.l.b16 %v4788
    %v5302 = vunpack.c.h.b16 %v4788
    %v5303 = vunpack.c.l.b16 %v4789
    %v5304 = vunpack.c.l.b16 %v4790
    %v5305 = vunpack.c.h.b16 %v4790
    %v5306 = vunpack.c.l.b16 %v4791
    %v5307 = vunpack.c.h.b16 %v4791
    %v5308 = vunpack.c.l.b16 %v4792
    %v5309 = vunpack.c.l.b16 %v4793
    %v5310 = vunpack.c.h.b16 %v4793
    %v5311 = vunpack.c.l.b16 %v4794
    %v5312 = vunpack.c.h.b16 %v4794
    %v5313 = vunpack.c.l.b16 %v4795
    %v5314 = vunpack.c.l.b16 %v4796
    %v5315 = vunpack.c.h.b16 %v4796
    %v5316 = vunpack.c.l.b16 %v4797
    %v5317 = vunpack.c.h.b16 %v4797
    %v5318 = vunpack.c.l.b16 %v4798
    %v5319 = vpack.c.b16 %v5004, %v4999
    %v5320 = vpack.c.b16 %v5005, %v5000
    %v5321 = vpack.c.b16 %v5006, %v5001
    %v5322 = vpack.c.b16 %v5007, %v5002
    %v5323 = vpack.c.b16 %v5008, %v5003
    %v5324 = vpack.c.b16 %v5014, %v5009
    %v5325 = vpack.c.b16 %v5015, %v5010
    %v5326 = vpack.c.b16 %v5016, %v5011
    %v5327 = vpack.c.b16 %v5017, %v5012
    %v5328 = vpack.c.b16 %v5018, %v5013
    %v5329 = vpack.c.b16 %v5024, %v5019
    %v5330 = vpack.c.b16 %v5025, %v5020
    %v5331 = vpack.c.b16 %v5026, %v5021
    %v5332 = vpack.c.b16 %v5027, %v5022
    %v5333 = vpack.c.b16 %v5028, %v5023
    %v5334 = vpack.c.b16 %v5034, %v5029
    %v5335 = vpack.c.b16 %v5035, %v5030
    %v5336 = vpack.c.b16 %v5036, %v5031
    %v5337 = vpack.c.b16 %v5037, %v5032
    %v5338 = vpack.c.b16 %v5038, %v5033
    %v5339 = vpack.c.b16 %v5044, %v5039
    %v5340 = vpack.c.b16 %v5045, %v5040
    %v5341 = vpack.c.b16 %v5046, %v5041
    %v5342 = vpack.c.b16 %v5047, %v5042
    %v5343 = vpack.c.b16 %v5048, %v5043
    %v5344 = vpack.c.b16 %v5054, %v5049
    %v5345 = vpack.c.b16 %v5055, %v5050
    %v5346 = vpack.c.b16 %v5056, %v5051
    %v5347 = vpack.c.b16 %v5057, %v5052
    %v5348 = vpack.c.b16 %v5058, %v5053
    %v5349 = vpack.c.b16 %v5064, %v5059
    %v5350 = vpack.c.b16 %v5065, %v5060
    %v5351 = vpack.c.b16 %v5066, %v5061
    %v5352 = vpack.c.b16 %v5067, %v5062
    %v5353 = vpack.c.b16 %v5068, %v5063
    %v5354 = vpack.c.b16 %v5074, %v5069
    %v5355 = vpack.c.b16 %v5075, %v5070
    %v5356 = vpack.c.b16 %v5076, %v5071
    %v5357 = vpack.c.b16 %v5077, %v5072
    %v5358 = vpack.c.b16 %v5078, %v5073
    %v5359 = vpack.c.b16 %v5084, %v5079
    %v5360 = vpack.c.b16 %v5085, %v5080
    %v5361 = vpack.c.b16 %v5086, %v5081
    %v5362 = vpack.c.b16 %v5087, %v5082
    %v5363 = vpack.c.b16 %v5088, %v5083
    %v5364 = vpack.c.b16 %v5094, %v5089
    %v5365 = vpack.c.b16 %v5095, %v5090
    %v5366 = vpack.c.b16 %v5096, %v5091
    %v5367 = vpack.c.b16 %v5097, %v5092
    %v5368 = vpack.c.b16 %v5098, %v5093
    %v5369 = vpack.c.b16 %v5104, %v5099
    %v5370 = vpack.c.b16 %v5105, %v5100
    %v5371 = vpack.c.b16 %v5106, %v5101
    %v5372 = vpack.c.b16 %v5107, %v5102
    %v5373 = vpack.c.b16 %v5108, %v5103
    %v5374 = vpack.c.b16 %v5114, %v5109
    %v5375 = vpack.c.b16 %v5115, %v5110
    %v5376 = vpack.c.b16 %v5116, %v5111
    %v5377 = vpack.c.b16 %v5117, %v5112
    %v5378 = vpack.c.b16 %v5118, %v5113
    %v5379 = vpack.c.b16 %v5124, %v5119
    %v5380 = vpack.c.b16 %v5125, %v5120
    %v5381 = vpack.c.b16 %v5126, %v5121
    %v5382 = vpack.c.b16 %v5127, %v5122
    %v5383 = vpack.c.b16 %v5128, %v5123
    %v5384 = vpack.c.b16 %v5134, %v5129
    %v5385 = vpack.c.b16 %v5135, %v5130
    %v5386 = vpack.c.b16 %v5136, %v5131
    %v5387 = vpack.c.b16 %v5137, %v5132
    %v5388 = vpack.c.b16 %v5138, %v5133
    %v5389 = vpack.c.b16 %v5144, %v5139
    %v5390 = vpack.c.b16 %v5145, %v5140
    %v5391 = vpack.c.b16 %v5146, %v5141
    %v5392 = vpack.c.b16 %v5147, %v5142
    %v5393 = vpack.c.b16 %v5148, %v5143
    %v5394 = vpack.c.b16 %v5154, %v5149
    %v5395 = vpack.c.b16 %v5155, %v5150
    %v5396 = vpack.c.b16 %v5156, %v5151
    %v5397 = vpack.c.b16 %v5157, %v5152
    %v5398 = vpack.c.b16 %v5158, %v5153
    %v5399 = vpack.c.b16 %v5164, %v5159
    %v5400 = vpack.c.b16 %v5165, %v5160
    %v5401 = vpack.c.b16 %v5166, %v5161
    %v5402 = vpack.c.b16 %v5167, %v5162
    %v5403 = vpack.c.b16 %v5168, %v5163
    %v5404 = vpack.c.b16 %v5174, %v5169
    %v5405 = vpack.c.b16 %v5175, %v5170
    %v5406 = vpack.c.b16 %v5176, %v5171
    %v5407 = vpack.c.b16 %v5177, %v5172
    %v5408 = vpack.c.b16 %v5178, %v5173
    %v5409 = vpack.c.b16 %v5184, %v5179
    %v5410 = vpack.c.b16 %v5185, %v5180
    %v5411 = vpack.c.b16 %v5186, %v5181
    %v5412 = vpack.c.b16 %v5187, %v5182
    %v5413 = vpack.c.b16 %v5188, %v5183
    %v5414 = vpack.c.b16 %v5194, %v5189
    %v5415 = vpack.c.b16 %v5195, %v5190
    %v5416 = vpack.c.b16 %v5196, %v5191
    %v5417 = vpack.c.b16 %v5197, %v5192
    %v5418 = vpack.c.b16 %v5198, %v5193
    %v5419 = vpack.c.b16 %v5204, %v5199
    %v5420 = vpack.c.b16 %v5205, %v5200
    %v5421 = vpack.c.b16 %v5206, %v5201
    %v5422 = vpack.c.b16 %v5207, %v5202
    %v5423 = vpack.c.b16 %v5208, %v5203
    %v5424 = vpack.c.b16 %v5214, %v5209
    %v5425 = vpack.c.b16 %v5215, %v5210
    %v5426 = vpack.c.b16 %v5216, %v5211
    %v5427 = vpack.c.b16 %v5217, %v5212
    %v5428 = vpack.c.b16 %v5218, %v5213
    %v5429 = vpack.c.b16 %v5224, %v5219
    %v5430 = vpack.c.b16 %v5225, %v5220
    %v5431 = vpack.c.b16 %v5226, %v5221
    %v5432 = vpack.c.b16 %v5227, %v5222
    %v5433 = vpack.c.b16 %v5228, %v5223
    %v5434 = vpack.c.b16 %v5234, %v5229
    %v5435 = vpack.c.b16 %v5235, %v5230
    %v5436 = vpack.c.b16 %v5236, %v5231
    %v5437 = vpack.c.b16 %v5237, %v5232
    %v5438 = vpack.c.b16 %v5238, %v5233
    %v5439 = vpack.c.b16 %v5244, %v5239
    %v5440 = vpack.c.b16 %v5245, %v5240
    %v5441 = vpack.c.b16 %v5246, %v5241
    %v5442 = vpack.c.b16 %v5247, %v5242
    %v5443 = vpack.c.b16 %v5248, %v5243
    %v5444 = vpack.c.b16 %v5254, %v5249
    %v5445 = vpack.c.b16 %v5255, %v5250
    %v5446 = vpack.c.b16 %v5256, %v5251
    %v5447 = vpack.c.b16 %v5257, %v5252
    %v5448 = vpack.c.b16 %v5258, %v5253
    %v5449 = vpack.c.b16 %v5264, %v5259
    %v5450 = vpack.c.b16 %v5265, %v5260
    %v5451 = vpack.c.b16 %v5266, %v5261
    %v5452 = vpack.c.b16 %v5267, %v5262
    %v5453 = vpack.c.b16 %v5268, %v5263
    %v5454 = vpack.c.b16 %v5274, %v5269
    %v5455 = vpack.c.b16 %v5275, %v5270
    %v5456 = vpack.c.b16 %v5276, %v5271
    %v5457 = vpack.c.b16 %v5277, %v5272
    %v5458 = vpack.c.b16 %v5278, %v5273
    %v5459 = vpack.c.b16 %v5284, %v5279
    %v5460 = vpack.c.b16 %v5285, %v5280
    %v5461 = vpack.c.b16 %v5286, %v5281
    %v5462 = vpack.c.b16 %v5287, %v5282
    %v5463 = vpack.c.b16 %v5288, %v5283
    %v5464 = vpack.c.b16 %v5294, %v5289
    %v5465 = vpack.c.b16 %v5295, %v5290
    %v5466 = vpack.c.b16 %v5296, %v5291
    %v5467 = vpack.c.b16 %v5297, %v5292
    %v5468 = vpack.c.b16 %v5298, %v5293
    %v5469 = vpack.c.b16 %v5304, %v5299
    %v5470 = vpack.c.b16 %v5305, %v5300
    %v5471 = vpack.c.b16 %v5306, %v5301
    %v5472 = vpack.c.b16 %v5307, %v5302
    %v5473 = vpack.c.b16 %v5308, %v5303
    %v5474 = vpack.c.b16 %v5314, %v5309
    %v5475 = vpack.c.b16 %v5315, %v5310
    %v5476 = vpack.c.b16 %v5316, %v5311
    %v5477 = vpack.c.b16 %v5317, %v5312
    %v5478 = vpack.c.b16 %v5318, %v5313
    %v5640 = vlaneseq
    %v5641 = vshrl.u32 %v5640, 7
    %v5642 = vsub.s32 0, %v5641
    %v5643 = vrot.slane %v4806, %v5642
    %v5644 = vlaneseq
    %v5645 = vshrl.u32 %v5644, 7
    %v5646 = vsub.s32 1, %v5645
    %v5647 = vrot.slane %v4806, %v5646
    %v5648 = vlaneseq
    %v5649 = vshrl.u32 %v5648, 7
    %v5650 = vsub.s32 2, %v5649
    %v5651 = vrot.slane %v4806, %v5650
    %v5652 = vlaneseq
    %v5653 = vshrl.u32 %v5652, 7
    %v5654 = vsub.s32 3, %v5653
    %v5655 = vrot.slane %v4806, %v5654
    %v5656 = vlaneseq
    %v5657 = vshrl.u32 %v5656, 7
    %v5658 = vsub.s32 4, %v5657
    %v5659 = vrot.slane %v4806, %v5658
    %5665 = vmatprep.subr.bf16.mxu0 %v5320
    %5666 = vmatpush1.bf16.msra.mxu0 %v5319
    %5667 = vmatprep.subr.bf16.mxu0 %v5325
    %5668 = vmatpush1.bf16.msra.mxu0 %v5324
    %5669 = vmatprep.subr.bf16.mxu0 %v5330
    %5670 = vmatpush1.bf16.msra.mxu0 %v5329
    %5671 = vmatprep.subr.bf16.mxu0 %v5335
    %5672 = vmatpush1.bf16.msra.mxu0 %v5334
    %5673 = vmatprep.subr.bf16.mxu0 %v5340
    %5674 = vmatpush1.bf16.msra.mxu0 %v5339
    %5675 = vmatprep.subr.bf16.mxu0 %v5345
    %5676 = vmatpush1.bf16.msra.mxu0 %v5344
    %5677 = vmatprep.subr.bf16.mxu0 %v5350
    %5678 = vmatpush1.bf16.msra.mxu0 %v5349
    %5679 = vmatprep.subr.bf16.mxu0 %v5355
    %5680 = vmatpush1.bf16.msra.mxu0 %v5354
    %5681 = vmatprep.subr.bf16.mxu0 %v5360
    %5682 = vmatpush1.bf16.msra.mxu0 %v5359
    %5683 = vmatprep.subr.bf16.mxu0 %v5365
    %5684 = vmatpush1.bf16.msra.mxu0 %v5364
    %5685 = vmatprep.subr.bf16.mxu0 %v5370
    %5686 = vmatpush1.bf16.msra.mxu0 %v5369
    %5687 = vmatprep.subr.bf16.mxu0 %v5375
    %5688 = vmatpush1.bf16.msra.mxu0 %v5374
    %5689 = vmatprep.subr.bf16.mxu0 %v5380
    %5690 = vmatpush1.bf16.msra.mxu0 %v5379
    %5691 = vmatprep.subr.bf16.mxu0 %v5385
    %5692 = vmatpush1.bf16.msra.mxu0 %v5384
    %5693 = vmatprep.subr.bf16.mxu0 %v5390
    %5694 = vmatpush1.bf16.msra.mxu0 %v5389
    %5695 = vmatprep.subr.bf16.mxu0 %v5395
    %5696 = vmatpush1.bf16.msra.mxu0 %v5394
    %5697 = vmatprep.mubr.bf16.mxu0 %v4800
    %5698 = vmatmul.mubr.bf16.gmra.mrb[0].mxu0 %v4799
    %v5699 = vpop.f32.mrb[0].mxu0
    %v5700 = vadd.f32 %v5643, %v5699
    %v5701 = vpop.f32.mrb[0].mxu0
    %v5702 = vadd.f32 %v5647, %v5701
    %v5703 = vpop.f32.mrb[0].mxu0
    %v5704 = vpop.f32.mrb[0].mxu0
    %5705 = vdwg.mxu0
    %5706 = vmatprep.subr.bf16.mxu0 %v5400
    %5707 = vmatpush1.bf16.msra.mxu0 %v5399
    %5708 = vmatprep.subr.bf16.mxu0 %v5405
    %5709 = vmatpush1.bf16.msra.mxu0 %v5404
    %5710 = vmatprep.subr.bf16.mxu0 %v5410
    %5711 = vmatpush1.bf16.msra.mxu0 %v5409
    %5712 = vmatprep.subr.bf16.mxu0 %v5415
    %5713 = vmatpush1.bf16.msra.mxu0 %v5414
    %5714 = vmatprep.subr.bf16.mxu0 %v5420
    %5715 = vmatpush1.bf16.msra.mxu0 %v5419
    %5716 = vmatprep.subr.bf16.mxu0 %v5425
    %5717 = vmatpush1.bf16.msra.mxu0 %v5424
    %5718 = vmatprep.subr.bf16.mxu0 %v5430
    %5719 = vmatpush1.bf16.msra.mxu0 %v5429
    %5720 = vmatprep.subr.bf16.mxu0 %v5435
    %5721 = vmatpush1.bf16.msra.mxu0 %v5434
    %5722 = vmatprep.subr.bf16.mxu0 %v5440
    %5723 = vmatpush1.bf16.msra.mxu0 %v5439
    %5724 = vmatprep.subr.bf16.mxu0 %v5445
    %5725 = vmatpush1.bf16.msra.mxu0 %v5444
    %5726 = vmatprep.subr.bf16.mxu0 %v5450
    %5727 = vmatpush1.bf16.msra.mxu0 %v5449
    %5728 = vmatprep.subr.bf16.mxu0 %v5455
    %5729 = vmatpush1.bf16.msra.mxu0 %v5454
    %5730 = vmatprep.subr.bf16.mxu0 %v5460
    %5731 = vmatpush1.bf16.msra.mxu0 %v5459
    %5732 = vmatprep.subr.bf16.mxu0 %v5465
    %5733 = vmatpush1.bf16.msra.mxu0 %v5464
    %5734 = vmatprep.subr.bf16.mxu0 %v5470
    %5735 = vmatpush1.bf16.msra.mxu0 %v5469
    %5736 = vmatprep.subr.bf16.mxu0 %v5475
    %5737 = vmatpush1.bf16.msra.mxu0 %v5474
    %5738 = vmatprep.mubr.bf16.mxu0 %v4802
    %5739 = vmatmul.mubr.bf16.gmra.mrb[0].mxu0 %v4801
    %v5740 = vpop.f32.mrb[0].mxu0
    %v5741 = vadd.f32 %v5700, %v5740
    %v5742 = vpop.f32.mrb[0].mxu0
    %v5743 = vadd.f32 %v5702, %v5742
    %v5744 = vpop.f32.mrb[0].mxu0
    %v5745 = vpop.f32.mrb[0].mxu0
    %5746 = vdwg.mxu0
    %5747 = vmatprep.subr.bf16.mxu0 %v5322
    %5748 = vmatpush1.bf16.msra.mxu0 %v5321
    %5749 = vmatprep.subr.bf16.mxu0 %v5327
    %5750 = vmatpush1.bf16.msra.mxu0 %v5326
    %5751 = vmatprep.subr.bf16.mxu0 %v5332
    %5752 = vmatpush1.bf16.msra.mxu0 %v5331
    %5753 = vmatprep.subr.bf16.mxu0 %v5337
    %5754 = vmatpush1.bf16.msra.mxu0 %v5336
    %5755 = vmatprep.subr.bf16.mxu0 %v5342
    %5756 = vmatpush1.bf16.msra.mxu0 %v5341
    %5757 = vmatprep.subr.bf16.mxu0 %v5347
    %5758 = vmatpush1.bf16.msra.mxu0 %v5346
    %5759 = vmatprep.subr.bf16.mxu0 %v5352
    %5760 = vmatpush1.bf16.msra.mxu0 %v5351
    %5761 = vmatprep.subr.bf16.mxu0 %v5357
    %5762 = vmatpush1.bf16.msra.mxu0 %v5356
    %5763 = vmatprep.subr.bf16.mxu0 %v5362
    %5764 = vmatpush1.bf16.msra.mxu0 %v5361
    %5765 = vmatprep.subr.bf16.mxu0 %v5367
    %5766 = vmatpush1.bf16.msra.mxu0 %v5366
    %5767 = vmatprep.subr.bf16.mxu0 %v5372
    %5768 = vmatpush1.bf16.msra.mxu0 %v5371
    %5769 = vmatprep.subr.bf16.mxu0 %v5377
    %5770 = vmatpush1.bf16.msra.mxu0 %v5376
    %5771 = vmatprep.subr.bf16.mxu0 %v5382
    %5772 = vmatpush1.bf16.msra.mxu0 %v5381
    %5773 = vmatprep.subr.bf16.mxu0 %v5387
    %5774 = vmatpush1.bf16.msra.mxu0 %v5386
    %5775 = vmatprep.subr.bf16.mxu0 %v5392
    %5776 = vmatpush1.bf16.msra.mxu0 %v5391
    %5777 = vmatprep.subr.bf16.mxu0 %v5397
    %5778 = vmatpush1.bf16.msra.mxu0 %v5396
    %5779 = vmatprep.mubr.bf16.mxu0 %v4800
    %5780 = vmatmul.mubr.bf16.gmra.mrb[0].mxu0 %v4799
    %v5781 = vpop.f32.mrb[0].mxu0
    %v5782 = vadd.f32 %v5651, %v5781
    %v5783 = vpop.f32.mrb[0].mxu0
    %v5784 = vadd.f32 %v5655, %v5783
    %v5785 = vpop.f32.mrb[0].mxu0
    %v5786 = vpop.f32.mrb[0].mxu0
    %5787 = vdwg.mxu0
    %5788 = vmatprep.subr.bf16.mxu0 %v5402
    %5789 = vmatpush1.bf16.msra.mxu0 %v5401
    %5790 = vmatprep.subr.bf16.mxu0 %v5407
    %5791 = vmatpush1.bf16.msra.mxu0 %v5406
    %5792 = vmatprep.subr.bf16.mxu0 %v5412
    %5793 = vmatpush1.bf16.msra.mxu0 %v5411
    %5794 = vmatprep.subr.bf16.mxu0 %v5417
    %5795 = vmatpush1.bf16.msra.mxu0 %v5416
    %5796 = vmatprep.subr.bf16.mxu0 %v5422
    %5797 = vmatpush1.bf16.msra.mxu0 %v5421
    %5798 = vmatprep.subr.bf16.mxu0 %v5427
    %5799 = vmatpush1.bf16.msra.mxu0 %v5426
    %5800 = vmatprep.subr.bf16.mxu0 %v5432
    %5801 = vmatpush1.bf16.msra.mxu0 %v5431
    %5802 = vmatprep.subr.bf16.mxu0 %v5437
    %5803 = vmatpush1.bf16.msra.mxu0 %v5436
    %5804 = vmatprep.subr.bf16.mxu0 %v5442
    %5805 = vmatpush1.bf16.msra.mxu0 %v5441
    %5806 = vmatprep.subr.bf16.mxu0 %v5447
    %5807 = vmatpush1.bf16.msra.mxu0 %v5446
    %5808 = vmatprep.subr.bf16.mxu0 %v5452
    %5809 = vmatpush1.bf16.msra.mxu0 %v5451
    %5810 = vmatprep.subr.bf16.mxu0 %v5457
    %5811 = vmatpush1.bf16.msra.mxu0 %v5456
    %5812 = vmatprep.subr.bf16.mxu0 %v5462
    %5813 = vmatpush1.bf16.msra.mxu0 %v5461
    %5814 = vmatprep.subr.bf16.mxu0 %v5467
    %5815 = vmatpush1.bf16.msra.mxu0 %v5466
    %5816 = vmatprep.subr.bf16.mxu0 %v5472
    %5817 = vmatpush1.bf16.msra.mxu0 %v5471
    %5818 = vmatprep.subr.bf16.mxu0 %v5477
    %5819 = vmatpush1.bf16.msra.mxu0 %v5476
    %5820 = vmatprep.mubr.bf16.mxu0 %v4802
    %5821 = vmatmul.mubr.bf16.gmra.mrb[0].mxu0 %v4801
    %v5822 = vpop.f32.mrb[0].mxu0
    %v5823 = vadd.f32 %v5782, %v5822
    %v5824 = vpop.f32.mrb[0].mxu0
    %v5825 = vadd.f32 %v5784, %v5824
    %v5826 = vpop.f32.mrb[0].mxu0
    %v5827 = vpop.f32.mrb[0].mxu0
    %5828 = vdwg.mxu0
    %5829 = vmatprep.subr.bf16.mxu0 0
    %5830 = vmatpush1.bf16.msra.mxu0 %v5323
    %5831 = vmatprep.subr.bf16.mxu0 0
    %5832 = vmatpush1.bf16.msra.mxu0 %v5328
    %5833 = vmatprep.subr.bf16.mxu0 0
    %5834 = vmatpush1.bf16.msra.mxu0 %v5333
    %5835 = vmatprep.subr.bf16.mxu0 0
    %5836 = vmatpush1.bf16.msra.mxu0 %v5338
    %5837 = vmatprep.subr.bf16.mxu0 0
    %5838 = vmatpush1.bf16.msra.mxu0 %v5343
    %5839 = vmatprep.subr.bf16.mxu0 0
    %5840 = vmatpush1.bf16.msra.mxu0 %v5348
    %5841 = vmatprep.subr.bf16.mxu0 0
    %5842 = vmatpush1.bf16.msra.mxu0 %v5353
    %5843 = vmatprep.subr.bf16.mxu0 0
    %5844 = vmatpush1.bf16.msra.mxu0 %v5358
    %5845 = vmatprep.subr.bf16.mxu0 0
    %5846 = vmatpush1.bf16.msra.mxu0 %v5363
    %5847 = vmatprep.subr.bf16.mxu0 0
    %5848 = vmatpush1.bf16.msra.mxu0 %v5368
    %5849 = vmatprep.subr.bf16.mxu0 0
    %5850 = vmatpush1.bf16.msra.mxu0 %v5373
    %5851 = vmatprep.subr.bf16.mxu0 0
    %5852 = vmatpush1.bf16.msra.mxu0 %v5378
    %5853 = vmatprep.subr.bf16.mxu0 0
    %5854 = vmatpush1.bf16.msra.mxu0 %v5383
    %5855 = vmatprep.subr.bf16.mxu0 0
    %5856 = vmatpush1.bf16.msra.mxu0 %v5388
    %5857 = vmatprep.subr.bf16.mxu0 0
    %5858 = vmatpush1.bf16.msra.mxu0 %v5393
    %5859 = vmatprep.subr.bf16.mxu0 0
    %5860 = vmatpush1.bf16.msra.mxu0 %v5398
    %5861 = vmatprep.mubr.bf16.mxu0 %v4800
    %5862 = vmatmul.mubr.bf16.gmra.mrb[0].mxu0 %v4799
    %v5863 = vpop.f32.mrb[0].mxu0
    %v5864 = vadd.f32 %v5659, %v5863
    %v5865 = vpop.f32.mrb[0].mxu0
    %v5866 = vpop.f32.mrb[0].mxu0
    %v5867 = vpop.f32.mrb[0].mxu0
    %5868 = vdwg.mxu0
    %5869 = vmatprep.subr.bf16.mxu0 0
    %5870 = vmatpush1.bf16.msra.mxu0 %v5403
    %5871 = vmatprep.subr.bf16.mxu0 0
    %5872 = vmatpush1.bf16.msra.mxu0 %v5408
    %5873 = vmatprep.subr.bf16.mxu0 0
    %5874 = vmatpush1.bf16.msra.mxu0 %v5413
    %5875 = vmatprep.subr.bf16.mxu0 0
    %5876 = vmatpush1.bf16.msra.mxu0 %v5418
    %5877 = vmatprep.subr.bf16.mxu0 0
    %5878 = vmatpush1.bf16.msra.mxu0 %v5423
    %5879 = vmatprep.subr.bf16.mxu0 0
    %5880 = vmatpush1.bf16.msra.mxu0 %v5428
    %5881 = vmatprep.subr.bf16.mxu0 0
    %5882 = vmatpush1.bf16.msra.mxu0 %v5433
    %5883 = vmatprep.subr.bf16.mxu0 0
    %5884 = vmatpush1.bf16.msra.mxu0 %v5438
    %5885 = vmatprep.subr.bf16.mxu0 0
    %5886 = vmatpush1.bf16.msra.mxu0 %v5443
    %5887 = vmatprep.subr.bf16.mxu0 0
    %5888 = vmatpush1.bf16.msra.mxu0 %v5448
    %5889 = vmatprep.subr.bf16.mxu0 0
    %5890 = vmatpush1.bf16.msra.mxu0 %v5453
    %5891 = vmatprep.subr.bf16.mxu0 0
    %5892 = vmatpush1.bf16.msra.mxu0 %v5458
    %5893 = vmatprep.subr.bf16.mxu0 0
    %5894 = vmatpush1.bf16.msra.mxu0 %v5463
    %5895 = vmatprep.subr.bf16.mxu0 0
    %5896 = vmatpush1.bf16.msra.mxu0 %v5468
    %5897 = vmatprep.subr.bf16.mxu0 0
    %5898 = vmatpush1.bf16.msra.mxu0 %v5473
    %5899 = vmatprep.subr.bf16.mxu0 0
    %5900 = vmatpush1.bf16.msra.mxu0 %v5478
    %5901 = vmatprep.mubr.bf16.mxu0 %v4802
    %5902 = vmatmul.mubr.bf16.gmra.mrb[0].mxu0 %v4801
    %v5903 = vpop.f32.mrb[0].mxu0
    %v5904 = vadd.f32 %v5864, %v5903
    %v5905 = vpop.f32.mrb[0].mxu0
    %v5906 = vpop.f32.mrb[0].mxu0
    %v5907 = vpop.f32.mrb[0].mxu0
    %5908 = vdwg.mxu0
    %v5914 = vcombine.low %v5741, %v5743
    %v5915 = vcombine.low %v5823, %v5825
    %v5917 = vunpack.c.l.s4 1966171168
    %v5918 = vunpack.c.0.s8 %v5917
    %v5919 = vlaneseq
    %v5920 = vshrl.u32 %v5919, 7
    %v5921 = vsub.s32 %v5918, %v5920
    %v5922 = vrot.slane %v5914, %v5921
    %v5924 = vunpack.c.l.s4 1966171168
    %v5925 = vunpack.c.0.s8 %v5924
    %v5926 = vlaneseq
    %v5927 = vshrl.u32 %v5926, 7
    %v5928 = vsub.s32 %v5925, %v5927
    %v5929 = vrot.slane %v5915, %v5928
    %v5931 = vunpack.c.l.s4 1966171168
    %v5932 = vunpack.c.0.s8 %v5931
    %v5933 = vlaneseq
    %v5934 = vshrl.u32 %v5933, 7
    %v5935 = vsub.s32 %v5932, %v5934
    %v5936 = vrot.slane %v5904, %v5935
    %v5937 = vcombine.low %v5922, %v5929
    %v5939 = vunpack.c.l.s4 1966171168
    %v5940 = vunpack.c.0.s8 %v5939
    %v5941 = vlaneseq
    %v5942 = vshrl.u32 %v5941, 7
    %v5943 = vsub.s32 %v5940, %v5942
    %v5944 = vrot.slane %v5937, %v5943
    %v5946 = vunpack.c.l.s4 1966171168
    %v5947 = vunpack.c.0.s8 %v5946
    %v5948 = vlaneseq
    %v5949 = vshrl.u32 %v5948, 7
    %v5950 = vsub.s32 %v5947, %v5949
    %v5951 = vrot.slane %v5936, %v5950
    %v5952 = vcombine.low %v5944, %v5951
    %v5954 = vlaneseq
    %vm5955 = vcmp.ge.s32.totalorder %v5954, 0
    %vm5956 = vcmp.lt.s32.totalorder %v5954, 640
    %vm5957 = vmand %vm5955, %vm5956
    %5958 = vst.msk [vmem:[#allocation17] sm:$0x1f] %vm5957, %v5952
    %v5961 = vunpack.c.l.s4 1966171168
    %v5962 = vunpack.c.0.s8 %v5961
    %v5963 = vlaneseq
    %v5964 = vshrl.u32 %v5963, 7
    %v5965 = vsub.s32 %v5962, %v5964
    %v5966 = vrot.slane %v4017, %v5965
    %v5968 = vunpack.c.l.s4 1966171168
    %v5969 = vunpack.c.0.s8 %v5968
    %v5970 = vlaneseq
    %v5971 = vshrl.u32 %v5970, 7
    %v5972 = vsub.s32 %v5969, %v5971
    %v5973 = vrot.slane %v5966, %v5972
    %5974 = vrot.lane.b32.xlu0 %v5973, 124
    %v5975 = vpop.permute.xlu0 %5974
    %vm5977 = vcmp.ge.s32.totalorder %v5954, 124
    %vm5978 = vcmp.lt.s32.totalorder %v5954, 128
    %vm5979 = vmand %vm5977, %vm5978
    %5980 = vst.msk [vmem:[#allocation17 + $0x4] sm:$0x1] %vm5979, %v5975
    %5981 = vst [vmem:[#allocation18] sm:$0xff] 0.0
    %5982 = vst [vmem:[#allocation18 + $0x8] sm:$0xff] 0.0
    %5983 = vst [vmem:[#allocation18] sm:$0x1] %v2481
    %5984 = vst [vmem:[#allocation18 + $0x8] sm:$0x1] %v2479
    %5985 = vst [vmem:[#allocation18 + $0x1] sm:$0x1] %v2780
    %5986 = vst [vmem:[#allocation18 + $0x9] sm:$0x1] %v2778
    %5987 = vst [vmem:[#allocation18 + $0x2] sm:$0x1] %v3080
    %5988 = vst [vmem:[#allocation18 + $0xa] sm:$0x1] %v3078
    %5989 = vst [vmem:[#allocation18 + $0x3] sm:$0x1] %v3380
    %5990 = vst [vmem:[#allocation18 + $0xb] sm:$0x1] %v3378
    %5991 = vst [vmem:[#allocation18 + $0x4] sm:$0x1] %v3680
    %5992 = vst [vmem:[#allocation18 + $0xc] sm:$0x1] %v3678
    // Predicated region
    $region74: #{tpu_custom_call.1} parent=1 // pred_check
      _
    $region75: #{tpu_custom_call.1} parent=1 // pred_check_branch
      %5994 = sbr.rel (0) target = $region77
    $region76: #{tpu_custom_call.1} parent=1 // pred_region
      %s5996 = ssub.s32 80, 80
      %5997 = vsyncadd [#allocation4], %s5996
      %s5999 = sshll.u32 [#allocation17], 4
      %s6000 = int_to_ptr.vmem [resolvable:$true] %s5999
      %6002 = dma.vmem_to_hbm [thread:$0]  %s6000, 80, %s9, [#allocation4]
    $region77: #{tpu_custom_call.1} parent=1 // pred_fallthru
      _
    // Predicated region
    $region78: #{tpu_custom_call.1} parent=1 // pred_check
      _
    $region79: #{tpu_custom_call.1} parent=1 // pred_check_branch
      %6004 = sbr.rel (0) target = $region81
    $region80: #{tpu_custom_call.1} parent=1 // pred_region
      %s6006 = ssub.s32 256, 256
      %6007 = vsyncadd [#allocation19], %s6006
      %s6008 = sshll.u32 [#allocation18], 4
      %s6009 = int_to_ptr.vmem [resolvable:$true] %s6008
      %6014 = dma.vmem_to_hbm [thread:$0]  %s6009, 256, %s10, [#allocation19], 128, 128, 8
    $region81: #{tpu_custom_call.1} parent=1 // pred_fallthru
      _
    // Predicated region
    $region82: #{tpu_custom_call.1} parent=1 // pred_check
      _
    $region83: #{tpu_custom_call.1} parent=1 // pred_check_branch
      %6016 = sbr.rel (0) target = $region85
    $region84: #{tpu_custom_call.1} parent=1 // pred_region
      %6017 = dma.done [#allocation4], 80
    $region85: #{tpu_custom_call.1} parent=1 // pred_fallthru
      _
    // Predicated region
    $region86: #{tpu_custom_call.1} parent=1 // pred_check
      _
    $region87: #{tpu_custom_call.1} parent=1 // pred_check_branch
      %6019 = sbr.rel (0) target = $region89
    $region88: #{tpu_custom_call.1} parent=1 // pred_region
      %6020 = dma.done [#allocation19], 256
    $region89: #{tpu_custom_call.1} parent=1 // pred_fallthru
      _
    %6021 = vsyncpa [#allocation3], 1
    %6022 = vsyncpa [#allocation6], 1
    %6023 = vsyncpa [#allocation9], 1
    %6024 = vsyncpa [#allocation12], 1
    %6025 = vsyncpa [#allocation15], 1
    %6026 = vsyncpa [#allocation4], 1
    %6027 = vsyncpa [#allocation19], 1

</llo_original>
